<compile_context>
chip_gen: v6e
topology: v6e:2x2x1
jax: 0.10.0
libtpu: 0.0.40
codegen_flags: <defaults>
</compile_context>

<pallas_src>
import jax
import jax.numpy as jnp
from jax import lax
from jax.experimental import pallas as pl
from jax.experimental.pallas import tpu as pltpu


def _round_up(x, m):
    return (x + m - 1) // m * m


_H1_COL = 8  # sublane-aligned column offset of h1 inside the zero-halo scratch


# -----------------------------------------------------------------------------
# Fused BasicBlock kernel (one batch image per grid step)
#   xp_ref : (H+2, Wxp, C)  f32   halo-padded input image (x at rows/cols 1..)
#   w1_ref : (9, C, P)      bf16  conv1 taps (kh*3+kw), BN1 scale folded in
#   b1_ref : (1, P)         f32   BN1 folded bias
#   w2_ref : (9, P, P)      bf16  conv2 taps, BN2 scale folded in
#   b2_ref : (1, P)         f32   BN2 folded bias
#   o_ref  : (H, W, P)      f32   block output
#   h1_ref : (H+2, Ws, P)   f32   VMEM scratch holding h1 inside a zero halo
# -----------------------------------------------------------------------------
def _basic_block_kernel(xp_ref, w1_ref, b1_ref, w2_ref, b2_ref, o_ref, h1_ref):
    H, W, P = o_ref.shape
    C = xp_ref.shape[-1]

    x_pad = xp_ref[...]                                       # (H+2, Wxp, C) f32

    # ---- conv1 (+ folded BN1 scale) as 9 shifted matmuls, then bias + ReLU --
    acc = jnp.zeros((H * W, P), jnp.float32)
    for kh in range(3):
        for kw in range(3):
            lhs = (x_pad[kh:kh + H, kw:kw + W, :]
                   .reshape(H * W, C).astype(jnp.bfloat16))
            acc = acc + jnp.dot(lhs, w1_ref[kh * 3 + kw],
                                preferred_element_type=jnp.float32)
    h1 = jnp.maximum(acc + b1_ref[...], 0.0)                  # (H*W, P) f32

    # ---- h1 never leaves VMEM: stash it inside a zero halo so conv2's -------
    # ---- shifted reads see the conv zero padding (store offsets aligned) ----
    h1_ref[...] = jnp.zeros_like(h1_ref)
    h1_ref[1:H + 1, _H1_COL:_H1_COL + W, :] = h1.reshape(H, W, P)
    h1p = h1_ref[...]                                         # (H+2, Ws, P) f32

    # ---- conv2 (+ folded BN2 scale) + bias + identity + ReLU ----------------
    acc = jnp.zeros((H * W, P), jnp.float32)
    for kh in range(3):
        for kw in range(3):
            c0 = _H1_COL - 1 + kw
            lhs = (h1p[kh:kh + H, c0:c0 + W, :]
                   .reshape(H * W, P).astype(jnp.bfloat16))
            acc = acc + jnp.dot(lhs, w2_ref[kh * 3 + kw],
                                preferred_element_type=jnp.float32)
    identity = x_pad[1:H + 1, 1:W + 1, :].reshape(H * W, C)   # f32 (C == P)
    y = jnp.maximum(acc + b2_ref[...] + identity, 0.0)
    o_ref[...] = y.reshape(H, W, P).astype(o_ref.dtype)


# -----------------------------------------------------------------------------
# Wrapper: BN folding, weight tap layout, halo pad, pallas_call
# -----------------------------------------------------------------------------
def fold_bn(gamma, beta, mean, var, eps=1e-5):
    scale = gamma / jnp.sqrt(var + eps)        # (Cout,)
    bias = beta - mean * scale                 # (Cout,)
    return scale, bias


def conv_weight_to_taps(w_oihw, scale):
    """(Cout, Cin, 3, 3) -> (9, Cin, Cout) bf16 with BN scale folded (tap = kh*3+kw)."""
    cout, cin = w_oihw.shape[0], w_oihw.shape[1]
    w = jnp.transpose(w_oihw.astype(jnp.float32), (2, 3, 1, 0))   # (3,3,Cin,Cout)
    w = w * scale[None, None, None, :]
    return w.reshape(9, cin, cout).astype(jnp.bfloat16)


def basic_block_forward(x_nchw, params, eps=1e-5):
    """BasicBlock forward (stride=1, downsample=None), BatchNorm in eval mode."""
    N, C, H, W = x_nchw.shape
    planes = params["conv1_w"].shape[0]
    assert planes == C, "stride=1 / downsample=None => inplanes == planes"

    s1, b1 = fold_bn(params["bn1_g"], params["bn1_b"],
                     params["bn1_m"], params["bn1_v"], eps)
    s2, b2 = fold_bn(params["bn2_g"], params["bn2_b"],
                     params["bn2_m"], params["bn2_v"], eps)
    w1 = conv_weight_to_taps(params["conv1_w"], s1)        # (9, C, P) bf16
    w2 = conv_weight_to_taps(params["conv2_w"], s2)        # (9, P, P) bf16
    b1 = b1.reshape(1, planes).astype(jnp.float32)
    b2 = b2.reshape(1, planes).astype(jnp.float32)

    # NHWC + 1-pixel zero halo; width padded up to a multiple of 8 so the
    # in-kernel (H, W, C) -> (H*W, C) reshapes are layout preserving.
    x_nhwc = jnp.transpose(x_nchw, (0, 2, 3, 1)).astype(jnp.float32)
    Wxp = _round_up(W + 2, 8)
    xp = jnp.pad(x_nhwc, ((0, 0), (1, 1), (1, Wxp - W - 1), (0, 0)))

    Ws = _round_up(_H1_COL + W + 1, 8)                     # h1 scratch width

    out_nhwc = pl.pallas_call(
        _basic_block_kernel,
        out_shape=jax.ShapeDtypeStruct((N, H, W, planes), jnp.float32),
        grid_spec=pltpu.PrefetchScalarGridSpec(
            num_scalar_prefetch=0,
            grid=(N,),
            in_specs=[
                pl.BlockSpec((None, H + 2, Wxp, C), lambda n: (n, 0, 0, 0)),
                pl.BlockSpec((9, C, planes), lambda n: (0, 0, 0)),      # w1 (resident)
                pl.BlockSpec((1, planes), lambda n: (0, 0)),            # b1
                pl.BlockSpec((9, planes, planes), lambda n: (0, 0, 0)), # w2 (resident)
                pl.BlockSpec((1, planes), lambda n: (0, 0)),            # b2
            ],
            out_specs=pl.BlockSpec((None, H, W, planes), lambda n: (n, 0, 0, 0)),
            scratch_shapes=[pltpu.VMEM((H + 2, Ws, planes), jnp.float32)],
        ),
        compiler_params=pltpu.CompilerParams(
            dimension_semantics=("parallel",)),
    )(xp, w1, b1, w2, b2)

    return jnp.transpose(out_nhwc, (0, 3, 1, 2))           # back to NCHW


# -----------------------------------------------------------------------------
# Pure-JAX reference (lax.conv, NCHW, f32) for the correctness check
# -----------------------------------------------------------------------------
def reference_forward(x, params, eps=1e-5):
    def conv(x, w):
        return lax.conv_general_dilated(
            x, w, window_strides=(1, 1), padding=((1, 1), (1, 1)),
            dimension_numbers=("NCHW", "OIHW", "NCHW"))

    def bn(x, g, b, m, v):
        g = g[None, :, None, None]; b = b[None, :, None, None]
        m = m[None, :, None, None]; v = v[None, :, None, None]
        return (x - m) / jnp.sqrt(v + eps) * g + b

    identity = x
    h = jax.nn.relu(bn(conv(x, params["conv1_w"]),
                       params["bn1_g"], params["bn1_b"],
                       params["bn1_m"], params["bn1_v"]))
    h = bn(conv(h, params["conv2_w"]),
           params["bn2_g"], params["bn2_b"],
           params["bn2_m"], params["bn2_v"])
    return jax.nn.relu(h + identity)


# -----------------------------------------------------------------------------
if __name__ == "__main__":
    N, C, H, W = 2, 8, 16, 16          # inplanes == planes == 8, stride=1
    planes = C

    key = jax.random.PRNGKey(0)
    ks = jax.random.split(key, 9)
    params = {
        "conv1_w": 0.1 * jax.random.normal(ks[0], (planes, C, 3, 3), jnp.float32),
        "conv2_w": 0.1 * jax.random.normal(ks[1], (planes, planes, 3, 3), jnp.float32),
        "bn1_g": 1.0 + 0.1 * jax.random.normal(ks[2], (planes,), jnp.float32),
        "bn1_b": 0.1 * jax.random.normal(ks[3], (planes,), jnp.float32),
        "bn1_m": 0.1 * jax.random.normal(ks[4], (planes,), jnp.float32),
        "bn1_v": jnp.abs(jax.random.normal(ks[5], (planes,), jnp.float32)) + 0.5,
        "bn2_g": 1.0 + 0.1 * jax.random.normal(ks[6], (planes,), jnp.float32),
        "bn2_b": 0.1 * jax.random.normal(ks[7], (planes,), jnp.float32),
        "bn2_m": jnp.zeros((planes,), jnp.float32),
        "bn2_v": jnp.ones((planes,), jnp.float32),
    }

    x = jax.random.normal(ks[8], (N, C, H, W), jnp.float32)

    fwd = jax.jit(basic_block_forward)
    out = jax.block_until_ready(fwd(x, params))
    ref = jax.block_until_ready(reference_forward(x, params))

    assert out.shape == (N, planes, H, W)
    # bf16 matmul inputs (f32 accumulation, f32 identity/bias) vs f32 reference.
    err = float(jnp.max(jnp.abs(out - ref)))
    assert err < 5e-2, f"mismatch vs reference: max abs err = {err}"

    print("KERNEL_OK")
</pallas_src>

<mosaic_0001>
module attributes {stable_mosaic.version = 11 : i64} {
  func.func @_basic_block_kernel(%arg0: i32, %arg1: memref<1x18x24x8xf32, #tpu.memory_space<vmem>>, %arg2: memref<9x8x8xbf16, #tpu.memory_space<vmem>>, %arg3: memref<1x8xf32, #tpu.memory_space<vmem>>, %arg4: memref<9x8x8xbf16, #tpu.memory_space<vmem>>, %arg5: memref<1x8xf32, #tpu.memory_space<vmem>>, %arg6: memref<1x16x16x8xf32, #tpu.memory_space<vmem>>, %arg7: memref<18x32x8xf32, #tpu.memory_space<vmem>>) attributes {dimension_semantics = [#tpu.dimension_semantics<parallel>], iteration_bounds = array<i64: 2>, scalar_prefetch = 0 : i64, scratch_operands = 1 : i64, tpu.core_type = #tpu.core_type<tc>, window_params = [{transform_indices = @transform_0, window_bounds = array<i64: 1, 18, 24, 8>}, {pipeline_mode = #tpu.pipeline_mode<synchronous>, transform_indices = @transform_1, window_bounds = array<i64: 9, 8, 8>}, {pipeline_mode = #tpu.pipeline_mode<synchronous>, transform_indices = @transform_2, window_bounds = array<i64: 1, 8>}, {pipeline_mode = #tpu.pipeline_mode<synchronous>, transform_indices = @transform_3, window_bounds = array<i64: 9, 8, 8>}, {pipeline_mode = #tpu.pipeline_mode<synchronous>, transform_indices = @transform_4, window_bounds = array<i64: 1, 8>}, {transform_indices = @transform_5, window_bounds = array<i64: 1, 16, 16, 8>}]} {
    %c0 = arith.constant 0 : index
    %c0_0 = arith.constant 0 : index
    %c0_1 = arith.constant 0 : index
    %c0_2 = arith.constant 0 : index
    %0 = vector.load %arg1[%c0, %c0_0, %c0_1, %c0_2] : memref<1x18x24x8xf32, #tpu.memory_space<vmem>>, vector<1x18x24x8xf32>
    %1 = vector.shape_cast %0 : vector<1x18x24x8xf32> to vector<18x24x8xf32>
    %cst = arith.constant 0.000000e+00 : f32
    %2 = vector.broadcast %cst : f32 to vector<256x8xf32>
    %3 = vector.extract_strided_slice %1 {offsets = [0, 0, 0], sizes = [16, 16, 8], strides = [1, 1, 1]} : vector<18x24x8xf32> to vector<16x16x8xf32>
    %4 = vector.shape_cast %3 : vector<16x16x8xf32> to vector<256x8xf32>
    %5 = arith.truncf %4 : vector<256x8xf32> to vector<256x8xbf16>
    %c0_3 = arith.constant 0 : index
    %c0_4 = arith.constant 0 : index
    %c0_5 = arith.constant 0 : index
    %6 = vector.load %arg2[%c0_3, %c0_4, %c0_5] : memref<9x8x8xbf16, #tpu.memory_space<vmem>>, vector<1x8x8xbf16>
    %7 = vector.shape_cast %6 : vector<1x8x8xbf16> to vector<8x8xbf16>
    %cst_6 = arith.constant dense<0.000000e+00> : vector<256x8xf32>
    %8 = tpu.matmul %5, %7, %cst_6 {dimension_numbers = #tpu.dot_dimension_numbers<[1], [0], [0], [1], [0, 0, 1, 1], [], []>} : vector<256x8xbf16>, vector<8x8xbf16>, vector<256x8xf32> -> vector<256x8xf32>
    %9 = arith.addf %2, %8 : vector<256x8xf32>
    %10 = vector.extract_strided_slice %1 {offsets = [0, 1, 0], sizes = [16, 16, 8], strides = [1, 1, 1]} : vector<18x24x8xf32> to vector<16x16x8xf32>
    %11 = vector.shape_cast %10 : vector<16x16x8xf32> to vector<256x8xf32>
    %12 = arith.truncf %11 : vector<256x8xf32> to vector<256x8xbf16>
    %c1 = arith.constant 1 : index
    %c0_7 = arith.constant 0 : index
    %c0_8 = arith.constant 0 : index
    %13 = vector.load %arg2[%c1, %c0_7, %c0_8] : memref<9x8x8xbf16, #tpu.memory_space<vmem>>, vector<1x8x8xbf16>
    %14 = vector.shape_cast %13 : vector<1x8x8xbf16> to vector<8x8xbf16>
    %cst_9 = arith.constant dense<0.000000e+00> : vector<256x8xf32>
    %15 = tpu.matmul %12, %14, %cst_9 {dimension_numbers = #tpu.dot_dimension_numbers<[1], [0], [0], [1], [0, 0, 1, 1], [], []>} : vector<256x8xbf16>, vector<8x8xbf16>, vector<256x8xf32> -> vector<256x8xf32>
    %16 = arith.addf %9, %15 : vector<256x8xf32>
    %17 = vector.extract_strided_slice %1 {offsets = [0, 2, 0], sizes = [16, 16, 8], strides = [1, 1, 1]} : vector<18x24x8xf32> to vector<16x16x8xf32>
    %18 = vector.shape_cast %17 : vector<16x16x8xf32> to vector<256x8xf32>
    %19 = arith.truncf %18 : vector<256x8xf32> to vector<256x8xbf16>
    %c2 = arith.constant 2 : index
    %c0_10 = arith.constant 0 : index
    %c0_11 = arith.constant 0 : index
    %20 = vector.load %arg2[%c2, %c0_10, %c0_11] : memref<9x8x8xbf16, #tpu.memory_space<vmem>>, vector<1x8x8xbf16>
    %21 = vector.shape_cast %20 : vector<1x8x8xbf16> to vector<8x8xbf16>
    %cst_12 = arith.constant dense<0.000000e+00> : vector<256x8xf32>
    %22 = tpu.matmul %19, %21, %cst_12 {dimension_numbers = #tpu.dot_dimension_numbers<[1], [0], [0], [1], [0, 0, 1, 1], [], []>} : vector<256x8xbf16>, vector<8x8xbf16>, vector<256x8xf32> -> vector<256x8xf32>
    %23 = arith.addf %16, %22 : vector<256x8xf32>
    %24 = vector.extract_strided_slice %1 {offsets = [1, 0, 0], sizes = [16, 16, 8], strides = [1, 1, 1]} : vector<18x24x8xf32> to vector<16x16x8xf32>
    %25 = vector.shape_cast %24 : vector<16x16x8xf32> to vector<256x8xf32>
    %26 = arith.truncf %25 : vector<256x8xf32> to vector<256x8xbf16>
    %c3 = arith.constant 3 : index
    %c0_13 = arith.constant 0 : index
    %c0_14 = arith.constant 0 : index
    %27 = vector.load %arg2[%c3, %c0_13, %c0_14] : memref<9x8x8xbf16, #tpu.memory_space<vmem>>, vector<1x8x8xbf16>
    %28 = vector.shape_cast %27 : vector<1x8x8xbf16> to vector<8x8xbf16>
    %cst_15 = arith.constant dense<0.000000e+00> : vector<256x8xf32>
    %29 = tpu.matmul %26, %28, %cst_15 {dimension_numbers = #tpu.dot_dimension_numbers<[1], [0], [0], [1], [0, 0, 1, 1], [], []>} : vector<256x8xbf16>, vector<8x8xbf16>, vector<256x8xf32> -> vector<256x8xf32>
    %30 = arith.addf %23, %29 : vector<256x8xf32>
    %31 = vector.extract_strided_slice %1 {offsets = [1, 1, 0], sizes = [16, 16, 8], strides = [1, 1, 1]} : vector<18x24x8xf32> to vector<16x16x8xf32>
    %32 = vector.shape_cast %31 : vector<16x16x8xf32> to vector<256x8xf32>
    %33 = arith.truncf %32 : vector<256x8xf32> to vector<256x8xbf16>
    %c4 = arith.constant 4 : index
    %c0_16 = arith.constant 0 : index
    %c0_17 = arith.constant 0 : index
    %34 = vector.load %arg2[%c4, %c0_16, %c0_17] : memref<9x8x8xbf16, #tpu.memory_space<vmem>>, vector<1x8x8xbf16>
    %35 = vector.shape_cast %34 : vector<1x8x8xbf16> to vector<8x8xbf16>
    %cst_18 = arith.constant dense<0.000000e+00> : vector<256x8xf32>
    %36 = tpu.matmul %33, %35, %cst_18 {dimension_numbers = #tpu.dot_dimension_numbers<[1], [0], [0], [1], [0, 0, 1, 1], [], []>} : vector<256x8xbf16>, vector<8x8xbf16>, vector<256x8xf32> -> vector<256x8xf32>
    %37 = arith.addf %30, %36 : vector<256x8xf32>
    %38 = vector.extract_strided_slice %1 {offsets = [1, 2, 0], sizes = [16, 16, 8], strides = [1, 1, 1]} : vector<18x24x8xf32> to vector<16x16x8xf32>
    %39 = vector.shape_cast %38 : vector<16x16x8xf32> to vector<256x8xf32>
    %40 = arith.truncf %39 : vector<256x8xf32> to vector<256x8xbf16>
    %c5 = arith.constant 5 : index
    %c0_19 = arith.constant 0 : index
    %c0_20 = arith.constant 0 : index
    %41 = vector.load %arg2[%c5, %c0_19, %c0_20] : memref<9x8x8xbf16, #tpu.memory_space<vmem>>, vector<1x8x8xbf16>
    %42 = vector.shape_cast %41 : vector<1x8x8xbf16> to vector<8x8xbf16>
    %cst_21 = arith.constant dense<0.000000e+00> : vector<256x8xf32>
    %43 = tpu.matmul %40, %42, %cst_21 {dimension_numbers = #tpu.dot_dimension_numbers<[1], [0], [0], [1], [0, 0, 1, 1], [], []>} : vector<256x8xbf16>, vector<8x8xbf16>, vector<256x8xf32> -> vector<256x8xf32>
    %44 = arith.addf %37, %43 : vector<256x8xf32>
    %45 = vector.extract_strided_slice %1 {offsets = [2, 0, 0], sizes = [16, 16, 8], strides = [1, 1, 1]} : vector<18x24x8xf32> to vector<16x16x8xf32>
    %46 = vector.shape_cast %45 : vector<16x16x8xf32> to vector<256x8xf32>
    %47 = arith.truncf %46 : vector<256x8xf32> to vector<256x8xbf16>
    %c6 = arith.constant 6 : index
    %c0_22 = arith.constant 0 : index
    %c0_23 = arith.constant 0 : index
    %48 = vector.load %arg2[%c6, %c0_22, %c0_23] : memref<9x8x8xbf16, #tpu.memory_space<vmem>>, vector<1x8x8xbf16>
    %49 = vector.shape_cast %48 : vector<1x8x8xbf16> to vector<8x8xbf16>
    %cst_24 = arith.constant dense<0.000000e+00> : vector<256x8xf32>
    %50 = tpu.matmul %47, %49, %cst_24 {dimension_numbers = #tpu.dot_dimension_numbers<[1], [0], [0], [1], [0, 0, 1, 1], [], []>} : vector<256x8xbf16>, vector<8x8xbf16>, vector<256x8xf32> -> vector<256x8xf32>
    %51 = arith.addf %44, %50 : vector<256x8xf32>
    %52 = vector.extract_strided_slice %1 {offsets = [2, 1, 0], sizes = [16, 16, 8], strides = [1, 1, 1]} : vector<18x24x8xf32> to vector<16x16x8xf32>
    %53 = vector.shape_cast %52 : vector<16x16x8xf32> to vector<256x8xf32>
    %54 = arith.truncf %53 : vector<256x8xf32> to vector<256x8xbf16>
    %c7 = arith.constant 7 : index
    %c0_25 = arith.constant 0 : index
    %c0_26 = arith.constant 0 : index
    %55 = vector.load %arg2[%c7, %c0_25, %c0_26] : memref<9x8x8xbf16, #tpu.memory_space<vmem>>, vector<1x8x8xbf16>
    %56 = vector.shape_cast %55 : vector<1x8x8xbf16> to vector<8x8xbf16>
    %cst_27 = arith.constant dense<0.000000e+00> : vector<256x8xf32>
    %57 = tpu.matmul %54, %56, %cst_27 {dimension_numbers = #tpu.dot_dimension_numbers<[1], [0], [0], [1], [0, 0, 1, 1], [], []>} : vector<256x8xbf16>, vector<8x8xbf16>, vector<256x8xf32> -> vector<256x8xf32>
    %58 = arith.addf %51, %57 : vector<256x8xf32>
    %59 = vector.extract_strided_slice %1 {offsets = [2, 2, 0], sizes = [16, 16, 8], strides = [1, 1, 1]} : vector<18x24x8xf32> to vector<16x16x8xf32>
    %60 = vector.shape_cast %59 : vector<16x16x8xf32> to vector<256x8xf32>
    %61 = arith.truncf %60 : vector<256x8xf32> to vector<256x8xbf16>
    %c8 = arith.constant 8 : index
    %c0_28 = arith.constant 0 : index
    %c0_29 = arith.constant 0 : index
    %62 = vector.load %arg2[%c8, %c0_28, %c0_29] : memref<9x8x8xbf16, #tpu.memory_space<vmem>>, vector<1x8x8xbf16>
    %63 = vector.shape_cast %62 : vector<1x8x8xbf16> to vector<8x8xbf16>
    %cst_30 = arith.constant dense<0.000000e+00> : vector<256x8xf32>
    %64 = tpu.matmul %61, %63, %cst_30 {dimension_numbers = #tpu.dot_dimension_numbers<[1], [0], [0], [1], [0, 0, 1, 1], [], []>} : vector<256x8xbf16>, vector<8x8xbf16>, vector<256x8xf32> -> vector<256x8xf32>
    %65 = arith.addf %58, %64 : vector<256x8xf32>
    %c0_31 = arith.constant 0 : index
    %c0_32 = arith.constant 0 : index
    %66 = vector.load %arg3[%c0_31, %c0_32] : memref<1x8xf32, #tpu.memory_space<vmem>>, vector<1x8xf32>
    %67 = vector.broadcast %66 : vector<1x8xf32> to vector<256x8xf32>
    %68 = arith.addf %65, %67 : vector<256x8xf32>
    %cst_33 = arith.constant 0.000000e+00 : f32
    %69 = vector.broadcast %cst_33 : f32 to vector<256x8xf32>
    %70 = arith.maximumf %68, %69 : vector<256x8xf32>
    %cst_34 = arith.constant 0.000000e+00 : f32
    %71 = vector.broadcast %cst_34 : f32 to vector<18x32x8xf32>
    %c0_35 = arith.constant 0 : index
    %c0_36 = arith.constant 0 : index
    %c0_37 = arith.constant 0 : index
    %72 = vector.load %arg7[%c0_35, %c0_36, %c0_37] : memref<18x32x8xf32, #tpu.memory_space<vmem>>, vector<18x32x8xf32>
    tpu.vector_store %arg7[%c0_35, %c0_36, %c0_37], %71 {strides = array<i32>} : memref<18x32x8xf32, #tpu.memory_space<vmem>>, vector<18x32x8xf32>,
    %73 = vector.shape_cast %70 : vector<256x8xf32> to vector<16x16x8xf32>
    %c1_38 = arith.constant 1 : index
    %c8_39 = arith.constant 8 : index
    %c0_40 = arith.constant 0 : index
    %74 = vector.load %arg7[%c1_38, %c8_39, %c0_40] : memref<18x32x8xf32, #tpu.memory_space<vmem>>, vector<16x16x8xf32>
    tpu.vector_store %arg7[%c1_38, %c8_39, %c0_40], %73 {strides = array<i32>} : memref<18x32x8xf32, #tpu.memory_space<vmem>>, vector<16x16x8xf32>,
    %c0_41 = arith.constant 0 : index
    %c0_42 = arith.constant 0 : index
    %c0_43 = arith.constant 0 : index
    %75 = vector.load %arg7[%c0_41, %c0_42, %c0_43] : memref<18x32x8xf32, #tpu.memory_space<vmem>>, vector<18x32x8xf32>
    %cst_44 = arith.constant 0.000000e+00 : f32
    %76 = vector.broadcast %cst_44 : f32 to vector<256x8xf32>
    %77 = vector.extract_strided_slice %75 {offsets = [0, 7, 0], sizes = [16, 16, 8], strides = [1, 1, 1]} : vector<18x32x8xf32> to vector<16x16x8xf32>
    %78 = vector.shape_cast %77 : vector<16x16x8xf32> to vector<256x8xf32>
    %79 = arith.truncf %78 : vector<256x8xf32> to vector<256x8xbf16>
    %c0_45 = arith.constant 0 : index
    %c0_46 = arith.constant 0 : index
    %c0_47 = arith.constant 0 : index
    %80 = vector.load %arg4[%c0_45, %c0_46, %c0_47] : memref<9x8x8xbf16, #tpu.memory_space<vmem>>, vector<1x8x8xbf16>
    %81 = vector.shape_cast %80 : vector<1x8x8xbf16> to vector<8x8xbf16>
    %cst_48 = arith.constant dense<0.000000e+00> : vector<256x8xf32>
    %82 = tpu.matmul %79, %81, %cst_48 {dimension_numbers = #tpu.dot_dimension_numbers<[1], [0], [0], [1], [0, 0, 1, 1], [], []>} : vector<256x8xbf16>, vector<8x8xbf16>, vector<256x8xf32> -> vector<256x8xf32>
    %83 = arith.addf %76, %82 : vector<256x8xf32>
    %84 = vector.extract_strided_slice %75 {offsets = [0, 8, 0], sizes = [16, 16, 8], strides = [1, 1, 1]} : vector<18x32x8xf32> to vector<16x16x8xf32>
    %85 = vector.shape_cast %84 : vector<16x16x8xf32> to vector<256x8xf32>
    %86 = arith.truncf %85 : vector<256x8xf32> to vector<256x8xbf16>
    %c1_49 = arith.constant 1 : index
    %c0_50 = arith.constant 0 : index
    %c0_51 = arith.constant 0 : index
    %87 = vector.load %arg4[%c1_49, %c0_50, %c0_51] : memref<9x8x8xbf16, #tpu.memory_space<vmem>>, vector<1x8x8xbf16>
    %88 = vector.shape_cast %87 : vector<1x8x8xbf16> to vector<8x8xbf16>
    %cst_52 = arith.constant dense<0.000000e+00> : vector<256x8xf32>
    %89 = tpu.matmul %86, %88, %cst_52 {dimension_numbers = #tpu.dot_dimension_numbers<[1], [0], [0], [1], [0, 0, 1, 1], [], []>} : vector<256x8xbf16>, vector<8x8xbf16>, vector<256x8xf32> -> vector<256x8xf32>
    %90 = arith.addf %83, %89 : vector<256x8xf32>
    %91 = vector.extract_strided_slice %75 {offsets = [0, 9, 0], sizes = [16, 16, 8], strides = [1, 1, 1]} : vector<18x32x8xf32> to vector<16x16x8xf32>
    %92 = vector.shape_cast %91 : vector<16x16x8xf32> to vector<256x8xf32>
    %93 = arith.truncf %92 : vector<256x8xf32> to vector<256x8xbf16>
    %c2_53 = arith.constant 2 : index
    %c0_54 = arith.constant 0 : index
    %c0_55 = arith.constant 0 : index
    %94 = vector.load %arg4[%c2_53, %c0_54, %c0_55] : memref<9x8x8xbf16, #tpu.memory_space<vmem>>, vector<1x8x8xbf16>
    %95 = vector.shape_cast %94 : vector<1x8x8xbf16> to vector<8x8xbf16>
    %cst_56 = arith.constant dense<0.000000e+00> : vector<256x8xf32>
    %96 = tpu.matmul %93, %95, %cst_56 {dimension_numbers = #tpu.dot_dimension_numbers<[1], [0], [0], [1], [0, 0, 1, 1], [], []>} : vector<256x8xbf16>, vector<8x8xbf16>, vector<256x8xf32> -> vector<256x8xf32>
    %97 = arith.addf %90, %96 : vector<256x8xf32>
    %98 = vector.extract_strided_slice %75 {offsets = [1, 7, 0], sizes = [16, 16, 8], strides = [1, 1, 1]} : vector<18x32x8xf32> to vector<16x16x8xf32>
    %99 = vector.shape_cast %98 : vector<16x16x8xf32> to vector<256x8xf32>
    %100 = arith.truncf %99 : vector<256x8xf32> to vector<256x8xbf16>
    %c3_57 = arith.constant 3 : index
    %c0_58 = arith.constant 0 : index
    %c0_59 = arith.constant 0 : index
    %101 = vector.load %arg4[%c3_57, %c0_58, %c0_59] : memref<9x8x8xbf16, #tpu.memory_space<vmem>>, vector<1x8x8xbf16>
    %102 = vector.shape_cast %101 : vector<1x8x8xbf16> to vector<8x8xbf16>
    %cst_60 = arith.constant dense<0.000000e+00> : vector<256x8xf32>
    %103 = tpu.matmul %100, %102, %cst_60 {dimension_numbers = #tpu.dot_dimension_numbers<[1], [0], [0], [1], [0, 0, 1, 1], [], []>} : vector<256x8xbf16>, vector<8x8xbf16>, vector<256x8xf32> -> vector<256x8xf32>
    %104 = arith.addf %97, %103 : vector<256x8xf32>
    %105 = vector.extract_strided_slice %75 {offsets = [1, 8, 0], sizes = [16, 16, 8], strides = [1, 1, 1]} : vector<18x32x8xf32> to vector<16x16x8xf32>
    %106 = vector.shape_cast %105 : vector<16x16x8xf32> to vector<256x8xf32>
    %107 = arith.truncf %106 : vector<256x8xf32> to vector<256x8xbf16>
    %c4_61 = arith.constant 4 : index
    %c0_62 = arith.constant 0 : index
    %c0_63 = arith.constant 0 : index
    %108 = vector.load %arg4[%c4_61, %c0_62, %c0_63] : memref<9x8x8xbf16, #tpu.memory_space<vmem>>, vector<1x8x8xbf16>
    %109 = vector.shape_cast %108 : vector<1x8x8xbf16> to vector<8x8xbf16>
    %cst_64 = arith.constant dense<0.000000e+00> : vector<256x8xf32>
    %110 = tpu.matmul %107, %109, %cst_64 {dimension_numbers = #tpu.dot_dimension_numbers<[1], [0], [0], [1], [0, 0, 1, 1], [], []>} : vector<256x8xbf16>, vector<8x8xbf16>, vector<256x8xf32> -> vector<256x8xf32>
    %111 = arith.addf %104, %110 : vector<256x8xf32>
    %112 = vector.extract_strided_slice %75 {offsets = [1, 9, 0], sizes = [16, 16, 8], strides = [1, 1, 1]} : vector<18x32x8xf32> to vector<16x16x8xf32>
    %113 = vector.shape_cast %112 : vector<16x16x8xf32> to vector<256x8xf32>
    %114 = arith.truncf %113 : vector<256x8xf32> to vector<256x8xbf16>
    %c5_65 = arith.constant 5 : index
    %c0_66 = arith.constant 0 : index
    %c0_67 = arith.constant 0 : index
    %115 = vector.load %arg4[%c5_65, %c0_66, %c0_67] : memref<9x8x8xbf16, #tpu.memory_space<vmem>>, vector<1x8x8xbf16>
    %116 = vector.shape_cast %115 : vector<1x8x8xbf16> to vector<8x8xbf16>
    %cst_68 = arith.constant dense<0.000000e+00> : vector<256x8xf32>
    %117 = tpu.matmul %114, %116, %cst_68 {dimension_numbers = #tpu.dot_dimension_numbers<[1], [0], [0], [1], [0, 0, 1, 1], [], []>} : vector<256x8xbf16>, vector<8x8xbf16>, vector<256x8xf32> -> vector<256x8xf32>
    %118 = arith.addf %111, %117 : vector<256x8xf32>
    %119 = vector.extract_strided_slice %75 {offsets = [2, 7, 0], sizes = [16, 16, 8], strides = [1, 1, 1]} : vector<18x32x8xf32> to vector<16x16x8xf32>
    %120 = vector.shape_cast %119 : vector<16x16x8xf32> to vector<256x8xf32>
    %121 = arith.truncf %120 : vector<256x8xf32> to vector<256x8xbf16>
    %c6_69 = arith.constant 6 : index
    %c0_70 = arith.constant 0 : index
    %c0_71 = arith.constant 0 : index
    %122 = vector.load %arg4[%c6_69, %c0_70, %c0_71] : memref<9x8x8xbf16, #tpu.memory_space<vmem>>, vector<1x8x8xbf16>
    %123 = vector.shape_cast %122 : vector<1x8x8xbf16> to vector<8x8xbf16>
    %cst_72 = arith.constant dense<0.000000e+00> : vector<256x8xf32>
    %124 = tpu.matmul %121, %123, %cst_72 {dimension_numbers = #tpu.dot_dimension_numbers<[1], [0], [0], [1], [0, 0, 1, 1], [], []>} : vector<256x8xbf16>, vector<8x8xbf16>, vector<256x8xf32> -> vector<256x8xf32>
    %125 = arith.addf %118, %124 : vector<256x8xf32>
    %126 = vector.extract_strided_slice %75 {offsets = [2, 8, 0], sizes = [16, 16, 8], strides = [1, 1, 1]} : vector<18x32x8xf32> to vector<16x16x8xf32>
    %127 = vector.shape_cast %126 : vector<16x16x8xf32> to vector<256x8xf32>
    %128 = arith.truncf %127 : vector<256x8xf32> to vector<256x8xbf16>
    %c7_73 = arith.constant 7 : index
    %c0_74 = arith.constant 0 : index
    %c0_75 = arith.constant 0 : index
    %129 = vector.load %arg4[%c7_73, %c0_74, %c0_75] : memref<9x8x8xbf16, #tpu.memory_space<vmem>>, vector<1x8x8xbf16>
    %130 = vector.shape_cast %129 : vector<1x8x8xbf16> to vector<8x8xbf16>
    %cst_76 = arith.constant dense<0.000000e+00> : vector<256x8xf32>
    %131 = tpu.matmul %128, %130, %cst_76 {dimension_numbers = #tpu.dot_dimension_numbers<[1], [0], [0], [1], [0, 0, 1, 1], [], []>} : vector<256x8xbf16>, vector<8x8xbf16>, vector<256x8xf32> -> vector<256x8xf32>
    %132 = arith.addf %125, %131 : vector<256x8xf32>
    %133 = vector.extract_strided_slice %75 {offsets = [2, 9, 0], sizes = [16, 16, 8], strides = [1, 1, 1]} : vector<18x32x8xf32> to vector<16x16x8xf32>
    %134 = vector.shape_cast %133 : vector<16x16x8xf32> to vector<256x8xf32>
    %135 = arith.truncf %134 : vector<256x8xf32> to vector<256x8xbf16>
    %c8_77 = arith.constant 8 : index
    %c0_78 = arith.constant 0 : index
    %c0_79 = arith.constant 0 : index
    %136 = vector.load %arg4[%c8_77, %c0_78, %c0_79] : memref<9x8x8xbf16, #tpu.memory_space<vmem>>, vector<1x8x8xbf16>
    %137 = vector.shape_cast %136 : vector<1x8x8xbf16> to vector<8x8xbf16>
    %cst_80 = arith.constant dense<0.000000e+00> : vector<256x8xf32>
    %138 = tpu.matmul %135, %137, %cst_80 {dimension_numbers = #tpu.dot_dimension_numbers<[1], [0], [0], [1], [0, 0, 1, 1], [], []>} : vector<256x8xbf16>, vector<8x8xbf16>, vector<256x8xf32> -> vector<256x8xf32>
    %139 = arith.addf %132, %138 : vector<256x8xf32>
    %140 = vector.extract_strided_slice %1 {offsets = [1, 1, 0], sizes = [16, 16, 8], strides = [1, 1, 1]} : vector<18x24x8xf32> to vector<16x16x8xf32>
    %141 = vector.shape_cast %140 : vector<16x16x8xf32> to vector<256x8xf32>
    %c0_81 = arith.constant 0 : index
    %c0_82 = arith.constant 0 : index
    %142 = vector.load %arg5[%c0_81, %c0_82] : memref<1x8xf32, #tpu.memory_space<vmem>>, vector<1x8xf32>
    %143 = vector.broadcast %142 : vector<1x8xf32> to vector<256x8xf32>
    %144 = arith.addf %139, %143 : vector<256x8xf32>
    %145 = arith.addf %144, %141 : vector<256x8xf32>
    %cst_83 = arith.constant 0.000000e+00 : f32
    %146 = vector.broadcast %cst_83 : f32 to vector<256x8xf32>
    %147 = arith.maximumf %145, %146 : vector<256x8xf32>
    %148 = vector.shape_cast %147 : vector<256x8xf32> to vector<16x16x8xf32>
    %c0_84 = arith.constant 0 : index
    %c0_85 = arith.constant 0 : index
    %c0_86 = arith.constant 0 : index
    %c0_87 = arith.constant 0 : index
    %149 = vector.load %arg6[%c0_84, %c0_85, %c0_86, %c0_87] : memref<1x16x16x8xf32, #tpu.memory_space<vmem>>, vector<1x16x16x8xf32>
    %150 = vector.shape_cast %149 : vector<1x16x16x8xf32> to vector<16x16x8xf32>
    %151 = vector.shape_cast %148 : vector<16x16x8xf32> to vector<1x16x16x8xf32>
    tpu.vector_store %arg6[%c0_84, %c0_85, %c0_86, %c0_87], %151 {strides = array<i32>} : memref<1x16x16x8xf32, #tpu.memory_space<vmem>>, vector<1x16x16x8xf32>,
    return
  }
  func.func @transform_0(%arg0: i32) -> (i32, i32, i32, i32) {
    %c0_i32 = arith.constant 0 : i32
    %c0_i32_0 = arith.constant 0 : i32
    %c0_i32_1 = arith.constant 0 : i32
    %c0_i32_2 = arith.constant 0 : i32
    return %arg0, %c0_i32, %c0_i32_0, %c0_i32_1 : i32, i32, i32, i32
  }
  func.func @transform_1(%arg0: i32) -> (i32, i32, i32) {
    %c0_i32 = arith.constant 0 : i32
    %c0_i32_0 = arith.constant 0 : i32
    %c0_i32_1 = arith.constant 0 : i32
    %c0_i32_2 = arith.constant 0 : i32
    return %c0_i32, %c0_i32_0, %c0_i32_1 : i32, i32, i32
  }
  func.func @transform_2(%arg0: i32) -> (i32, i32) {
    %c0_i32 = arith.constant 0 : i32
    %c0_i32_0 = arith.constant 0 : i32
    %c0_i32_1 = arith.constant 0 : i32
    return %c0_i32, %c0_i32_0 : i32, i32
  }
  func.func @transform_3(%arg0: i32) -> (i32, i32, i32) {
    %c0_i32 = arith.constant 0 : i32
    %c0_i32_0 = arith.constant 0 : i32
    %c0_i32_1 = arith.constant 0 : i32
    %c0_i32_2 = arith.constant 0 : i32
    return %c0_i32, %c0_i32_0, %c0_i32_1 : i32, i32, i32
  }
  func.func @transform_4(%arg0: i32) -> (i32, i32) {
    %c0_i32 = arith.constant 0 : i32
    %c0_i32_0 = arith.constant 0 : i32
    %c0_i32_1 = arith.constant 0 : i32
    return %c0_i32, %c0_i32_0 : i32, i32
  }
  func.func @transform_5(%arg0: i32) -> (i32, i32, i32, i32) {
    %c0_i32 = arith.constant 0 : i32
    %c0_i32_0 = arith.constant 0 : i32
    %c0_i32_1 = arith.constant 0 : i32
    %c0_i32_2 = arith.constant 0 : i32
    return %arg0, %c0_i32, %c0_i32_0, %c0_i32_1 : i32, i32, i32, i32
  }
}

</mosaic_0001>

<llo_original>
// kernel: basic_block_forward.1
$region0: #{basic_block_forward.1}
  #allocation0 [shape = 'u32[]', space=smem, size = 0x4, offset = 0x4, fixed_abs, tag = 'smem constant byte address 0x4 - core index']
  #allocation1 [shape = 'u32[144,128]{1,0:T(1,128)}', space=vmem, size = 0x12000, scoped, tag = 'internal scratch']
  #allocation2 [shape = 'f32[18,32,8]{2,1,0:T(8,128)}', space=vmem, size = 0x48000, scoped, tag = 'scratch operand']
  %s0 = inlined_call_operand.vmem [shape: f32[2,18,24,8], index: 0, kind: input, shape index: {}]
  %s1 = inlined_call_operand.vmem [shape: bf16[9,8,8], index: 1, kind: input, shape index: {}]
  %s2 = inlined_call_operand.vmem [shape: f32[1,8], index: 2, kind: input, shape index: {}]
  %s3 = inlined_call_operand.vmem [shape: bf16[9,8,8], index: 3, kind: input, shape index: {}]
  %s4 = inlined_call_operand.vmem [shape: f32[1,8], index: 4, kind: input, shape index: {}]
  %s5 = inlined_call_operand.vmem [shape: f32[2,16,16,8], index: 5, kind: output, shape index: {}]
  %s6 = sld [smem:[#allocation0]]
  $region53: #{basic_block_forward.1} parent=0
    _
  %s8 = ssub.s32 1, %s6
  %s9 = scalar_select 0, %s8, %s6
  loop: start=0, step=1, limit=4
  $region2: #{basic_block_forward.1} parent=0 // loop_pre_header
    _
  $region3: #{basic_block_forward.1} parent=0 // loop_header
    %s11 = sphi 0, %s15
    %p12 = scmp.ge.s32.totalorder %s11, 4
    %s21 = sphi 0, %s23
    %s24 = sphi 0, %s21
    %s25 = sphi 0, %s24
    %s41 = sphi 0, %s25
    %s45 = sphi 0, %s45
    %s47 = sphi 0, %s45
    %s48 = sphi 0, %s47
    %s62 = sphi 0, %s48
    %s66 = sphi 0, %s66
    %s68 = sphi 0, %s66
    %s69 = sphi 0, %s68
    %s83 = sphi 0, %s69
    %s87 = sphi 0, %s87
    %s89 = sphi 0, %s87
    %s90 = sphi 0, %s89
    %s104 = sphi 0, %s90
    %s108 = sphi 0, %s108
    %s110 = sphi 0, %s108
    %s111 = sphi 0, %s110
    %s125 = sphi 0, %s111
    %s131 = sphi 0, %s133
    %s134 = sphi 0, %s131
    %s135 = sphi 0, %s134
    %s151 = sphi 0, %s135
  $region4: #{basic_block_forward.1} parent=0 // loop_header_branch
    %14 = sbr.rel (%p12) target = $region8
  $region5: #{basic_block_forward.1} parent=0 // loop_body
    %s16 = ssub.s32 %s11, 1
    %s17 = ssub.s32 %s11, 2
    %s18 = sadd.s32 %s11, 1
    %s19 = ssub.s32 %s11, %s18
    %p20 = scmp.eq.s32.totalorder %s19, 0
    %s22 = sadd.s32 %s21, 1
    %s23 = scalar_select %p20, %s21, %s22
    %p26 = pneg %p20
    %p27 = scmp.eq.s32.totalorder %s11, 1
    %p28 = por %p26, %p27
    %p29 = scmp.ne.s32.totalorder %s21, %s24
    %p30 = scmp.eq.s32.totalorder %s11, 0
    %p31 = por %p29, %p30
    %p32 = scmp.ne.s32.totalorder %s21, %s24
    %p33 = scmp.eq.s32.totalorder %s16, 1
    %p34 = por %p32, %p33
    %p35 = scmp.ne.s32.totalorder %s24, %s25
    %p36 = scmp.eq.s32.totalorder %s16, 0
    %p37 = por %p35, %p36
    %p38 = scmp.ne.s32.totalorder %s24, %s25
    %p39 = scmp.eq.s32.totalorder %s17, 1
    %p40 = por %p38, %p39
    %p42 = scmp.ne.s32.totalorder %s25, %s41
    %p43 = scmp.eq.s32.totalorder %s17, 0
    %p44 = por %p42, %p43
    %s46 = sadd.s32 %s45, 1
    %p49 = scmp.eq.s32.totalorder %s11, 1
    %p50 = scmp.ne.s32.totalorder %s45, %s47
    %p51 = scmp.eq.s32.totalorder %s11, 0
    %p52 = por %p50, %p51
    %p53 = scmp.ne.s32.totalorder %s45, %s47
    %p54 = scmp.eq.s32.totalorder %s16, 1
    %p55 = por %p53, %p54
    %p56 = scmp.ne.s32.totalorder %s47, %s48
    %p57 = scmp.eq.s32.totalorder %s16, 0
    %p58 = por %p56, %p57
    %p59 = scmp.ne.s32.totalorder %s47, %s48
    %p60 = scmp.eq.s32.totalorder %s17, 1
    %p61 = por %p59, %p60
    %p63 = scmp.ne.s32.totalorder %s48, %s62
    %p64 = scmp.eq.s32.totalorder %s17, 0
    %p65 = por %p63, %p64
    %s67 = sadd.s32 %s66, 1
    %p70 = scmp.eq.s32.totalorder %s11, 1
    %p71 = scmp.ne.s32.totalorder %s66, %s68
    %p72 = scmp.eq.s32.totalorder %s11, 0
    %p73 = por %p71, %p72
    %p74 = scmp.ne.s32.totalorder %s66, %s68
    %p75 = scmp.eq.s32.totalorder %s16, 1
    %p76 = por %p74, %p75
    %p77 = scmp.ne.s32.totalorder %s68, %s69
    %p78 = scmp.eq.s32.totalorder %s16, 0
    %p79 = por %p77, %p78
    %p80 = scmp.ne.s32.totalorder %s68, %s69
    %p81 = scmp.eq.s32.totalorder %s17, 1
    %p82 = por %p80, %p81
    %p84 = scmp.ne.s32.totalorder %s69, %s83
    %p85 = scmp.eq.s32.totalorder %s17, 0
    %p86 = por %p84, %p85
    %s88 = sadd.s32 %s87, 1
    %p91 = scmp.eq.s32.totalorder %s11, 1
    %p92 = scmp.ne.s32.totalorder %s87, %s89
    %p93 = scmp.eq.s32.totalorder %s11, 0
    %p94 = por %p92, %p93
    %p95 = scmp.ne.s32.totalorder %s87, %s89
    %p96 = scmp.eq.s32.totalorder %s16, 1
    %p97 = por %p95, %p96
    %p98 = scmp.ne.s32.totalorder %s89, %s90
    %p99 = scmp.eq.s32.totalorder %s16, 0
    %p100 = por %p98, %p99
    %p101 = scmp.ne.s32.totalorder %s89, %s90
    %p102 = scmp.eq.s32.totalorder %s17, 1
    %p103 = por %p101, %p102
    %p105 = scmp.ne.s32.totalorder %s90, %s104
    %p106 = scmp.eq.s32.totalorder %s17, 0
    %p107 = por %p105, %p106
    %s109 = sadd.s32 %s108, 1
    %p112 = scmp.eq.s32.totalorder %s11, 1
    %p113 = scmp.ne.s32.totalorder %s108, %s110
    %p114 = scmp.eq.s32.totalorder %s11, 0
    %p115 = por %p113, %p114
    %p116 = scmp.ne.s32.totalorder %s108, %s110
    %p117 = scmp.eq.s32.totalorder %s16, 1
    %p118 = por %p116, %p117
    %p119 = scmp.ne.s32.totalorder %s110, %s111
    %p120 = scmp.eq.s32.totalorder %s16, 0
    %p121 = por %p119, %p120
    %p122 = scmp.ne.s32.totalorder %s110, %s111
    %p123 = scmp.eq.s32.totalorder %s17, 1
    %p124 = por %p122, %p123
    %p126 = scmp.ne.s32.totalorder %s111, %s125
    %p127 = scmp.eq.s32.totalorder %s17, 0
    %p128 = por %p126, %p127
    %s129 = ssub.s32 %s11, %s18
    %p130 = scmp.eq.s32.totalorder %s129, 0
    %s132 = sadd.s32 %s131, 1
    %s133 = scalar_select %p130, %s131, %s132
    %p136 = pneg %p130
    %p137 = scmp.eq.s32.totalorder %s11, 1
    %p138 = por %p136, %p137
    %p139 = scmp.ne.s32.totalorder %s131, %s134
    %p140 = scmp.eq.s32.totalorder %s11, 0
    %p141 = por %p139, %p140
    %p142 = scmp.ne.s32.totalorder %s131, %s134
    %p143 = scmp.eq.s32.totalorder %s16, 1
    %p144 = por %p142, %p143
    %p145 = scmp.ne.s32.totalorder %s134, %s135
    %p146 = scmp.eq.s32.totalorder %s16, 0
    %p147 = por %p145, %p146
    %p148 = scmp.ne.s32.totalorder %s134, %s135
    %p149 = scmp.eq.s32.totalorder %s17, 1
    %p150 = por %p148, %p149
    %p152 = scmp.ne.s32.totalorder %s135, %s151
    %p153 = scmp.eq.s32.totalorder %s17, 0
    %p154 = por %p152, %p153
    %p155 = scmp.le.s32.totalorder 1, %s11
    %p156 = scmp.lt.s32.totalorder %s11, 3
    %p157 = pnand %p155, %p156
    %p158 = pneg %p157
    // Predicated region
    $region9: #{basic_block_forward.1} parent=5 // pred_check
      _
    $region10: #{basic_block_forward.1} parent=5 // pred_check_branch
      %160 = sbr.rel (%p157) target = $region12
    $region11: #{basic_block_forward.1} parent=5 // pred_region
      %s161 = ssub.s32 %s11, 1
      // Predicated region
      $region13: #{basic_block_forward.1} parent=11 // pred_check
        %p162 = pneg %p58
      $region14: #{basic_block_forward.1} parent=11 // pred_check_branch
        %164 = sbr.rel (%p162) target = $region16
      $region15: #{basic_block_forward.1} parent=11 // pred_region
        _
      $region16: #{basic_block_forward.1} parent=11 // pred_fallthru
        _
      // Predicated region
      $region17: #{basic_block_forward.1} parent=11 // pred_check
        %p165 = pneg %p79
      $region18: #{basic_block_forward.1} parent=11 // pred_check_branch
        %167 = sbr.rel (%p165) target = $region20
      $region19: #{basic_block_forward.1} parent=11 // pred_region
        _
      $region20: #{basic_block_forward.1} parent=11 // pred_fallthru
        _
      // Predicated region
      $region21: #{basic_block_forward.1} parent=11 // pred_check
        %p168 = pneg %p100
      $region22: #{basic_block_forward.1} parent=11 // pred_check_branch
        %170 = sbr.rel (%p168) target = $region24
      $region23: #{basic_block_forward.1} parent=11 // pred_region
        _
      $region24: #{basic_block_forward.1} parent=11 // pred_fallthru
        _
      // Predicated region
      $region25: #{basic_block_forward.1} parent=11 // pred_check
        %p171 = pneg %p121
      $region26: #{basic_block_forward.1} parent=11 // pred_check_branch
        %173 = sbr.rel (%p171) target = $region28
      $region27: #{basic_block_forward.1} parent=11 // pred_region
        _
      $region28: #{basic_block_forward.1} parent=11 // pred_fallthru
        _
    $region12: #{basic_block_forward.1} parent=5 // pred_fallthru
      _
    %p174 = scmp.lt.s32.totalorder %s11, 2
    // Predicated region
    $region29: #{basic_block_forward.1} parent=5 // pred_check
      %p175 = pneg %p174
    $region30: #{basic_block_forward.1} parent=5 // pred_check_branch
      %177 = sbr.rel (%p175) target = $region32
    $region31: #{basic_block_forward.1} parent=5 // pred_region
      // Predicated region
      $region33: #{basic_block_forward.1} parent=31 // pred_check
        %p178 = pneg %p31
      $region34: #{basic_block_forward.1} parent=31 // pred_check_branch
        %180 = sbr.rel (%p178) target = $region36
      $region35: #{basic_block_forward.1} parent=31 // pred_region
        %p181 = scmp.lt.s32.totalorder %s11, 1
        %s182 = scalar_select %p181, %s11, 1
        %s183 = smul.addr %s182, 54
        %s184 = smul.addr %s183, 8
        %s185 = scalar_lea.vmem %s0, %s184
      $region36: #{basic_block_forward.1} parent=31 // pred_fallthru
        _
    $region32: #{basic_block_forward.1} parent=5 // pred_fallthru
      _
    %p186 = scmp.le.s32.totalorder 1, %s11
    %p187 = scmp.lt.s32.totalorder %s11, 3
    %p188 = pnand %p186, %p187
    %p189 = pneg %p188
    // Predicated region
    $region37: #{basic_block_forward.1} parent=5 // pred_check
      _
    $region38: #{basic_block_forward.1} parent=5 // pred_check_branch
      %191 = sbr.rel (%p188) target = $region40
    $region39: #{basic_block_forward.1} parent=5 // pred_region
      %s192 = ssub.s32 %s11, 1
      %p193 = scmp.lt.s32.totalorder %s16, 1
      %s194 = scalar_select %p193, %s16, 1
      %s195 = smul.addr %s194, 54
      %s196 = smul.addr %s195, 8
      %s197 = scalar_lea.vmem %s0, %s196
      %p198 = pneg %p37
      %p199 = pneg %p34
      %p200 = pneg %p58
      %p201 = pneg %p55
      %p202 = pneg %p79
      %p203 = pneg %p76
      %p204 = pneg %p100
      %p205 = pneg %p97
      %p206 = pneg %p121
      %p207 = pneg %p118
      %p208 = pneg %p147
      %p209 = pneg %p144
      %p210 = scmp.lt.s32.totalorder %s16, 1
      %s211 = scalar_select %p210, %s16, 1
      %s212 = smul.addr %s211, 32
      %s213 = smul.addr %s212, 8
      %s214 = scalar_lea.vmem %s5, %s213
      %p215 = scmp.lt.s32.totalorder %s16, 1
      %s216 = scalar_select %p215, %s16, 1
      %s217 = smul.addr %s216, 54
      %s218 = smul.addr %s217, 8
      %s219 = scalar_lea.vmem %s0, %s218
      %p220 = scmp.lt.s32.totalorder %s16, 1
      %s221 = scalar_select %p220, %s16, 1
      %s222 = smul.addr %s221, 32
      %s223 = smul.addr %s222, 8
      %s224 = scalar_lea.vmem %s5, %s223
      %v226 = vld [vmem:[%s219] sm:$0xff]
      %v227 = vld [vmem:[%s219 + $0x8] sm:$0xff]
      %v228 = vld [vmem:[%s219 + $0x10] sm:$0xff]
      %v229 = vld [vmem:[%s219 + $0x18] sm:$0xff]
      %v230 = vld [vmem:[%s219 + $0x20] sm:$0xff]
      %v231 = vld [vmem:[%s219 + $0x28] sm:$0xff]
      %v232 = vld [vmem:[%s219 + $0x30] sm:$0xff]
      %v233 = vld [vmem:[%s219 + $0x38] sm:$0xff]
      %v234 = vld [vmem:[%s219 + $0x40] sm:$0xff]
      %v235 = vld [vmem:[%s219 + $0x48] sm:$0xff]
      %v236 = vld [vmem:[%s219 + $0x50] sm:$0xff]
      %v237 = vld [vmem:[%s219 + $0x58] sm:$0xff]
      %v238 = vld [vmem:[%s219 + $0x60] sm:$0xff]
      %v239 = vld [vmem:[%s219 + $0x68] sm:$0xff]
      %v240 = vld [vmem:[%s219 + $0x70] sm:$0xff]
      %v241 = vld [vmem:[%s219 + $0x78] sm:$0xff]
      %v242 = vld [vmem:[%s219 + $0x80] sm:$0xff]
      %v243 = vld [vmem:[%s219 + $0x88] sm:$0xff]
      %v244 = vld [vmem:[%s219 + $0x90] sm:$0xff]
      %v245 = vld [vmem:[%s219 + $0x98] sm:$0xff]
      %v246 = vld [vmem:[%s219 + $0xa0] sm:$0xff]
      %v247 = vld [vmem:[%s219 + $0xa8] sm:$0xff]
      %v248 = vld [vmem:[%s219 + $0xb0] sm:$0xff]
      %v249 = vld [vmem:[%s219 + $0xb8] sm:$0xff]
      %v250 = vld [vmem:[%s219 + $0xc0] sm:$0xff]
      %v251 = vld [vmem:[%s219 + $0xc8] sm:$0xff]
      %v252 = vld [vmem:[%s219 + $0xd0] sm:$0xff]
      %v253 = vld [vmem:[%s219 + $0xd8] sm:$0xff]
      %v254 = vld [vmem:[%s219 + $0xe0] sm:$0xff]
      %v255 = vld [vmem:[%s219 + $0xe8] sm:$0xff]
      %v256 = vld [vmem:[%s219 + $0xf0] sm:$0xff]
      %v257 = vld [vmem:[%s219 + $0xf8] sm:$0xff]
      %v258 = vld [vmem:[%s219 + $0x100] sm:$0xff]
      %v259 = vld [vmem:[%s219 + $0x108] sm:$0xff]
      %v260 = vld [vmem:[%s219 + $0x110] sm:$0xff]
      %v261 = vld [vmem:[%s219 + $0x118] sm:$0xff]
      %v262 = vld [vmem:[%s219 + $0x120] sm:$0xff]
      %v263 = vld [vmem:[%s219 + $0x128] sm:$0xff]
      %v264 = vld [vmem:[%s219 + $0x130] sm:$0xff]
      %v265 = vld [vmem:[%s219 + $0x138] sm:$0xff]
      %v266 = vld [vmem:[%s219 + $0x140] sm:$0xff]
      %v267 = vld [vmem:[%s219 + $0x148] sm:$0xff]
      %v268 = vld [vmem:[%s219 + $0x150] sm:$0xff]
      %v269 = vld [vmem:[%s219 + $0x158] sm:$0xff]
      %v270 = vld [vmem:[%s219 + $0x160] sm:$0xff]
      %v271 = vld [vmem:[%s219 + $0x168] sm:$0xff]
      %v272 = vld [vmem:[%s219 + $0x170] sm:$0xff]
      %v273 = vld [vmem:[%s219 + $0x178] sm:$0xff]
      %v274 = vld [vmem:[%s219 + $0x180] sm:$0xff]
      %v275 = vld [vmem:[%s219 + $0x188] sm:$0xff]
      %v276 = vld [vmem:[%s219 + $0x190] sm:$0xff]
      %v277 = vld [vmem:[%s219 + $0x198] sm:$0xff]
      %v278 = vld [vmem:[%s219 + $0x1a0] sm:$0xff]
      %v279 = vld [vmem:[%s219 + $0x1a8] sm:$0xff]
      %v280 = vpack.c.bf16 %v227, %v226
      %v281 = vpack.c.bf16 %v230, %v229
      %v282 = vpack.c.bf16 %v233, %v232
      %v283 = vpack.c.bf16 %v236, %v235
      %v284 = vpack.c.bf16 %v239, %v238
      %v285 = vpack.c.bf16 %v242, %v241
      %v286 = vpack.c.bf16 %v245, %v244
      %v287 = vpack.c.bf16 %v248, %v247
      %v288 = vpack.c.bf16 %v251, %v250
      %v289 = vpack.c.bf16 %v254, %v253
      %v290 = vpack.c.bf16 %v257, %v256
      %v291 = vpack.c.bf16 %v260, %v259
      %v292 = vpack.c.bf16 %v263, %v262
      %v293 = vpack.c.bf16 %v266, %v265
      %v294 = vpack.c.bf16 %v269, %v268
      %v295 = vpack.c.bf16 %v272, %v271
      %v296 = vld [vmem:[%s1] sm:$0xf]
      %vm345 = vcmask 1046528
      %v346 = vrot.slane %v226, 1
      %v347 = vrot.slane %v227, 1
      %v348 = vsel %vm345, %v346, %v347
      %v349 = vrot.slane %v228, 1
      %v350 = vsel %vm345, %v347, %v349
      %v351 = vrot.slane %v229, 1
      %v352 = vrot.slane %v230, 1
      %v353 = vsel %vm345, %v351, %v352
      %v354 = vrot.slane %v231, 1
      %v355 = vsel %vm345, %v352, %v354
      %v356 = vrot.slane %v232, 1
      %v357 = vrot.slane %v233, 1
      %v358 = vsel %vm345, %v356, %v357
      %v359 = vrot.slane %v234, 1
      %v360 = vsel %vm345, %v357, %v359
      %v361 = vrot.slane %v235, 1
      %v362 = vrot.slane %v236, 1
      %v363 = vsel %vm345, %v361, %v362
      %v364 = vrot.slane %v237, 1
      %v365 = vsel %vm345, %v362, %v364
      %v366 = vrot.slane %v238, 1
      %v367 = vrot.slane %v239, 1
      %v368 = vsel %vm345, %v366, %v367
      %v369 = vrot.slane %v240, 1
      %v370 = vsel %vm345, %v367, %v369
      %v371 = vrot.slane %v241, 1
      %v372 = vrot.slane %v242, 1
      %v373 = vsel %vm345, %v371, %v372
      %v374 = vrot.slane %v243, 1
      %v375 = vsel %vm345, %v372, %v374
      %v376 = vrot.slane %v244, 1
      %v377 = vrot.slane %v245, 1
      %v378 = vsel %vm345, %v376, %v377
      %v379 = vrot.slane %v246, 1
      %v380 = vsel %vm345, %v377, %v379
      %v381 = vrot.slane %v247, 1
      %v382 = vrot.slane %v248, 1
      %v383 = vsel %vm345, %v381, %v382
      %v384 = vrot.slane %v249, 1
      %v385 = vsel %vm345, %v382, %v384
      %v386 = vrot.slane %v250, 1
      %v387 = vrot.slane %v251, 1
      %v388 = vsel %vm345, %v386, %v387
      %v389 = vrot.slane %v252, 1
      %v390 = vsel %vm345, %v387, %v389
      %v391 = vrot.slane %v253, 1
      %v392 = vrot.slane %v254, 1
      %v393 = vsel %vm345, %v391, %v392
      %v394 = vrot.slane %v255, 1
      %v395 = vsel %vm345, %v392, %v394
      %v396 = vrot.slane %v256, 1
      %v397 = vrot.slane %v257, 1
      %v398 = vsel %vm345, %v396, %v397
      %v399 = vrot.slane %v258, 1
      %v400 = vsel %vm345, %v397, %v399
      %v401 = vrot.slane %v259, 1
      %v402 = vrot.slane %v260, 1
      %v403 = vsel %vm345, %v401, %v402
      %v404 = vrot.slane %v261, 1
      %v405 = vsel %vm345, %v402, %v404
      %v406 = vrot.slane %v262, 1
      %v407 = vrot.slane %v263, 1
      %v408 = vsel %vm345, %v406, %v407
      %v409 = vrot.slane %v264, 1
      %v410 = vsel %vm345, %v407, %v409
      %v411 = vrot.slane %v265, 1
      %v412 = vrot.slane %v266, 1
      %v413 = vsel %vm345, %v411, %v412
      %v414 = vrot.slane %v267, 1
      %v415 = vsel %vm345, %v412, %v414
      %v416 = vrot.slane %v268, 1
      %v417 = vrot.slane %v269, 1
      %v418 = vsel %vm345, %v416, %v417
      %v419 = vrot.slane %v270, 1
      %v420 = vsel %vm345, %v417, %v419
      %v421 = vrot.slane %v271, 1
      %v422 = vrot.slane %v272, 1
      %v423 = vsel %vm345, %v421, %v422
      %v424 = vrot.slane %v273, 1
      %v425 = vsel %vm345, %v422, %v424
      %v458 = vpack.c.bf16 %v350, %v348
      %v459 = vpack.c.bf16 %v355, %v353
      %v460 = vpack.c.bf16 %v360, %v358
      %v461 = vpack.c.bf16 %v365, %v363
      %v462 = vpack.c.bf16 %v370, %v368
      %v463 = vpack.c.bf16 %v375, %v373
      %v464 = vpack.c.bf16 %v380, %v378
      %v465 = vpack.c.bf16 %v385, %v383
      %v466 = vpack.c.bf16 %v390, %v388
      %v467 = vpack.c.bf16 %v395, %v393
      %v468 = vpack.c.bf16 %v400, %v398
      %v469 = vpack.c.bf16 %v405, %v403
      %v470 = vpack.c.bf16 %v410, %v408
      %v471 = vpack.c.bf16 %v415, %v413
      %v472 = vpack.c.bf16 %v420, %v418
      %v473 = vpack.c.bf16 %v425, %v423
      %s474 = scalar_lea.vmem %s1, 4
      %v475 = vld [vmem:[%s474] sm:$0xf]
      %vm476 = vcmask 64512
      %v478 = vsel %vm476, %v458, 0
      %v481 = vsel %vm476, %v459, 0
      %v484 = vsel %vm476, %v460, 0
      %v487 = vsel %vm476, %v461, 0
      %v490 = vsel %vm476, %v462, 0
      %v493 = vsel %vm476, %v463, 0
      %v496 = vsel %vm476, %v464, 0
      %v499 = vsel %vm476, %v465, 0
      %v502 = vsel %vm476, %v466, 0
      %v505 = vsel %vm476, %v467, 0
      %v508 = vsel %vm476, %v468, 0
      %v511 = vsel %vm476, %v469, 0
      %v514 = vsel %vm476, %v470, 0
      %v517 = vsel %vm476, %v471, 0
      %v520 = vsel %vm476, %v472, 0
      %v523 = vsel %vm476, %v473, 0
      %vm525 = vcmask 1043456
      %v527 = vsel %vm525, %v475, 0
      %529 = vmatprep.subr.bf16.mxu0 0
      %530 = vmatpush1.bf16.msra.mxu0 0
      %531 = vmatprep.subr.bf16.mxu0 0
      %532 = vmatpush1.bf16.msra.mxu0 0
      %533 = vmatprep.subr.bf16.mxu0 0
      %534 = vmatpush1.bf16.msra.mxu0 0
      %535 = vmatprep.subr.bf16.mxu0 0
      %536 = vmatpush1.bf16.msra.mxu0 0
      %537 = vmatprep.subr.bf16.mxu0 0
      %538 = vmatpush1.bf16.msra.mxu0 0
      %539 = vmatprep.subr.bf16.mxu0 0
      %540 = vmatpush1.bf16.msra.mxu0 0
      %541 = vmatprep.subr.bf16.mxu0 0
      %542 = vmatpush1.bf16.msra.mxu0 0
      %543 = vmatprep.subr.bf16.mxu0 0
      %544 = vmatpush1.bf16.msra.mxu0 %v527
      %545 = vmatprep.subr.bf16.mxu0 0
      %546 = vmatpush2.bf16.msra.mxu0 0
      %547 = vmatprep.subr.bf16.mxu0 0
      %548 = vmatpush2.bf16.msra.mxu0 0
      %549 = vmatprep.subr.bf16.mxu0 0
      %550 = vmatpush2.bf16.msra.mxu0 0
      %551 = vmatprep.subr.bf16.mxu0 0
      %552 = vmatpush2.bf16.msra.mxu0 0
      %553 = vmatprep.subr.bf16.mxu0 0
      %554 = vmatpush2.bf16.msra.mxu0 0
      %555 = vmatprep.subr.bf16.mxu0 0
      %556 = vmatpush2.bf16.msra.mxu0 0
      %557 = vmatprep.subr.bf16.mxu0 0
      %558 = vmatpush2.bf16.msra.mxu0 0
      %559 = vmatprep.subr.bf16.mxu0 0
      %560 = vmatpush2.bf16.msra.mxu0 0
      %561 = vmatprep.mubr.bf16.mxu0 0
      %562 = vmatmul.mubr.bf16.gmra.mxu0 %v478
      %v563 = vpop.f32.mrf.mxu0
      %v564 = vadd.f32 0.0, %v563
      %v565 = vpop.f32.mrf.mxu0
      %v566 = vpop.f32.mrf.mxu0
      %v567 = vadd.f32 0.0, %v566
      %v568 = vpop.f32.mrf.mxu0
      %569 = vmatprep.mubr.bf16.mxu0 0
      %570 = vmatmul.mubr.bf16.gmra.mxu0 %v481
      %v571 = vpop.f32.mrf.mxu0
      %v572 = vadd.f32 0.0, %v571
      %v573 = vpop.f32.mrf.mxu0
      %v574 = vpop.f32.mrf.mxu0
      %v575 = vadd.f32 0.0, %v574
      %v576 = vpop.f32.mrf.mxu0
      %577 = vmatprep.mubr.bf16.mxu0 0
      %578 = vmatmul.mubr.bf16.gmra.mxu0 %v484
      %v579 = vpop.f32.mrf.mxu0
      %v580 = vadd.f32 0.0, %v579
      %v581 = vpop.f32.mrf.mxu0
      %v582 = vpop.f32.mrf.mxu0
      %v583 = vadd.f32 0.0, %v582
      %v584 = vpop.f32.mrf.mxu0
      %585 = vmatprep.mubr.bf16.mxu0 0
      %586 = vmatmul.mubr.bf16.gmra.mxu0 %v487
      %v587 = vpop.f32.mrf.mxu0
      %v588 = vadd.f32 0.0, %v587
      %v589 = vpop.f32.mrf.mxu0
      %v590 = vpop.f32.mrf.mxu0
      %v591 = vadd.f32 0.0, %v590
      %v592 = vpop.f32.mrf.mxu0
      %593 = vmatprep.mubr.bf16.mxu0 0
      %594 = vmatmul.mubr.bf16.gmra.mxu0 %v490
      %v595 = vpop.f32.mrf.mxu0
      %v596 = vadd.f32 0.0, %v595
      %v597 = vpop.f32.mrf.mxu0
      %v598 = vpop.f32.mrf.mxu0
      %v599 = vadd.f32 0.0, %v598
      %v600 = vpop.f32.mrf.mxu0
      %601 = vmatprep.mubr.bf16.mxu0 0
      %602 = vmatmul.mubr.bf16.gmra.mxu0 %v493
      %v603 = vpop.f32.mrf.mxu0
      %v604 = vadd.f32 0.0, %v603
      %v605 = vpop.f32.mrf.mxu0
      %v606 = vpop.f32.mrf.mxu0
      %v607 = vadd.f32 0.0, %v606
      %v608 = vpop.f32.mrf.mxu0
      %609 = vmatprep.mubr.bf16.mxu0 0
      %610 = vmatmul.mubr.bf16.gmra.mxu0 %v496
      %v611 = vpop.f32.mrf.mxu0
      %v612 = vadd.f32 0.0, %v611
      %v613 = vpop.f32.mrf.mxu0
      %v614 = vpop.f32.mrf.mxu0
      %v615 = vadd.f32 0.0, %v614
      %v616 = vpop.f32.mrf.mxu0
      %617 = vmatprep.mubr.bf16.mxu0 0
      %618 = vmatmul.mubr.bf16.gmra.mxu0 %v499
      %v619 = vpop.f32.mrf.mxu0
      %v620 = vadd.f32 0.0, %v619
      %v621 = vpop.f32.mrf.mxu0
      %v622 = vpop.f32.mrf.mxu0
      %v623 = vadd.f32 0.0, %v622
      %v624 = vpop.f32.mrf.mxu0
      %625 = vmatprep.mubr.bf16.mxu0 0
      %626 = vmatmul.mubr.bf16.gmra.mxu0 %v502
      %v627 = vpop.f32.mrf.mxu0
      %v628 = vadd.f32 0.0, %v627
      %v629 = vpop.f32.mrf.mxu0
      %v630 = vpop.f32.mrf.mxu0
      %v631 = vadd.f32 0.0, %v630
      %v632 = vpop.f32.mrf.mxu0
      %633 = vmatprep.mubr.bf16.mxu0 0
      %634 = vmatmul.mubr.bf16.gmra.mxu0 %v505
      %v635 = vpop.f32.mrf.mxu0
      %v636 = vadd.f32 0.0, %v635
      %v637 = vpop.f32.mrf.mxu0
      %v638 = vpop.f32.mrf.mxu0
      %v639 = vadd.f32 0.0, %v638
      %v640 = vpop.f32.mrf.mxu0
      %641 = vmatprep.mubr.bf16.mxu0 0
      %642 = vmatmul.mubr.bf16.gmra.mxu0 %v508
      %v643 = vpop.f32.mrf.mxu0
      %v644 = vadd.f32 0.0, %v643
      %v645 = vpop.f32.mrf.mxu0
      %v646 = vpop.f32.mrf.mxu0
      %v647 = vadd.f32 0.0, %v646
      %v648 = vpop.f32.mrf.mxu0
      %649 = vmatprep.mubr.bf16.mxu0 0
      %650 = vmatmul.mubr.bf16.gmra.mxu0 %v511
      %v651 = vpop.f32.mrf.mxu0
      %v652 = vadd.f32 0.0, %v651
      %v653 = vpop.f32.mrf.mxu0
      %v654 = vpop.f32.mrf.mxu0
      %v655 = vadd.f32 0.0, %v654
      %v656 = vpop.f32.mrf.mxu0
      %657 = vmatprep.mubr.bf16.mxu0 0
      %658 = vmatmul.mubr.bf16.gmra.mxu0 %v514
      %v659 = vpop.f32.mrf.mxu0
      %v660 = vadd.f32 0.0, %v659
      %v661 = vpop.f32.mrf.mxu0
      %v662 = vpop.f32.mrf.mxu0
      %v663 = vadd.f32 0.0, %v662
      %v664 = vpop.f32.mrf.mxu0
      %665 = vmatprep.mubr.bf16.mxu0 0
      %666 = vmatmul.mubr.bf16.gmra.mxu0 %v517
      %v667 = vpop.f32.mrf.mxu0
      %v668 = vadd.f32 0.0, %v667
      %v669 = vpop.f32.mrf.mxu0
      %v670 = vpop.f32.mrf.mxu0
      %v671 = vadd.f32 0.0, %v670
      %v672 = vpop.f32.mrf.mxu0
      %673 = vmatprep.mubr.bf16.mxu0 0
      %674 = vmatmul.mubr.bf16.gmra.mxu0 %v520
      %v675 = vpop.f32.mrf.mxu0
      %v676 = vadd.f32 0.0, %v675
      %v677 = vpop.f32.mrf.mxu0
      %v678 = vpop.f32.mrf.mxu0
      %v679 = vadd.f32 0.0, %v678
      %v680 = vpop.f32.mrf.mxu0
      %681 = vmatprep.mubr.bf16.mxu0 0
      %682 = vmatmul.mubr.bf16.gmra.mxu0 %v523
      %v683 = vpop.f32.mrf.mxu0
      %v684 = vadd.f32 0.0, %v683
      %v685 = vpop.f32.mrf.mxu0
      %v686 = vpop.f32.mrf.mxu0
      %v687 = vadd.f32 0.0, %v686
      %v688 = vpop.f32.mrf.mxu0
      %689 = vdwg.mxu0
      %v691 = vsel %vm476, %v280, 0
      %v694 = vsel %vm476, %v281, 0
      %v697 = vsel %vm476, %v282, 0
      %v700 = vsel %vm476, %v283, 0
      %v703 = vsel %vm476, %v284, 0
      %v706 = vsel %vm476, %v285, 0
      %v709 = vsel %vm476, %v286, 0
      %v712 = vsel %vm476, %v287, 0
      %v715 = vsel %vm476, %v288, 0
      %v718 = vsel %vm476, %v289, 0
      %v721 = vsel %vm476, %v290, 0
      %v724 = vsel %vm476, %v291, 0
      %v727 = vsel %vm476, %v292, 0
      %v730 = vsel %vm476, %v293, 0
      %v733 = vsel %vm476, %v294, 0
      %v736 = vsel %vm476, %v295, 0
      %v739 = vsel %vm525, %v296, 0
      %741 = vmatprep.subr.bf16.mxu0 0
      %742 = vmatpush1.bf16.msra.mxu0 0
      %743 = vmatprep.subr.bf16.mxu0 0
      %744 = vmatpush1.bf16.msra.mxu0 0
      %745 = vmatprep.subr.bf16.mxu0 0
      %746 = vmatpush1.bf16.msra.mxu0 0
      %747 = vmatprep.subr.bf16.mxu0 0
      %748 = vmatpush1.bf16.msra.mxu0 0
      %749 = vmatprep.subr.bf16.mxu0 0
      %750 = vmatpush1.bf16.msra.mxu0 0
      %751 = vmatprep.subr.bf16.mxu0 0
      %752 = vmatpush1.bf16.msra.mxu0 0
      %753 = vmatprep.subr.bf16.mxu0 0
      %754 = vmatpush1.bf16.msra.mxu0 0
      %755 = vmatprep.subr.bf16.mxu0 0
      %756 = vmatpush1.bf16.msra.mxu0 %v739
      %757 = vmatprep.subr.bf16.mxu0 0
      %758 = vmatpush2.bf16.msra.mxu0 0
      %759 = vmatprep.subr.bf16.mxu0 0
      %760 = vmatpush2.bf16.msra.mxu0 0
      %761 = vmatprep.subr.bf16.mxu0 0
      %762 = vmatpush2.bf16.msra.mxu0 0
      %763 = vmatprep.subr.bf16.mxu0 0
      %764 = vmatpush2.bf16.msra.mxu0 0
      %765 = vmatprep.subr.bf16.mxu0 0
      %766 = vmatpush2.bf16.msra.mxu0 0
      %767 = vmatprep.subr.bf16.mxu0 0
      %768 = vmatpush2.bf16.msra.mxu0 0
      %769 = vmatprep.subr.bf16.mxu0 0
      %770 = vmatpush2.bf16.msra.mxu0 0
      %771 = vmatprep.subr.bf16.mxu0 0
      %772 = vmatpush2.bf16.msra.mxu0 0
      %773 = vmatprep.mubr.bf16.mxu0 0
      %774 = vmatmul.mubr.bf16.gmra.mxu0 %v691
      %v775 = vpop.f32.mrf.mxu0
      %v776 = vadd.f32 %v564, %v775
      %v777 = vpop.f32.mrf.mxu0
      %v778 = vpop.f32.mrf.mxu0
      %v779 = vadd.f32 %v567, %v778
      %v780 = vpop.f32.mrf.mxu0
      %781 = vmatprep.mubr.bf16.mxu0 0
      %782 = vmatmul.mubr.bf16.gmra.mxu0 %v694
      %v783 = vpop.f32.mrf.mxu0
      %v784 = vadd.f32 %v572, %v783
      %v785 = vpop.f32.mrf.mxu0
      %v786 = vpop.f32.mrf.mxu0
      %v787 = vadd.f32 %v575, %v786
      %v788 = vpop.f32.mrf.mxu0
      %789 = vmatprep.mubr.bf16.mxu0 0
      %790 = vmatmul.mubr.bf16.gmra.mxu0 %v697
      %v791 = vpop.f32.mrf.mxu0
      %v792 = vadd.f32 %v580, %v791
      %v793 = vpop.f32.mrf.mxu0
      %v794 = vpop.f32.mrf.mxu0
      %v795 = vadd.f32 %v583, %v794
      %v796 = vpop.f32.mrf.mxu0
      %797 = vmatprep.mubr.bf16.mxu0 0
      %798 = vmatmul.mubr.bf16.gmra.mxu0 %v700
      %v799 = vpop.f32.mrf.mxu0
      %v800 = vadd.f32 %v588, %v799
      %v801 = vpop.f32.mrf.mxu0
      %v802 = vpop.f32.mrf.mxu0
      %v803 = vadd.f32 %v591, %v802
      %v804 = vpop.f32.mrf.mxu0
      %805 = vmatprep.mubr.bf16.mxu0 0
      %806 = vmatmul.mubr.bf16.gmra.mxu0 %v703
      %v807 = vpop.f32.mrf.mxu0
      %v808 = vadd.f32 %v596, %v807
      %v809 = vpop.f32.mrf.mxu0
      %v810 = vpop.f32.mrf.mxu0
      %v811 = vadd.f32 %v599, %v810
      %v812 = vpop.f32.mrf.mxu0
      %813 = vmatprep.mubr.bf16.mxu0 0
      %814 = vmatmul.mubr.bf16.gmra.mxu0 %v706
      %v815 = vpop.f32.mrf.mxu0
      %v816 = vadd.f32 %v604, %v815
      %v817 = vpop.f32.mrf.mxu0
      %v818 = vpop.f32.mrf.mxu0
      %v819 = vadd.f32 %v607, %v818
      %v820 = vpop.f32.mrf.mxu0
      %821 = vmatprep.mubr.bf16.mxu0 0
      %822 = vmatmul.mubr.bf16.gmra.mxu0 %v709
      %v823 = vpop.f32.mrf.mxu0
      %v824 = vadd.f32 %v612, %v823
      %v825 = vpop.f32.mrf.mxu0
      %v826 = vpop.f32.mrf.mxu0
      %v827 = vadd.f32 %v615, %v826
      %v828 = vpop.f32.mrf.mxu0
      %829 = vmatprep.mubr.bf16.mxu0 0
      %830 = vmatmul.mubr.bf16.gmra.mxu0 %v712
      %v831 = vpop.f32.mrf.mxu0
      %v832 = vadd.f32 %v620, %v831
      %v833 = vpop.f32.mrf.mxu0
      %v834 = vpop.f32.mrf.mxu0
      %v835 = vadd.f32 %v623, %v834
      %v836 = vpop.f32.mrf.mxu0
      %837 = vmatprep.mubr.bf16.mxu0 0
      %838 = vmatmul.mubr.bf16.gmra.mxu0 %v715
      %v839 = vpop.f32.mrf.mxu0
      %v840 = vadd.f32 %v628, %v839
      %v841 = vpop.f32.mrf.mxu0
      %v842 = vpop.f32.mrf.mxu0
      %v843 = vadd.f32 %v631, %v842
      %v844 = vpop.f32.mrf.mxu0
      %845 = vmatprep.mubr.bf16.mxu0 0
      %846 = vmatmul.mubr.bf16.gmra.mxu0 %v718
      %v847 = vpop.f32.mrf.mxu0
      %v848 = vadd.f32 %v636, %v847
      %v849 = vpop.f32.mrf.mxu0
      %v850 = vpop.f32.mrf.mxu0
      %v851 = vadd.f32 %v639, %v850
      %v852 = vpop.f32.mrf.mxu0
      %853 = vmatprep.mubr.bf16.mxu0 0
      %854 = vmatmul.mubr.bf16.gmra.mxu0 %v721
      %v855 = vpop.f32.mrf.mxu0
      %v856 = vadd.f32 %v644, %v855
      %v857 = vpop.f32.mrf.mxu0
      %v858 = vpop.f32.mrf.mxu0
      %v859 = vadd.f32 %v647, %v858
      %v860 = vpop.f32.mrf.mxu0
      %861 = vmatprep.mubr.bf16.mxu0 0
      %862 = vmatmul.mubr.bf16.gmra.mxu0 %v724
      %v863 = vpop.f32.mrf.mxu0
      %v864 = vadd.f32 %v652, %v863
      %v865 = vpop.f32.mrf.mxu0
      %v866 = vpop.f32.mrf.mxu0
      %v867 = vadd.f32 %v655, %v866
      %v868 = vpop.f32.mrf.mxu0
      %869 = vmatprep.mubr.bf16.mxu0 0
      %870 = vmatmul.mubr.bf16.gmra.mxu0 %v727
      %v871 = vpop.f32.mrf.mxu0
      %v872 = vadd.f32 %v660, %v871
      %v873 = vpop.f32.mrf.mxu0
      %v874 = vpop.f32.mrf.mxu0
      %v875 = vadd.f32 %v663, %v874
      %v876 = vpop.f32.mrf.mxu0
      %877 = vmatprep.mubr.bf16.mxu0 0
      %878 = vmatmul.mubr.bf16.gmra.mxu0 %v730
      %v879 = vpop.f32.mrf.mxu0
      %v880 = vadd.f32 %v668, %v879
      %v881 = vpop.f32.mrf.mxu0
      %v882 = vpop.f32.mrf.mxu0
      %v883 = vadd.f32 %v671, %v882
      %v884 = vpop.f32.mrf.mxu0
      %885 = vmatprep.mubr.bf16.mxu0 0
      %886 = vmatmul.mubr.bf16.gmra.mxu0 %v733
      %v887 = vpop.f32.mrf.mxu0
      %v888 = vadd.f32 %v676, %v887
      %v889 = vpop.f32.mrf.mxu0
      %v890 = vpop.f32.mrf.mxu0
      %v891 = vadd.f32 %v679, %v890
      %v892 = vpop.f32.mrf.mxu0
      %893 = vmatprep.mubr.bf16.mxu0 0
      %894 = vmatmul.mubr.bf16.gmra.mxu0 %v736
      %v895 = vpop.f32.mrf.mxu0
      %v896 = vadd.f32 %v684, %v895
      %v897 = vpop.f32.mrf.mxu0
      %v898 = vpop.f32.mrf.mxu0
      %v899 = vadd.f32 %v687, %v898
      %v900 = vpop.f32.mrf.mxu0
      %901 = vdwg.mxu0
      %vm902 = vcmask 1045504
      %v903 = vrot.slane %v226, 2
      %v904 = vrot.slane %v227, 2
      %v905 = vsel %vm902, %v903, %v904
      %v906 = vrot.slane %v228, 2
      %v907 = vsel %vm902, %v904, %v906
      %v908 = vrot.slane %v229, 2
      %v909 = vrot.slane %v230, 2
      %v910 = vsel %vm902, %v908, %v909
      %v911 = vrot.slane %v231, 2
      %v912 = vsel %vm902, %v909, %v911
      %v913 = vrot.slane %v232, 2
      %v914 = vrot.slane %v233, 2
      %v915 = vsel %vm902, %v913, %v914
      %v916 = vrot.slane %v234, 2
      %v917 = vsel %vm902, %v914, %v916
      %v918 = vrot.slane %v235, 2
      %v919 = vrot.slane %v236, 2
      %v920 = vsel %vm902, %v918, %v919
      %v921 = vrot.slane %v237, 2
      %v922 = vsel %vm902, %v919, %v921
      %v923 = vrot.slane %v238, 2
      %v924 = vrot.slane %v239, 2
      %v925 = vsel %vm902, %v923, %v924
      %v926 = vrot.slane %v240, 2
      %v927 = vsel %vm902, %v924, %v926
      %v928 = vrot.slane %v241, 2
      %v929 = vrot.slane %v242, 2
      %v930 = vsel %vm902, %v928, %v929
      %v931 = vrot.slane %v243, 2
      %v932 = vsel %vm902, %v929, %v931
      %v933 = vrot.slane %v244, 2
      %v934 = vrot.slane %v245, 2
      %v935 = vsel %vm902, %v933, %v934
      %v936 = vrot.slane %v246, 2
      %v937 = vsel %vm902, %v934, %v936
      %v938 = vrot.slane %v247, 2
      %v939 = vrot.slane %v248, 2
      %v940 = vsel %vm902, %v938, %v939
      %v941 = vrot.slane %v249, 2
      %v942 = vsel %vm902, %v939, %v941
      %v943 = vrot.slane %v250, 2
      %v944 = vrot.slane %v251, 2
      %v945 = vsel %vm902, %v943, %v944
      %v946 = vrot.slane %v252, 2
      %v947 = vsel %vm902, %v944, %v946
      %v948 = vrot.slane %v253, 2
      %v949 = vrot.slane %v254, 2
      %v950 = vsel %vm902, %v948, %v949
      %v951 = vrot.slane %v255, 2
      %v952 = vsel %vm902, %v949, %v951
      %v953 = vrot.slane %v256, 2
      %v954 = vrot.slane %v257, 2
      %v955 = vsel %vm902, %v953, %v954
      %v956 = vrot.slane %v258, 2
      %v957 = vsel %vm902, %v954, %v956
      %v958 = vrot.slane %v259, 2
      %v959 = vrot.slane %v260, 2
      %v960 = vsel %vm902, %v958, %v959
      %v961 = vrot.slane %v261, 2
      %v962 = vsel %vm902, %v959, %v961
      %v963 = vrot.slane %v262, 2
      %v964 = vrot.slane %v263, 2
      %v965 = vsel %vm902, %v963, %v964
      %v966 = vrot.slane %v264, 2
      %v967 = vsel %vm902, %v964, %v966
      %v968 = vrot.slane %v265, 2
      %v969 = vrot.slane %v266, 2
      %v970 = vsel %vm902, %v968, %v969
      %v971 = vrot.slane %v267, 2
      %v972 = vsel %vm902, %v969, %v971
      %v973 = vrot.slane %v268, 2
      %v974 = vrot.slane %v269, 2
      %v975 = vsel %vm902, %v973, %v974
      %v976 = vrot.slane %v270, 2
      %v977 = vsel %vm902, %v974, %v976
      %v978 = vrot.slane %v271, 2
      %v979 = vrot.slane %v272, 2
      %v980 = vsel %vm902, %v978, %v979
      %v981 = vrot.slane %v273, 2
      %v982 = vsel %vm902, %v979, %v981
      %v1015 = vpack.c.bf16 %v907, %v905
      %v1016 = vpack.c.bf16 %v912, %v910
      %v1017 = vpack.c.bf16 %v917, %v915
      %v1018 = vpack.c.bf16 %v922, %v920
      %v1019 = vpack.c.bf16 %v927, %v925
      %v1020 = vpack.c.bf16 %v932, %v930
      %v1021 = vpack.c.bf16 %v937, %v935
      %v1022 = vpack.c.bf16 %v942, %v940
      %v1023 = vpack.c.bf16 %v947, %v945
      %v1024 = vpack.c.bf16 %v952, %v950
      %v1025 = vpack.c.bf16 %v957, %v955
      %v1026 = vpack.c.bf16 %v962, %v960
      %v1027 = vpack.c.bf16 %v967, %v965
      %v1028 = vpack.c.bf16 %v972, %v970
      %v1029 = vpack.c.bf16 %v977, %v975
      %v1030 = vpack.c.bf16 %v982, %v980
      %s1031 = scalar_lea.vmem %s1, 8
      %v1032 = vld [vmem:[%s1031] sm:$0xf]
      %v1034 = vsel %vm476, %v1015, 0
      %v1037 = vsel %vm476, %v1016, 0
      %v1040 = vsel %vm476, %v1017, 0
      %v1043 = vsel %vm476, %v1018, 0
      %v1046 = vsel %vm476, %v1019, 0
      %v1049 = vsel %vm476, %v1020, 0
      %v1052 = vsel %vm476, %v1021, 0
      %v1055 = vsel %vm476, %v1022, 0
      %v1058 = vsel %vm476, %v1023, 0
      %v1061 = vsel %vm476, %v1024, 0
      %v1064 = vsel %vm476, %v1025, 0
      %v1067 = vsel %vm476, %v1026, 0
      %v1070 = vsel %vm476, %v1027, 0
      %v1073 = vsel %vm476, %v1028, 0
      %v1076 = vsel %vm476, %v1029, 0
      %v1079 = vsel %vm476, %v1030, 0
      %v1082 = vsel %vm525, %v1032, 0
      %1084 = vmatprep.subr.bf16.mxu0 0
      %1085 = vmatpush1.bf16.msra.mxu0 0
      %1086 = vmatprep.subr.bf16.mxu0 0
      %1087 = vmatpush1.bf16.msra.mxu0 0
      %1088 = vmatprep.subr.bf16.mxu0 0
      %1089 = vmatpush1.bf16.msra.mxu0 0
      %1090 = vmatprep.subr.bf16.mxu0 0
      %1091 = vmatpush1.bf16.msra.mxu0 0
      %1092 = vmatprep.subr.bf16.mxu0 0
      %1093 = vmatpush1.bf16.msra.mxu0 0
      %1094 = vmatprep.subr.bf16.mxu0 0
      %1095 = vmatpush1.bf16.msra.mxu0 0
      %1096 = vmatprep.subr.bf16.mxu0 0
      %1097 = vmatpush1.bf16.msra.mxu0 0
      %1098 = vmatprep.subr.bf16.mxu0 0
      %1099 = vmatpush1.bf16.msra.mxu0 %v1082
      %1100 = vmatprep.subr.bf16.mxu0 0
      %1101 = vmatpush2.bf16.msra.mxu0 0
      %1102 = vmatprep.subr.bf16.mxu0 0
      %1103 = vmatpush2.bf16.msra.mxu0 0
      %1104 = vmatprep.subr.bf16.mxu0 0
      %1105 = vmatpush2.bf16.msra.mxu0 0
      %1106 = vmatprep.subr.bf16.mxu0 0
      %1107 = vmatpush2.bf16.msra.mxu0 0
      %1108 = vmatprep.subr.bf16.mxu0 0
      %1109 = vmatpush2.bf16.msra.mxu0 0
      %1110 = vmatprep.subr.bf16.mxu0 0
      %1111 = vmatpush2.bf16.msra.mxu0 0
      %1112 = vmatprep.subr.bf16.mxu0 0
      %1113 = vmatpush2.bf16.msra.mxu0 0
      %1114 = vmatprep.subr.bf16.mxu0 0
      %1115 = vmatpush2.bf16.msra.mxu0 0
      %1116 = vmatprep.mubr.bf16.mxu0 0
      %1117 = vmatmul.mubr.bf16.gmra.mxu0 %v1034
      %v1118 = vpop.f32.mrf.mxu0
      %v1119 = vadd.f32 0.0, %v1118
      %v1120 = vpop.f32.mrf.mxu0
      %v1121 = vpop.f32.mrf.mxu0
      %v1122 = vadd.f32 0.0, %v1121
      %v1123 = vpop.f32.mrf.mxu0
      %1124 = vmatprep.mubr.bf16.mxu0 0
      %1125 = vmatmul.mubr.bf16.gmra.mxu0 %v1037
      %v1126 = vpop.f32.mrf.mxu0
      %v1127 = vadd.f32 0.0, %v1126
      %v1128 = vpop.f32.mrf.mxu0
      %v1129 = vpop.f32.mrf.mxu0
      %v1130 = vadd.f32 0.0, %v1129
      %v1131 = vpop.f32.mrf.mxu0
      %1132 = vmatprep.mubr.bf16.mxu0 0
      %1133 = vmatmul.mubr.bf16.gmra.mxu0 %v1040
      %v1134 = vpop.f32.mrf.mxu0
      %v1135 = vadd.f32 0.0, %v1134
      %v1136 = vpop.f32.mrf.mxu0
      %v1137 = vpop.f32.mrf.mxu0
      %v1138 = vadd.f32 0.0, %v1137
      %v1139 = vpop.f32.mrf.mxu0
      %1140 = vmatprep.mubr.bf16.mxu0 0
      %1141 = vmatmul.mubr.bf16.gmra.mxu0 %v1043
      %v1142 = vpop.f32.mrf.mxu0
      %v1143 = vadd.f32 0.0, %v1142
      %v1144 = vpop.f32.mrf.mxu0
      %v1145 = vpop.f32.mrf.mxu0
      %v1146 = vadd.f32 0.0, %v1145
      %v1147 = vpop.f32.mrf.mxu0
      %1148 = vmatprep.mubr.bf16.mxu0 0
      %1149 = vmatmul.mubr.bf16.gmra.mxu0 %v1046
      %v1150 = vpop.f32.mrf.mxu0
      %v1151 = vadd.f32 0.0, %v1150
      %v1152 = vpop.f32.mrf.mxu0
      %v1153 = vpop.f32.mrf.mxu0
      %v1154 = vadd.f32 0.0, %v1153
      %v1155 = vpop.f32.mrf.mxu0
      %1156 = vmatprep.mubr.bf16.mxu0 0
      %1157 = vmatmul.mubr.bf16.gmra.mxu0 %v1049
      %v1158 = vpop.f32.mrf.mxu0
      %v1159 = vadd.f32 0.0, %v1158
      %v1160 = vpop.f32.mrf.mxu0
      %v1161 = vpop.f32.mrf.mxu0
      %v1162 = vadd.f32 0.0, %v1161
      %v1163 = vpop.f32.mrf.mxu0
      %1164 = vmatprep.mubr.bf16.mxu0 0
      %1165 = vmatmul.mubr.bf16.gmra.mxu0 %v1052
      %v1166 = vpop.f32.mrf.mxu0
      %v1167 = vadd.f32 0.0, %v1166
      %v1168 = vpop.f32.mrf.mxu0
      %v1169 = vpop.f32.mrf.mxu0
      %v1170 = vadd.f32 0.0, %v1169
      %v1171 = vpop.f32.mrf.mxu0
      %1172 = vmatprep.mubr.bf16.mxu0 0
      %1173 = vmatmul.mubr.bf16.gmra.mxu0 %v1055
      %v1174 = vpop.f32.mrf.mxu0
      %v1175 = vadd.f32 0.0, %v1174
      %v1176 = vpop.f32.mrf.mxu0
      %v1177 = vpop.f32.mrf.mxu0
      %v1178 = vadd.f32 0.0, %v1177
      %v1179 = vpop.f32.mrf.mxu0
      %1180 = vmatprep.mubr.bf16.mxu0 0
      %1181 = vmatmul.mubr.bf16.gmra.mxu0 %v1058
      %v1182 = vpop.f32.mrf.mxu0
      %v1183 = vadd.f32 0.0, %v1182
      %v1184 = vpop.f32.mrf.mxu0
      %v1185 = vpop.f32.mrf.mxu0
      %v1186 = vadd.f32 0.0, %v1185
      %v1187 = vpop.f32.mrf.mxu0
      %1188 = vmatprep.mubr.bf16.mxu0 0
      %1189 = vmatmul.mubr.bf16.gmra.mxu0 %v1061
      %v1190 = vpop.f32.mrf.mxu0
      %v1191 = vadd.f32 0.0, %v1190
      %v1192 = vpop.f32.mrf.mxu0
      %v1193 = vpop.f32.mrf.mxu0
      %v1194 = vadd.f32 0.0, %v1193
      %v1195 = vpop.f32.mrf.mxu0
      %1196 = vmatprep.mubr.bf16.mxu0 0
      %1197 = vmatmul.mubr.bf16.gmra.mxu0 %v1064
      %v1198 = vpop.f32.mrf.mxu0
      %v1199 = vadd.f32 0.0, %v1198
      %v1200 = vpop.f32.mrf.mxu0
      %v1201 = vpop.f32.mrf.mxu0
      %v1202 = vadd.f32 0.0, %v1201
      %v1203 = vpop.f32.mrf.mxu0
      %1204 = vmatprep.mubr.bf16.mxu0 0
      %1205 = vmatmul.mubr.bf16.gmra.mxu0 %v1067
      %v1206 = vpop.f32.mrf.mxu0
      %v1207 = vadd.f32 0.0, %v1206
      %v1208 = vpop.f32.mrf.mxu0
      %v1209 = vpop.f32.mrf.mxu0
      %v1210 = vadd.f32 0.0, %v1209
      %v1211 = vpop.f32.mrf.mxu0
      %1212 = vmatprep.mubr.bf16.mxu0 0
      %1213 = vmatmul.mubr.bf16.gmra.mxu0 %v1070
      %v1214 = vpop.f32.mrf.mxu0
      %v1215 = vadd.f32 0.0, %v1214
      %v1216 = vpop.f32.mrf.mxu0
      %v1217 = vpop.f32.mrf.mxu0
      %v1218 = vadd.f32 0.0, %v1217
      %v1219 = vpop.f32.mrf.mxu0
      %1220 = vmatprep.mubr.bf16.mxu0 0
      %1221 = vmatmul.mubr.bf16.gmra.mxu0 %v1073
      %v1222 = vpop.f32.mrf.mxu0
      %v1223 = vadd.f32 0.0, %v1222
      %v1224 = vpop.f32.mrf.mxu0
      %v1225 = vpop.f32.mrf.mxu0
      %v1226 = vadd.f32 0.0, %v1225
      %v1227 = vpop.f32.mrf.mxu0
      %1228 = vmatprep.mubr.bf16.mxu0 0
      %1229 = vmatmul.mubr.bf16.gmra.mxu0 %v1076
      %v1230 = vpop.f32.mrf.mxu0
      %v1231 = vadd.f32 0.0, %v1230
      %v1232 = vpop.f32.mrf.mxu0
      %v1233 = vpop.f32.mrf.mxu0
      %v1234 = vadd.f32 0.0, %v1233
      %v1235 = vpop.f32.mrf.mxu0
      %1236 = vmatprep.mubr.bf16.mxu0 0
      %1237 = vmatmul.mubr.bf16.gmra.mxu0 %v1079
      %v1238 = vpop.f32.mrf.mxu0
      %v1239 = vadd.f32 0.0, %v1238
      %v1240 = vpop.f32.mrf.mxu0
      %v1241 = vpop.f32.mrf.mxu0
      %v1242 = vadd.f32 0.0, %v1241
      %v1243 = vpop.f32.mrf.mxu0
      %1244 = vdwg.mxu0
      %v1245 = vadd.f32 %v776, %v1119
      %v1246 = vadd.f32 %v779, %v1122
      %v1247 = vadd.f32 %v784, %v1127
      %v1248 = vadd.f32 %v787, %v1130
      %v1249 = vadd.f32 %v792, %v1135
      %v1250 = vadd.f32 %v795, %v1138
      %v1251 = vadd.f32 %v800, %v1143
      %v1252 = vadd.f32 %v803, %v1146
      %v1253 = vadd.f32 %v808, %v1151
      %v1254 = vadd.f32 %v811, %v1154
      %v1255 = vadd.f32 %v816, %v1159
      %v1256 = vadd.f32 %v819, %v1162
      %v1257 = vadd.f32 %v824, %v1167
      %v1258 = vadd.f32 %v827, %v1170
      %v1259 = vadd.f32 %v832, %v1175
      %v1260 = vadd.f32 %v835, %v1178
      %v1261 = vadd.f32 %v840, %v1183
      %v1262 = vadd.f32 %v843, %v1186
      %v1263 = vadd.f32 %v848, %v1191
      %v1264 = vadd.f32 %v851, %v1194
      %v1265 = vadd.f32 %v856, %v1199
      %v1266 = vadd.f32 %v859, %v1202
      %v1267 = vadd.f32 %v864, %v1207
      %v1268 = vadd.f32 %v867, %v1210
      %v1269 = vadd.f32 %v872, %v1215
      %v1270 = vadd.f32 %v875, %v1218
      %v1271 = vadd.f32 %v880, %v1223
      %v1272 = vadd.f32 %v883, %v1226
      %v1273 = vadd.f32 %v888, %v1231
      %v1274 = vadd.f32 %v891, %v1234
      %v1275 = vadd.f32 %v896, %v1239
      %v1276 = vadd.f32 %v899, %v1242
      %v1277 = vpack.c.bf16 %v275, %v274
      %s1278 = scalar_lea.vmem %s1, 12
      %v1279 = vld [vmem:[%s1278] sm:$0xf]
      %v1281 = vsel %vm476, %v1277, 0
      %v1284 = vsel %vm525, %v1279, 0
      %1286 = vmatprep.subr.bf16.mxu0 0
      %1287 = vmatpush1.bf16.msra.mxu0 0
      %1288 = vmatprep.subr.bf16.mxu0 0
      %1289 = vmatpush1.bf16.msra.mxu0 0
      %1290 = vmatprep.subr.bf16.mxu0 0
      %1291 = vmatpush1.bf16.msra.mxu0 0
      %1292 = vmatprep.subr.bf16.mxu0 0
      %1293 = vmatpush1.bf16.msra.mxu0 0
      %1294 = vmatprep.subr.bf16.mxu0 0
      %1295 = vmatpush1.bf16.msra.mxu0 0
      %1296 = vmatprep.subr.bf16.mxu0 0
      %1297 = vmatpush1.bf16.msra.mxu0 0
      %1298 = vmatprep.subr.bf16.mxu0 0
      %1299 = vmatpush1.bf16.msra.mxu0 0
      %1300 = vmatprep.subr.bf16.mxu0 0
      %1301 = vmatpush1.bf16.msra.mxu0 %v1284
      %1302 = vmatprep.subr.bf16.mxu0 0
      %1303 = vmatpush2.bf16.msra.mxu0 0
      %1304 = vmatprep.subr.bf16.mxu0 0
      %1305 = vmatpush2.bf16.msra.mxu0 0
      %1306 = vmatprep.subr.bf16.mxu0 0
      %1307 = vmatpush2.bf16.msra.mxu0 0
      %1308 = vmatprep.subr.bf16.mxu0 0
      %1309 = vmatpush2.bf16.msra.mxu0 0
      %1310 = vmatprep.subr.bf16.mxu0 0
      %1311 = vmatpush2.bf16.msra.mxu0 0
      %1312 = vmatprep.subr.bf16.mxu0 0
      %1313 = vmatpush2.bf16.msra.mxu0 0
      %1314 = vmatprep.subr.bf16.mxu0 0
      %1315 = vmatpush2.bf16.msra.mxu0 0
      %1316 = vmatprep.subr.bf16.mxu0 0
      %1317 = vmatpush2.bf16.msra.mxu0 0
      %1318 = vmatprep.mubr.bf16.mxu0 0
      %1319 = vmatmul.mubr.bf16.gmra.mxu0 %v694
      %v1320 = vpop.f32.mrf.mxu0
      %v1321 = vadd.f32 0.0, %v1320
      %v1322 = vpop.f32.mrf.mxu0
      %v1323 = vpop.f32.mrf.mxu0
      %v1324 = vadd.f32 0.0, %v1323
      %v1325 = vpop.f32.mrf.mxu0
      %1326 = vmatprep.mubr.bf16.mxu0 0
      %1327 = vmatmul.mubr.bf16.gmra.mxu0 %v697
      %v1328 = vpop.f32.mrf.mxu0
      %v1329 = vadd.f32 0.0, %v1328
      %v1330 = vpop.f32.mrf.mxu0
      %v1331 = vpop.f32.mrf.mxu0
      %v1332 = vadd.f32 0.0, %v1331
      %v1333 = vpop.f32.mrf.mxu0
      %1334 = vmatprep.mubr.bf16.mxu0 0
      %1335 = vmatmul.mubr.bf16.gmra.mxu0 %v700
      %v1336 = vpop.f32.mrf.mxu0
      %v1337 = vadd.f32 0.0, %v1336
      %v1338 = vpop.f32.mrf.mxu0
      %v1339 = vpop.f32.mrf.mxu0
      %v1340 = vadd.f32 0.0, %v1339
      %v1341 = vpop.f32.mrf.mxu0
      %1342 = vmatprep.mubr.bf16.mxu0 0
      %1343 = vmatmul.mubr.bf16.gmra.mxu0 %v703
      %v1344 = vpop.f32.mrf.mxu0
      %v1345 = vadd.f32 0.0, %v1344
      %v1346 = vpop.f32.mrf.mxu0
      %v1347 = vpop.f32.mrf.mxu0
      %v1348 = vadd.f32 0.0, %v1347
      %v1349 = vpop.f32.mrf.mxu0
      %1350 = vmatprep.mubr.bf16.mxu0 0
      %1351 = vmatmul.mubr.bf16.gmra.mxu0 %v706
      %v1352 = vpop.f32.mrf.mxu0
      %v1353 = vadd.f32 0.0, %v1352
      %v1354 = vpop.f32.mrf.mxu0
      %v1355 = vpop.f32.mrf.mxu0
      %v1356 = vadd.f32 0.0, %v1355
      %v1357 = vpop.f32.mrf.mxu0
      %1358 = vmatprep.mubr.bf16.mxu0 0
      %1359 = vmatmul.mubr.bf16.gmra.mxu0 %v709
      %v1360 = vpop.f32.mrf.mxu0
      %v1361 = vadd.f32 0.0, %v1360
      %v1362 = vpop.f32.mrf.mxu0
      %v1363 = vpop.f32.mrf.mxu0
      %v1364 = vadd.f32 0.0, %v1363
      %v1365 = vpop.f32.mrf.mxu0
      %1366 = vmatprep.mubr.bf16.mxu0 0
      %1367 = vmatmul.mubr.bf16.gmra.mxu0 %v712
      %v1368 = vpop.f32.mrf.mxu0
      %v1369 = vadd.f32 0.0, %v1368
      %v1370 = vpop.f32.mrf.mxu0
      %v1371 = vpop.f32.mrf.mxu0
      %v1372 = vadd.f32 0.0, %v1371
      %v1373 = vpop.f32.mrf.mxu0
      %1374 = vmatprep.mubr.bf16.mxu0 0
      %1375 = vmatmul.mubr.bf16.gmra.mxu0 %v715
      %v1376 = vpop.f32.mrf.mxu0
      %v1377 = vadd.f32 0.0, %v1376
      %v1378 = vpop.f32.mrf.mxu0
      %v1379 = vpop.f32.mrf.mxu0
      %v1380 = vadd.f32 0.0, %v1379
      %v1381 = vpop.f32.mrf.mxu0
      %1382 = vmatprep.mubr.bf16.mxu0 0
      %1383 = vmatmul.mubr.bf16.gmra.mxu0 %v718
      %v1384 = vpop.f32.mrf.mxu0
      %v1385 = vadd.f32 0.0, %v1384
      %v1386 = vpop.f32.mrf.mxu0
      %v1387 = vpop.f32.mrf.mxu0
      %v1388 = vadd.f32 0.0, %v1387
      %v1389 = vpop.f32.mrf.mxu0
      %1390 = vmatprep.mubr.bf16.mxu0 0
      %1391 = vmatmul.mubr.bf16.gmra.mxu0 %v721
      %v1392 = vpop.f32.mrf.mxu0
      %v1393 = vadd.f32 0.0, %v1392
      %v1394 = vpop.f32.mrf.mxu0
      %v1395 = vpop.f32.mrf.mxu0
      %v1396 = vadd.f32 0.0, %v1395
      %v1397 = vpop.f32.mrf.mxu0
      %1398 = vmatprep.mubr.bf16.mxu0 0
      %1399 = vmatmul.mubr.bf16.gmra.mxu0 %v724
      %v1400 = vpop.f32.mrf.mxu0
      %v1401 = vadd.f32 0.0, %v1400
      %v1402 = vpop.f32.mrf.mxu0
      %v1403 = vpop.f32.mrf.mxu0
      %v1404 = vadd.f32 0.0, %v1403
      %v1405 = vpop.f32.mrf.mxu0
      %1406 = vmatprep.mubr.bf16.mxu0 0
      %1407 = vmatmul.mubr.bf16.gmra.mxu0 %v727
      %v1408 = vpop.f32.mrf.mxu0
      %v1409 = vadd.f32 0.0, %v1408
      %v1410 = vpop.f32.mrf.mxu0
      %v1411 = vpop.f32.mrf.mxu0
      %v1412 = vadd.f32 0.0, %v1411
      %v1413 = vpop.f32.mrf.mxu0
      %1414 = vmatprep.mubr.bf16.mxu0 0
      %1415 = vmatmul.mubr.bf16.gmra.mxu0 %v730
      %v1416 = vpop.f32.mrf.mxu0
      %v1417 = vadd.f32 0.0, %v1416
      %v1418 = vpop.f32.mrf.mxu0
      %v1419 = vpop.f32.mrf.mxu0
      %v1420 = vadd.f32 0.0, %v1419
      %v1421 = vpop.f32.mrf.mxu0
      %1422 = vmatprep.mubr.bf16.mxu0 0
      %1423 = vmatmul.mubr.bf16.gmra.mxu0 %v733
      %v1424 = vpop.f32.mrf.mxu0
      %v1425 = vadd.f32 0.0, %v1424
      %v1426 = vpop.f32.mrf.mxu0
      %v1427 = vpop.f32.mrf.mxu0
      %v1428 = vadd.f32 0.0, %v1427
      %v1429 = vpop.f32.mrf.mxu0
      %1430 = vmatprep.mubr.bf16.mxu0 0
      %1431 = vmatmul.mubr.bf16.gmra.mxu0 %v736
      %v1432 = vpop.f32.mrf.mxu0
      %v1433 = vadd.f32 0.0, %v1432
      %v1434 = vpop.f32.mrf.mxu0
      %v1435 = vpop.f32.mrf.mxu0
      %v1436 = vadd.f32 0.0, %v1435
      %v1437 = vpop.f32.mrf.mxu0
      %1438 = vmatprep.mubr.bf16.mxu0 0
      %1439 = vmatmul.mubr.bf16.gmra.mxu0 %v1281
      %v1440 = vpop.f32.mrf.mxu0
      %v1441 = vadd.f32 0.0, %v1440
      %v1442 = vpop.f32.mrf.mxu0
      %v1443 = vpop.f32.mrf.mxu0
      %v1444 = vadd.f32 0.0, %v1443
      %v1445 = vpop.f32.mrf.mxu0
      %1446 = vdwg.mxu0
      %v1447 = vadd.f32 %v1245, %v1321
      %v1448 = vadd.f32 %v1246, %v1324
      %v1449 = vadd.f32 %v1247, %v1329
      %v1450 = vadd.f32 %v1248, %v1332
      %v1451 = vadd.f32 %v1249, %v1337
      %v1452 = vadd.f32 %v1250, %v1340
      %v1453 = vadd.f32 %v1251, %v1345
      %v1454 = vadd.f32 %v1252, %v1348
      %v1455 = vadd.f32 %v1253, %v1353
      %v1456 = vadd.f32 %v1254, %v1356
      %v1457 = vadd.f32 %v1255, %v1361
      %v1458 = vadd.f32 %v1256, %v1364
      %v1459 = vadd.f32 %v1257, %v1369
      %v1460 = vadd.f32 %v1258, %v1372
      %v1461 = vadd.f32 %v1259, %v1377
      %v1462 = vadd.f32 %v1260, %v1380
      %v1463 = vadd.f32 %v1261, %v1385
      %v1464 = vadd.f32 %v1262, %v1388
      %v1465 = vadd.f32 %v1263, %v1393
      %v1466 = vadd.f32 %v1264, %v1396
      %v1467 = vadd.f32 %v1265, %v1401
      %v1468 = vadd.f32 %v1266, %v1404
      %v1469 = vadd.f32 %v1267, %v1409
      %v1470 = vadd.f32 %v1268, %v1412
      %v1471 = vadd.f32 %v1269, %v1417
      %v1472 = vadd.f32 %v1270, %v1420
      %v1473 = vadd.f32 %v1271, %v1425
      %v1474 = vadd.f32 %v1272, %v1428
      %v1475 = vadd.f32 %v1273, %v1433
      %v1476 = vadd.f32 %v1274, %v1436
      %v1477 = vadd.f32 %v1275, %v1441
      %v1478 = vadd.f32 %v1276, %v1444
      %v1482 = vrot.slane %v274, 1
      %v1483 = vrot.slane %v275, 1
      %v1484 = vsel %vm345, %v1482, %v1483
      %v1485 = vrot.slane %v276, 1
      %v1486 = vsel %vm345, %v1483, %v1485
      %v1489 = vpack.c.bf16 %v1486, %v1484
      %s1490 = scalar_lea.vmem %s1, 16
      %v1491 = vld [vmem:[%s1490] sm:$0xf]
      %v1493 = vsel %vm476, %v1489, 0
      %v1496 = vsel %vm525, %v1491, 0
      %1498 = vmatprep.subr.bf16.mxu0 0
      %1499 = vmatpush1.bf16.msra.mxu0 0
      %1500 = vmatprep.subr.bf16.mxu0 0
      %1501 = vmatpush1.bf16.msra.mxu0 0
      %1502 = vmatprep.subr.bf16.mxu0 0
      %1503 = vmatpush1.bf16.msra.mxu0 0
      %1504 = vmatprep.subr.bf16.mxu0 0
      %1505 = vmatpush1.bf16.msra.mxu0 0
      %1506 = vmatprep.subr.bf16.mxu0 0
      %1507 = vmatpush1.bf16.msra.mxu0 0
      %1508 = vmatprep.subr.bf16.mxu0 0
      %1509 = vmatpush1.bf16.msra.mxu0 0
      %1510 = vmatprep.subr.bf16.mxu0 0
      %1511 = vmatpush1.bf16.msra.mxu0 0
      %1512 = vmatprep.subr.bf16.mxu0 0
      %1513 = vmatpush1.bf16.msra.mxu0 %v1496
      %1514 = vmatprep.subr.bf16.mxu0 0
      %1515 = vmatpush2.bf16.msra.mxu0 0
      %1516 = vmatprep.subr.bf16.mxu0 0
      %1517 = vmatpush2.bf16.msra.mxu0 0
      %1518 = vmatprep.subr.bf16.mxu0 0
      %1519 = vmatpush2.bf16.msra.mxu0 0
      %1520 = vmatprep.subr.bf16.mxu0 0
      %1521 = vmatpush2.bf16.msra.mxu0 0
      %1522 = vmatprep.subr.bf16.mxu0 0
      %1523 = vmatpush2.bf16.msra.mxu0 0
      %1524 = vmatprep.subr.bf16.mxu0 0
      %1525 = vmatpush2.bf16.msra.mxu0 0
      %1526 = vmatprep.subr.bf16.mxu0 0
      %1527 = vmatpush2.bf16.msra.mxu0 0
      %1528 = vmatprep.subr.bf16.mxu0 0
      %1529 = vmatpush2.bf16.msra.mxu0 0
      %1530 = vmatprep.mubr.bf16.mxu0 0
      %1531 = vmatmul.mubr.bf16.gmra.mxu0 %v481
      %v1532 = vpop.f32.mrf.mxu0
      %v1533 = vadd.f32 0.0, %v1532
      %v1534 = vpop.f32.mrf.mxu0
      %v1535 = vpop.f32.mrf.mxu0
      %v1536 = vadd.f32 0.0, %v1535
      %v1537 = vpop.f32.mrf.mxu0
      %1538 = vmatprep.mubr.bf16.mxu0 0
      %1539 = vmatmul.mubr.bf16.gmra.mxu0 %v484
      %v1540 = vpop.f32.mrf.mxu0
      %v1541 = vadd.f32 0.0, %v1540
      %v1542 = vpop.f32.mrf.mxu0
      %v1543 = vpop.f32.mrf.mxu0
      %v1544 = vadd.f32 0.0, %v1543
      %v1545 = vpop.f32.mrf.mxu0
      %1546 = vmatprep.mubr.bf16.mxu0 0
      %1547 = vmatmul.mubr.bf16.gmra.mxu0 %v487
      %v1548 = vpop.f32.mrf.mxu0
      %v1549 = vadd.f32 0.0, %v1548
      %v1550 = vpop.f32.mrf.mxu0
      %v1551 = vpop.f32.mrf.mxu0
      %v1552 = vadd.f32 0.0, %v1551
      %v1553 = vpop.f32.mrf.mxu0
      %1554 = vmatprep.mubr.bf16.mxu0 0
      %1555 = vmatmul.mubr.bf16.gmra.mxu0 %v490
      %v1556 = vpop.f32.mrf.mxu0
      %v1557 = vadd.f32 0.0, %v1556
      %v1558 = vpop.f32.mrf.mxu0
      %v1559 = vpop.f32.mrf.mxu0
      %v1560 = vadd.f32 0.0, %v1559
      %v1561 = vpop.f32.mrf.mxu0
      %1562 = vmatprep.mubr.bf16.mxu0 0
      %1563 = vmatmul.mubr.bf16.gmra.mxu0 %v493
      %v1564 = vpop.f32.mrf.mxu0
      %v1565 = vadd.f32 0.0, %v1564
      %v1566 = vpop.f32.mrf.mxu0
      %v1567 = vpop.f32.mrf.mxu0
      %v1568 = vadd.f32 0.0, %v1567
      %v1569 = vpop.f32.mrf.mxu0
      %1570 = vmatprep.mubr.bf16.mxu0 0
      %1571 = vmatmul.mubr.bf16.gmra.mxu0 %v496
      %v1572 = vpop.f32.mrf.mxu0
      %v1573 = vadd.f32 0.0, %v1572
      %v1574 = vpop.f32.mrf.mxu0
      %v1575 = vpop.f32.mrf.mxu0
      %v1576 = vadd.f32 0.0, %v1575
      %v1577 = vpop.f32.mrf.mxu0
      %1578 = vmatprep.mubr.bf16.mxu0 0
      %1579 = vmatmul.mubr.bf16.gmra.mxu0 %v499
      %v1580 = vpop.f32.mrf.mxu0
      %v1581 = vadd.f32 0.0, %v1580
      %v1582 = vpop.f32.mrf.mxu0
      %v1583 = vpop.f32.mrf.mxu0
      %v1584 = vadd.f32 0.0, %v1583
      %v1585 = vpop.f32.mrf.mxu0
      %1586 = vmatprep.mubr.bf16.mxu0 0
      %1587 = vmatmul.mubr.bf16.gmra.mxu0 %v502
      %v1588 = vpop.f32.mrf.mxu0
      %v1589 = vadd.f32 0.0, %v1588
      %v1590 = vpop.f32.mrf.mxu0
      %v1591 = vpop.f32.mrf.mxu0
      %v1592 = vadd.f32 0.0, %v1591
      %v1593 = vpop.f32.mrf.mxu0
      %1594 = vmatprep.mubr.bf16.mxu0 0
      %1595 = vmatmul.mubr.bf16.gmra.mxu0 %v505
      %v1596 = vpop.f32.mrf.mxu0
      %v1597 = vadd.f32 0.0, %v1596
      %v1598 = vpop.f32.mrf.mxu0
      %v1599 = vpop.f32.mrf.mxu0
      %v1600 = vadd.f32 0.0, %v1599
      %v1601 = vpop.f32.mrf.mxu0
      %1602 = vmatprep.mubr.bf16.mxu0 0
      %1603 = vmatmul.mubr.bf16.gmra.mxu0 %v508
      %v1604 = vpop.f32.mrf.mxu0
      %v1605 = vadd.f32 0.0, %v1604
      %v1606 = vpop.f32.mrf.mxu0
      %v1607 = vpop.f32.mrf.mxu0
      %v1608 = vadd.f32 0.0, %v1607
      %v1609 = vpop.f32.mrf.mxu0
      %1610 = vmatprep.mubr.bf16.mxu0 0
      %1611 = vmatmul.mubr.bf16.gmra.mxu0 %v511
      %v1612 = vpop.f32.mrf.mxu0
      %v1613 = vadd.f32 0.0, %v1612
      %v1614 = vpop.f32.mrf.mxu0
      %v1615 = vpop.f32.mrf.mxu0
      %v1616 = vadd.f32 0.0, %v1615
      %v1617 = vpop.f32.mrf.mxu0
      %1618 = vmatprep.mubr.bf16.mxu0 0
      %1619 = vmatmul.mubr.bf16.gmra.mxu0 %v514
      %v1620 = vpop.f32.mrf.mxu0
      %v1621 = vadd.f32 0.0, %v1620
      %v1622 = vpop.f32.mrf.mxu0
      %v1623 = vpop.f32.mrf.mxu0
      %v1624 = vadd.f32 0.0, %v1623
      %v1625 = vpop.f32.mrf.mxu0
      %1626 = vmatprep.mubr.bf16.mxu0 0
      %1627 = vmatmul.mubr.bf16.gmra.mxu0 %v517
      %v1628 = vpop.f32.mrf.mxu0
      %v1629 = vadd.f32 0.0, %v1628
      %v1630 = vpop.f32.mrf.mxu0
      %v1631 = vpop.f32.mrf.mxu0
      %v1632 = vadd.f32 0.0, %v1631
      %v1633 = vpop.f32.mrf.mxu0
      %1634 = vmatprep.mubr.bf16.mxu0 0
      %1635 = vmatmul.mubr.bf16.gmra.mxu0 %v520
      %v1636 = vpop.f32.mrf.mxu0
      %v1637 = vadd.f32 0.0, %v1636
      %v1638 = vpop.f32.mrf.mxu0
      %v1639 = vpop.f32.mrf.mxu0
      %v1640 = vadd.f32 0.0, %v1639
      %v1641 = vpop.f32.mrf.mxu0
      %1642 = vmatprep.mubr.bf16.mxu0 0
      %1643 = vmatmul.mubr.bf16.gmra.mxu0 %v523
      %v1644 = vpop.f32.mrf.mxu0
      %v1645 = vadd.f32 0.0, %v1644
      %v1646 = vpop.f32.mrf.mxu0
      %v1647 = vpop.f32.mrf.mxu0
      %v1648 = vadd.f32 0.0, %v1647
      %v1649 = vpop.f32.mrf.mxu0
      %1650 = vmatprep.mubr.bf16.mxu0 0
      %1651 = vmatmul.mubr.bf16.gmra.mxu0 %v1493
      %v1652 = vpop.f32.mrf.mxu0
      %v1653 = vadd.f32 0.0, %v1652
      %v1654 = vpop.f32.mrf.mxu0
      %v1655 = vpop.f32.mrf.mxu0
      %v1656 = vadd.f32 0.0, %v1655
      %v1657 = vpop.f32.mrf.mxu0
      %1658 = vdwg.mxu0
      %v1659 = vadd.f32 %v1447, %v1533
      %v1660 = vadd.f32 %v1448, %v1536
      %v1661 = vadd.f32 %v1449, %v1541
      %v1662 = vadd.f32 %v1450, %v1544
      %v1663 = vadd.f32 %v1451, %v1549
      %v1664 = vadd.f32 %v1452, %v1552
      %v1665 = vadd.f32 %v1453, %v1557
      %v1666 = vadd.f32 %v1454, %v1560
      %v1667 = vadd.f32 %v1455, %v1565
      %v1668 = vadd.f32 %v1456, %v1568
      %v1669 = vadd.f32 %v1457, %v1573
      %v1670 = vadd.f32 %v1458, %v1576
      %v1671 = vadd.f32 %v1459, %v1581
      %v1672 = vadd.f32 %v1460, %v1584
      %v1673 = vadd.f32 %v1461, %v1589
      %v1674 = vadd.f32 %v1462, %v1592
      %v1675 = vadd.f32 %v1463, %v1597
      %v1676 = vadd.f32 %v1464, %v1600
      %v1677 = vadd.f32 %v1465, %v1605
      %v1678 = vadd.f32 %v1466, %v1608
      %v1679 = vadd.f32 %v1467, %v1613
      %v1680 = vadd.f32 %v1468, %v1616
      %v1681 = vadd.f32 %v1469, %v1621
      %v1682 = vadd.f32 %v1470, %v1624
      %v1683 = vadd.f32 %v1471, %v1629
      %v1684 = vadd.f32 %v1472, %v1632
      %v1685 = vadd.f32 %v1473, %v1637
      %v1686 = vadd.f32 %v1474, %v1640
      %v1687 = vadd.f32 %v1475, %v1645
      %v1688 = vadd.f32 %v1476, %v1648
      %v1689 = vadd.f32 %v1477, %v1653
      %v1690 = vadd.f32 %v1478, %v1656
      %v1691 = vrot.slane %v274, 2
      %v1692 = vrot.slane %v275, 2
      %v1693 = vsel %vm902, %v1691, %v1692
      %v1694 = vrot.slane %v276, 2
      %v1695 = vsel %vm902, %v1692, %v1694
      %v1698 = vpack.c.bf16 %v1695, %v1693
      %s1699 = scalar_lea.vmem %s1, 20
      %v1700 = vld [vmem:[%s1699] sm:$0xf]
      %v1702 = vsel %vm476, %v1698, 0
      %v1705 = vsel %vm525, %v1700, 0
      %1707 = vmatprep.subr.bf16.mxu0 0
      %1708 = vmatpush1.bf16.msra.mxu0 0
      %1709 = vmatprep.subr.bf16.mxu0 0
      %1710 = vmatpush1.bf16.msra.mxu0 0
      %1711 = vmatprep.subr.bf16.mxu0 0
      %1712 = vmatpush1.bf16.msra.mxu0 0
      %1713 = vmatprep.subr.bf16.mxu0 0
      %1714 = vmatpush1.bf16.msra.mxu0 0
      %1715 = vmatprep.subr.bf16.mxu0 0
      %1716 = vmatpush1.bf16.msra.mxu0 0
      %1717 = vmatprep.subr.bf16.mxu0 0
      %1718 = vmatpush1.bf16.msra.mxu0 0
      %1719 = vmatprep.subr.bf16.mxu0 0
      %1720 = vmatpush1.bf16.msra.mxu0 0
      %1721 = vmatprep.subr.bf16.mxu0 0
      %1722 = vmatpush1.bf16.msra.mxu0 %v1705
      %1723 = vmatprep.subr.bf16.mxu0 0
      %1724 = vmatpush2.bf16.msra.mxu0 0
      %1725 = vmatprep.subr.bf16.mxu0 0
      %1726 = vmatpush2.bf16.msra.mxu0 0
      %1727 = vmatprep.subr.bf16.mxu0 0
      %1728 = vmatpush2.bf16.msra.mxu0 0
      %1729 = vmatprep.subr.bf16.mxu0 0
      %1730 = vmatpush2.bf16.msra.mxu0 0
      %1731 = vmatprep.subr.bf16.mxu0 0
      %1732 = vmatpush2.bf16.msra.mxu0 0
      %1733 = vmatprep.subr.bf16.mxu0 0
      %1734 = vmatpush2.bf16.msra.mxu0 0
      %1735 = vmatprep.subr.bf16.mxu0 0
      %1736 = vmatpush2.bf16.msra.mxu0 0
      %1737 = vmatprep.subr.bf16.mxu0 0
      %1738 = vmatpush2.bf16.msra.mxu0 0
      %1739 = vmatprep.mubr.bf16.mxu0 0
      %1740 = vmatmul.mubr.bf16.gmra.mxu0 %v1037
      %v1741 = vpop.f32.mrf.mxu0
      %v1742 = vadd.f32 0.0, %v1741
      %v1743 = vpop.f32.mrf.mxu0
      %v1744 = vpop.f32.mrf.mxu0
      %v1745 = vadd.f32 0.0, %v1744
      %v1746 = vpop.f32.mrf.mxu0
      %1747 = vmatprep.mubr.bf16.mxu0 0
      %1748 = vmatmul.mubr.bf16.gmra.mxu0 %v1040
      %v1749 = vpop.f32.mrf.mxu0
      %v1750 = vadd.f32 0.0, %v1749
      %v1751 = vpop.f32.mrf.mxu0
      %v1752 = vpop.f32.mrf.mxu0
      %v1753 = vadd.f32 0.0, %v1752
      %v1754 = vpop.f32.mrf.mxu0
      %1755 = vmatprep.mubr.bf16.mxu0 0
      %1756 = vmatmul.mubr.bf16.gmra.mxu0 %v1043
      %v1757 = vpop.f32.mrf.mxu0
      %v1758 = vadd.f32 0.0, %v1757
      %v1759 = vpop.f32.mrf.mxu0
      %v1760 = vpop.f32.mrf.mxu0
      %v1761 = vadd.f32 0.0, %v1760
      %v1762 = vpop.f32.mrf.mxu0
      %1763 = vmatprep.mubr.bf16.mxu0 0
      %1764 = vmatmul.mubr.bf16.gmra.mxu0 %v1046
      %v1765 = vpop.f32.mrf.mxu0
      %v1766 = vadd.f32 0.0, %v1765
      %v1767 = vpop.f32.mrf.mxu0
      %v1768 = vpop.f32.mrf.mxu0
      %v1769 = vadd.f32 0.0, %v1768
      %v1770 = vpop.f32.mrf.mxu0
      %1771 = vmatprep.mubr.bf16.mxu0 0
      %1772 = vmatmul.mubr.bf16.gmra.mxu0 %v1049
      %v1773 = vpop.f32.mrf.mxu0
      %v1774 = vadd.f32 0.0, %v1773
      %v1775 = vpop.f32.mrf.mxu0
      %v1776 = vpop.f32.mrf.mxu0
      %v1777 = vadd.f32 0.0, %v1776
      %v1778 = vpop.f32.mrf.mxu0
      %1779 = vmatprep.mubr.bf16.mxu0 0
      %1780 = vmatmul.mubr.bf16.gmra.mxu0 %v1052
      %v1781 = vpop.f32.mrf.mxu0
      %v1782 = vadd.f32 0.0, %v1781
      %v1783 = vpop.f32.mrf.mxu0
      %v1784 = vpop.f32.mrf.mxu0
      %v1785 = vadd.f32 0.0, %v1784
      %v1786 = vpop.f32.mrf.mxu0
      %1787 = vmatprep.mubr.bf16.mxu0 0
      %1788 = vmatmul.mubr.bf16.gmra.mxu0 %v1055
      %v1789 = vpop.f32.mrf.mxu0
      %v1790 = vadd.f32 0.0, %v1789
      %v1791 = vpop.f32.mrf.mxu0
      %v1792 = vpop.f32.mrf.mxu0
      %v1793 = vadd.f32 0.0, %v1792
      %v1794 = vpop.f32.mrf.mxu0
      %1795 = vmatprep.mubr.bf16.mxu0 0
      %1796 = vmatmul.mubr.bf16.gmra.mxu0 %v1058
      %v1797 = vpop.f32.mrf.mxu0
      %v1798 = vadd.f32 0.0, %v1797
      %v1799 = vpop.f32.mrf.mxu0
      %v1800 = vpop.f32.mrf.mxu0
      %v1801 = vadd.f32 0.0, %v1800
      %v1802 = vpop.f32.mrf.mxu0
      %1803 = vmatprep.mubr.bf16.mxu0 0
      %1804 = vmatmul.mubr.bf16.gmra.mxu0 %v1061
      %v1805 = vpop.f32.mrf.mxu0
      %v1806 = vadd.f32 0.0, %v1805
      %v1807 = vpop.f32.mrf.mxu0
      %v1808 = vpop.f32.mrf.mxu0
      %v1809 = vadd.f32 0.0, %v1808
      %v1810 = vpop.f32.mrf.mxu0
      %1811 = vmatprep.mubr.bf16.mxu0 0
      %1812 = vmatmul.mubr.bf16.gmra.mxu0 %v1064
      %v1813 = vpop.f32.mrf.mxu0
      %v1814 = vadd.f32 0.0, %v1813
      %v1815 = vpop.f32.mrf.mxu0
      %v1816 = vpop.f32.mrf.mxu0
      %v1817 = vadd.f32 0.0, %v1816
      %v1818 = vpop.f32.mrf.mxu0
      %1819 = vmatprep.mubr.bf16.mxu0 0
      %1820 = vmatmul.mubr.bf16.gmra.mxu0 %v1067
      %v1821 = vpop.f32.mrf.mxu0
      %v1822 = vadd.f32 0.0, %v1821
      %v1823 = vpop.f32.mrf.mxu0
      %v1824 = vpop.f32.mrf.mxu0
      %v1825 = vadd.f32 0.0, %v1824
      %v1826 = vpop.f32.mrf.mxu0
      %1827 = vmatprep.mubr.bf16.mxu0 0
      %1828 = vmatmul.mubr.bf16.gmra.mxu0 %v1070
      %v1829 = vpop.f32.mrf.mxu0
      %v1830 = vadd.f32 0.0, %v1829
      %v1831 = vpop.f32.mrf.mxu0
      %v1832 = vpop.f32.mrf.mxu0
      %v1833 = vadd.f32 0.0, %v1832
      %v1834 = vpop.f32.mrf.mxu0
      %1835 = vmatprep.mubr.bf16.mxu0 0
      %1836 = vmatmul.mubr.bf16.gmra.mxu0 %v1073
      %v1837 = vpop.f32.mrf.mxu0
      %v1838 = vadd.f32 0.0, %v1837
      %v1839 = vpop.f32.mrf.mxu0
      %v1840 = vpop.f32.mrf.mxu0
      %v1841 = vadd.f32 0.0, %v1840
      %v1842 = vpop.f32.mrf.mxu0
      %1843 = vmatprep.mubr.bf16.mxu0 0
      %1844 = vmatmul.mubr.bf16.gmra.mxu0 %v1076
      %v1845 = vpop.f32.mrf.mxu0
      %v1846 = vadd.f32 0.0, %v1845
      %v1847 = vpop.f32.mrf.mxu0
      %v1848 = vpop.f32.mrf.mxu0
      %v1849 = vadd.f32 0.0, %v1848
      %v1850 = vpop.f32.mrf.mxu0
      %1851 = vmatprep.mubr.bf16.mxu0 0
      %1852 = vmatmul.mubr.bf16.gmra.mxu0 %v1079
      %v1853 = vpop.f32.mrf.mxu0
      %v1854 = vadd.f32 0.0, %v1853
      %v1855 = vpop.f32.mrf.mxu0
      %v1856 = vpop.f32.mrf.mxu0
      %v1857 = vadd.f32 0.0, %v1856
      %v1858 = vpop.f32.mrf.mxu0
      %1859 = vmatprep.mubr.bf16.mxu0 0
      %1860 = vmatmul.mubr.bf16.gmra.mxu0 %v1702
      %v1861 = vpop.f32.mrf.mxu0
      %v1862 = vadd.f32 0.0, %v1861
      %v1863 = vpop.f32.mrf.mxu0
      %v1864 = vpop.f32.mrf.mxu0
      %v1865 = vadd.f32 0.0, %v1864
      %v1866 = vpop.f32.mrf.mxu0
      %1867 = vdwg.mxu0
      %v1868 = vadd.f32 %v1659, %v1742
      %v1869 = vadd.f32 %v1660, %v1745
      %v1870 = vadd.f32 %v1661, %v1750
      %v1871 = vadd.f32 %v1662, %v1753
      %v1872 = vadd.f32 %v1663, %v1758
      %v1873 = vadd.f32 %v1664, %v1761
      %v1874 = vadd.f32 %v1665, %v1766
      %v1875 = vadd.f32 %v1666, %v1769
      %v1876 = vadd.f32 %v1667, %v1774
      %v1877 = vadd.f32 %v1668, %v1777
      %v1878 = vadd.f32 %v1669, %v1782
      %v1879 = vadd.f32 %v1670, %v1785
      %v1880 = vadd.f32 %v1671, %v1790
      %v1881 = vadd.f32 %v1672, %v1793
      %v1882 = vadd.f32 %v1673, %v1798
      %v1883 = vadd.f32 %v1674, %v1801
      %v1884 = vadd.f32 %v1675, %v1806
      %v1885 = vadd.f32 %v1676, %v1809
      %v1886 = vadd.f32 %v1677, %v1814
      %v1887 = vadd.f32 %v1678, %v1817
      %v1888 = vadd.f32 %v1679, %v1822
      %v1889 = vadd.f32 %v1680, %v1825
      %v1890 = vadd.f32 %v1681, %v1830
      %v1891 = vadd.f32 %v1682, %v1833
      %v1892 = vadd.f32 %v1683, %v1838
      %v1893 = vadd.f32 %v1684, %v1841
      %v1894 = vadd.f32 %v1685, %v1846
      %v1895 = vadd.f32 %v1686, %v1849
      %v1896 = vadd.f32 %v1687, %v1854
      %v1897 = vadd.f32 %v1688, %v1857
      %v1898 = vadd.f32 %v1689, %v1862
      %v1899 = vadd.f32 %v1690, %v1865
      %v1900 = vpack.c.bf16 %v278, %v277
      %s1901 = scalar_lea.vmem %s1, 24
      %v1902 = vld [vmem:[%s1901] sm:$0xf]
      %v1904 = vsel %vm476, %v1900, 0
      %v1907 = vsel %vm525, %v1902, 0
      %1909 = vmatprep.subr.bf16.mxu0 0
      %1910 = vmatpush1.bf16.msra.mxu0 0
      %1911 = vmatprep.subr.bf16.mxu0 0
      %1912 = vmatpush1.bf16.msra.mxu0 0
      %1913 = vmatprep.subr.bf16.mxu0 0
      %1914 = vmatpush1.bf16.msra.mxu0 0
      %1915 = vmatprep.subr.bf16.mxu0 0
      %1916 = vmatpush1.bf16.msra.mxu0 0
      %1917 = vmatprep.subr.bf16.mxu0 0
      %1918 = vmatpush1.bf16.msra.mxu0 0
      %1919 = vmatprep.subr.bf16.mxu0 0
      %1920 = vmatpush1.bf16.msra.mxu0 0
      %1921 = vmatprep.subr.bf16.mxu0 0
      %1922 = vmatpush1.bf16.msra.mxu0 0
      %1923 = vmatprep.subr.bf16.mxu0 0
      %1924 = vmatpush1.bf16.msra.mxu0 %v1907
      %1925 = vmatprep.subr.bf16.mxu0 0
      %1926 = vmatpush2.bf16.msra.mxu0 0
      %1927 = vmatprep.subr.bf16.mxu0 0
      %1928 = vmatpush2.bf16.msra.mxu0 0
      %1929 = vmatprep.subr.bf16.mxu0 0
      %1930 = vmatpush2.bf16.msra.mxu0 0
      %1931 = vmatprep.subr.bf16.mxu0 0
      %1932 = vmatpush2.bf16.msra.mxu0 0
      %1933 = vmatprep.subr.bf16.mxu0 0
      %1934 = vmatpush2.bf16.msra.mxu0 0
      %1935 = vmatprep.subr.bf16.mxu0 0
      %1936 = vmatpush2.bf16.msra.mxu0 0
      %1937 = vmatprep.subr.bf16.mxu0 0
      %1938 = vmatpush2.bf16.msra.mxu0 0
      %1939 = vmatprep.subr.bf16.mxu0 0
      %1940 = vmatpush2.bf16.msra.mxu0 0
      %1941 = vmatprep.mubr.bf16.mxu0 0
      %1942 = vmatmul.mubr.bf16.gmra.mxu0 %v697
      %v1943 = vpop.f32.mrf.mxu0
      %v1944 = vadd.f32 0.0, %v1943
      %v1945 = vpop.f32.mrf.mxu0
      %v1946 = vpop.f32.mrf.mxu0
      %v1947 = vadd.f32 0.0, %v1946
      %v1948 = vpop.f32.mrf.mxu0
      %1949 = vmatprep.mubr.bf16.mxu0 0
      %1950 = vmatmul.mubr.bf16.gmra.mxu0 %v700
      %v1951 = vpop.f32.mrf.mxu0
      %v1952 = vadd.f32 0.0, %v1951
      %v1953 = vpop.f32.mrf.mxu0
      %v1954 = vpop.f32.mrf.mxu0
      %v1955 = vadd.f32 0.0, %v1954
      %v1956 = vpop.f32.mrf.mxu0
      %1957 = vmatprep.mubr.bf16.mxu0 0
      %1958 = vmatmul.mubr.bf16.gmra.mxu0 %v703
      %v1959 = vpop.f32.mrf.mxu0
      %v1960 = vadd.f32 0.0, %v1959
      %v1961 = vpop.f32.mrf.mxu0
      %v1962 = vpop.f32.mrf.mxu0
      %v1963 = vadd.f32 0.0, %v1962
      %v1964 = vpop.f32.mrf.mxu0
      %1965 = vmatprep.mubr.bf16.mxu0 0
      %1966 = vmatmul.mubr.bf16.gmra.mxu0 %v706
      %v1967 = vpop.f32.mrf.mxu0
      %v1968 = vadd.f32 0.0, %v1967
      %v1969 = vpop.f32.mrf.mxu0
      %v1970 = vpop.f32.mrf.mxu0
      %v1971 = vadd.f32 0.0, %v1970
      %v1972 = vpop.f32.mrf.mxu0
      %1973 = vmatprep.mubr.bf16.mxu0 0
      %1974 = vmatmul.mubr.bf16.gmra.mxu0 %v709
      %v1975 = vpop.f32.mrf.mxu0
      %v1976 = vadd.f32 0.0, %v1975
      %v1977 = vpop.f32.mrf.mxu0
      %v1978 = vpop.f32.mrf.mxu0
      %v1979 = vadd.f32 0.0, %v1978
      %v1980 = vpop.f32.mrf.mxu0
      %1981 = vmatprep.mubr.bf16.mxu0 0
      %1982 = vmatmul.mubr.bf16.gmra.mxu0 %v712
      %v1983 = vpop.f32.mrf.mxu0
      %v1984 = vadd.f32 0.0, %v1983
      %v1985 = vpop.f32.mrf.mxu0
      %v1986 = vpop.f32.mrf.mxu0
      %v1987 = vadd.f32 0.0, %v1986
      %v1988 = vpop.f32.mrf.mxu0
      %1989 = vmatprep.mubr.bf16.mxu0 0
      %1990 = vmatmul.mubr.bf16.gmra.mxu0 %v715
      %v1991 = vpop.f32.mrf.mxu0
      %v1992 = vadd.f32 0.0, %v1991
      %v1993 = vpop.f32.mrf.mxu0
      %v1994 = vpop.f32.mrf.mxu0
      %v1995 = vadd.f32 0.0, %v1994
      %v1996 = vpop.f32.mrf.mxu0
      %1997 = vmatprep.mubr.bf16.mxu0 0
      %1998 = vmatmul.mubr.bf16.gmra.mxu0 %v718
      %v1999 = vpop.f32.mrf.mxu0
      %v2000 = vadd.f32 0.0, %v1999
      %v2001 = vpop.f32.mrf.mxu0
      %v2002 = vpop.f32.mrf.mxu0
      %v2003 = vadd.f32 0.0, %v2002
      %v2004 = vpop.f32.mrf.mxu0
      %2005 = vmatprep.mubr.bf16.mxu0 0
      %2006 = vmatmul.mubr.bf16.gmra.mxu0 %v721
      %v2007 = vpop.f32.mrf.mxu0
      %v2008 = vadd.f32 0.0, %v2007
      %v2009 = vpop.f32.mrf.mxu0
      %v2010 = vpop.f32.mrf.mxu0
      %v2011 = vadd.f32 0.0, %v2010
      %v2012 = vpop.f32.mrf.mxu0
      %2013 = vmatprep.mubr.bf16.mxu0 0
      %2014 = vmatmul.mubr.bf16.gmra.mxu0 %v724
      %v2015 = vpop.f32.mrf.mxu0
      %v2016 = vadd.f32 0.0, %v2015
      %v2017 = vpop.f32.mrf.mxu0
      %v2018 = vpop.f32.mrf.mxu0
      %v2019 = vadd.f32 0.0, %v2018
      %v2020 = vpop.f32.mrf.mxu0
      %2021 = vmatprep.mubr.bf16.mxu0 0
      %2022 = vmatmul.mubr.bf16.gmra.mxu0 %v727
      %v2023 = vpop.f32.mrf.mxu0
      %v2024 = vadd.f32 0.0, %v2023
      %v2025 = vpop.f32.mrf.mxu0
      %v2026 = vpop.f32.mrf.mxu0
      %v2027 = vadd.f32 0.0, %v2026
      %v2028 = vpop.f32.mrf.mxu0
      %2029 = vmatprep.mubr.bf16.mxu0 0
      %2030 = vmatmul.mubr.bf16.gmra.mxu0 %v730
      %v2031 = vpop.f32.mrf.mxu0
      %v2032 = vadd.f32 0.0, %v2031
      %v2033 = vpop.f32.mrf.mxu0
      %v2034 = vpop.f32.mrf.mxu0
      %v2035 = vadd.f32 0.0, %v2034
      %v2036 = vpop.f32.mrf.mxu0
      %2037 = vmatprep.mubr.bf16.mxu0 0
      %2038 = vmatmul.mubr.bf16.gmra.mxu0 %v733
      %v2039 = vpop.f32.mrf.mxu0
      %v2040 = vadd.f32 0.0, %v2039
      %v2041 = vpop.f32.mrf.mxu0
      %v2042 = vpop.f32.mrf.mxu0
      %v2043 = vadd.f32 0.0, %v2042
      %v2044 = vpop.f32.mrf.mxu0
      %2045 = vmatprep.mubr.bf16.mxu0 0
      %2046 = vmatmul.mubr.bf16.gmra.mxu0 %v736
      %v2047 = vpop.f32.mrf.mxu0
      %v2048 = vadd.f32 0.0, %v2047
      %v2049 = vpop.f32.mrf.mxu0
      %v2050 = vpop.f32.mrf.mxu0
      %v2051 = vadd.f32 0.0, %v2050
      %v2052 = vpop.f32.mrf.mxu0
      %2053 = vmatprep.mubr.bf16.mxu0 0
      %2054 = vmatmul.mubr.bf16.gmra.mxu0 %v1281
      %v2055 = vpop.f32.mrf.mxu0
      %v2056 = vadd.f32 0.0, %v2055
      %v2057 = vpop.f32.mrf.mxu0
      %v2058 = vpop.f32.mrf.mxu0
      %v2059 = vadd.f32 0.0, %v2058
      %v2060 = vpop.f32.mrf.mxu0
      %2061 = vmatprep.mubr.bf16.mxu0 0
      %2062 = vmatmul.mubr.bf16.gmra.mxu0 %v1904
      %v2063 = vpop.f32.mrf.mxu0
      %v2064 = vadd.f32 0.0, %v2063
      %v2065 = vpop.f32.mrf.mxu0
      %v2066 = vpop.f32.mrf.mxu0
      %v2067 = vadd.f32 0.0, %v2066
      %v2068 = vpop.f32.mrf.mxu0
      %2069 = vdwg.mxu0
      %v2070 = vadd.f32 %v1868, %v1944
      %v2071 = vadd.f32 %v1869, %v1947
      %v2072 = vadd.f32 %v1870, %v1952
      %v2073 = vadd.f32 %v1871, %v1955
      %v2074 = vadd.f32 %v1872, %v1960
      %v2075 = vadd.f32 %v1873, %v1963
      %v2076 = vadd.f32 %v1874, %v1968
      %v2077 = vadd.f32 %v1875, %v1971
      %v2078 = vadd.f32 %v1876, %v1976
      %v2079 = vadd.f32 %v1877, %v1979
      %v2080 = vadd.f32 %v1878, %v1984
      %v2081 = vadd.f32 %v1879, %v1987
      %v2082 = vadd.f32 %v1880, %v1992
      %v2083 = vadd.f32 %v1881, %v1995
      %v2084 = vadd.f32 %v1882, %v2000
      %v2085 = vadd.f32 %v1883, %v2003
      %v2086 = vadd.f32 %v1884, %v2008
      %v2087 = vadd.f32 %v1885, %v2011
      %v2088 = vadd.f32 %v1886, %v2016
      %v2089 = vadd.f32 %v1887, %v2019
      %v2090 = vadd.f32 %v1888, %v2024
      %v2091 = vadd.f32 %v1889, %v2027
      %v2092 = vadd.f32 %v1890, %v2032
      %v2093 = vadd.f32 %v1891, %v2035
      %v2094 = vadd.f32 %v1892, %v2040
      %v2095 = vadd.f32 %v1893, %v2043
      %v2096 = vadd.f32 %v1894, %v2048
      %v2097 = vadd.f32 %v1895, %v2051
      %v2098 = vadd.f32 %v1896, %v2056
      %v2099 = vadd.f32 %v1897, %v2059
      %v2100 = vadd.f32 %v1898, %v2064
      %v2101 = vadd.f32 %v1899, %v2067
      %v2105 = vrot.slane %v277, 1
      %v2106 = vrot.slane %v278, 1
      %v2107 = vsel %vm345, %v2105, %v2106
      %v2108 = vrot.slane %v279, 1
      %v2109 = vsel %vm345, %v2106, %v2108
      %v2112 = vpack.c.bf16 %v2109, %v2107
      %s2113 = scalar_lea.vmem %s1, 28
      %v2114 = vld [vmem:[%s2113] sm:$0xf]
      %v2116 = vsel %vm476, %v2112, 0
      %v2119 = vsel %vm525, %v2114, 0
      %2121 = vmatprep.subr.bf16.mxu0 0
      %2122 = vmatpush1.bf16.msra.mxu0 0
      %2123 = vmatprep.subr.bf16.mxu0 0
      %2124 = vmatpush1.bf16.msra.mxu0 0
      %2125 = vmatprep.subr.bf16.mxu0 0
      %2126 = vmatpush1.bf16.msra.mxu0 0
      %2127 = vmatprep.subr.bf16.mxu0 0
      %2128 = vmatpush1.bf16.msra.mxu0 0
      %2129 = vmatprep.subr.bf16.mxu0 0
      %2130 = vmatpush1.bf16.msra.mxu0 0
      %2131 = vmatprep.subr.bf16.mxu0 0
      %2132 = vmatpush1.bf16.msra.mxu0 0
      %2133 = vmatprep.subr.bf16.mxu0 0
      %2134 = vmatpush1.bf16.msra.mxu0 0
      %2135 = vmatprep.subr.bf16.mxu0 0
      %2136 = vmatpush1.bf16.msra.mxu0 %v2119
      %2137 = vmatprep.subr.bf16.mxu0 0
      %2138 = vmatpush2.bf16.msra.mxu0 0
      %2139 = vmatprep.subr.bf16.mxu0 0
      %2140 = vmatpush2.bf16.msra.mxu0 0
      %2141 = vmatprep.subr.bf16.mxu0 0
      %2142 = vmatpush2.bf16.msra.mxu0 0
      %2143 = vmatprep.subr.bf16.mxu0 0
      %2144 = vmatpush2.bf16.msra.mxu0 0
      %2145 = vmatprep.subr.bf16.mxu0 0
      %2146 = vmatpush2.bf16.msra.mxu0 0
      %2147 = vmatprep.subr.bf16.mxu0 0
      %2148 = vmatpush2.bf16.msra.mxu0 0
      %2149 = vmatprep.subr.bf16.mxu0 0
      %2150 = vmatpush2.bf16.msra.mxu0 0
      %2151 = vmatprep.subr.bf16.mxu0 0
      %2152 = vmatpush2.bf16.msra.mxu0 0
      %2153 = vmatprep.mubr.bf16.mxu0 0
      %2154 = vmatmul.mubr.bf16.gmra.mxu0 %v484
      %v2155 = vpop.f32.mrf.mxu0
      %v2156 = vadd.f32 0.0, %v2155
      %v2157 = vpop.f32.mrf.mxu0
      %v2158 = vpop.f32.mrf.mxu0
      %v2159 = vadd.f32 0.0, %v2158
      %v2160 = vpop.f32.mrf.mxu0
      %2161 = vmatprep.mubr.bf16.mxu0 0
      %2162 = vmatmul.mubr.bf16.gmra.mxu0 %v487
      %v2163 = vpop.f32.mrf.mxu0
      %v2164 = vadd.f32 0.0, %v2163
      %v2165 = vpop.f32.mrf.mxu0
      %v2166 = vpop.f32.mrf.mxu0
      %v2167 = vadd.f32 0.0, %v2166
      %v2168 = vpop.f32.mrf.mxu0
      %2169 = vmatprep.mubr.bf16.mxu0 0
      %2170 = vmatmul.mubr.bf16.gmra.mxu0 %v490
      %v2171 = vpop.f32.mrf.mxu0
      %v2172 = vadd.f32 0.0, %v2171
      %v2173 = vpop.f32.mrf.mxu0
      %v2174 = vpop.f32.mrf.mxu0
      %v2175 = vadd.f32 0.0, %v2174
      %v2176 = vpop.f32.mrf.mxu0
      %2177 = vmatprep.mubr.bf16.mxu0 0
      %2178 = vmatmul.mubr.bf16.gmra.mxu0 %v493
      %v2179 = vpop.f32.mrf.mxu0
      %v2180 = vadd.f32 0.0, %v2179
      %v2181 = vpop.f32.mrf.mxu0
      %v2182 = vpop.f32.mrf.mxu0
      %v2183 = vadd.f32 0.0, %v2182
      %v2184 = vpop.f32.mrf.mxu0
      %2185 = vmatprep.mubr.bf16.mxu0 0
      %2186 = vmatmul.mubr.bf16.gmra.mxu0 %v496
      %v2187 = vpop.f32.mrf.mxu0
      %v2188 = vadd.f32 0.0, %v2187
      %v2189 = vpop.f32.mrf.mxu0
      %v2190 = vpop.f32.mrf.mxu0
      %v2191 = vadd.f32 0.0, %v2190
      %v2192 = vpop.f32.mrf.mxu0
      %2193 = vmatprep.mubr.bf16.mxu0 0
      %2194 = vmatmul.mubr.bf16.gmra.mxu0 %v499
      %v2195 = vpop.f32.mrf.mxu0
      %v2196 = vadd.f32 0.0, %v2195
      %v2197 = vpop.f32.mrf.mxu0
      %v2198 = vpop.f32.mrf.mxu0
      %v2199 = vadd.f32 0.0, %v2198
      %v2200 = vpop.f32.mrf.mxu0
      %2201 = vmatprep.mubr.bf16.mxu0 0
      %2202 = vmatmul.mubr.bf16.gmra.mxu0 %v502
      %v2203 = vpop.f32.mrf.mxu0
      %v2204 = vadd.f32 0.0, %v2203
      %v2205 = vpop.f32.mrf.mxu0
      %v2206 = vpop.f32.mrf.mxu0
      %v2207 = vadd.f32 0.0, %v2206
      %v2208 = vpop.f32.mrf.mxu0
      %2209 = vmatprep.mubr.bf16.mxu0 0
      %2210 = vmatmul.mubr.bf16.gmra.mxu0 %v505
      %v2211 = vpop.f32.mrf.mxu0
      %v2212 = vadd.f32 0.0, %v2211
      %v2213 = vpop.f32.mrf.mxu0
      %v2214 = vpop.f32.mrf.mxu0
      %v2215 = vadd.f32 0.0, %v2214
      %v2216 = vpop.f32.mrf.mxu0
      %2217 = vmatprep.mubr.bf16.mxu0 0
      %2218 = vmatmul.mubr.bf16.gmra.mxu0 %v508
      %v2219 = vpop.f32.mrf.mxu0
      %v2220 = vadd.f32 0.0, %v2219
      %v2221 = vpop.f32.mrf.mxu0
      %v2222 = vpop.f32.mrf.mxu0
      %v2223 = vadd.f32 0.0, %v2222
      %v2224 = vpop.f32.mrf.mxu0
      %2225 = vmatprep.mubr.bf16.mxu0 0
      %2226 = vmatmul.mubr.bf16.gmra.mxu0 %v511
      %v2227 = vpop.f32.mrf.mxu0
      %v2228 = vadd.f32 0.0, %v2227
      %v2229 = vpop.f32.mrf.mxu0
      %v2230 = vpop.f32.mrf.mxu0
      %v2231 = vadd.f32 0.0, %v2230
      %v2232 = vpop.f32.mrf.mxu0
      %2233 = vmatprep.mubr.bf16.mxu0 0
      %2234 = vmatmul.mubr.bf16.gmra.mxu0 %v514
      %v2235 = vpop.f32.mrf.mxu0
      %v2236 = vadd.f32 0.0, %v2235
      %v2237 = vpop.f32.mrf.mxu0
      %v2238 = vpop.f32.mrf.mxu0
      %v2239 = vadd.f32 0.0, %v2238
      %v2240 = vpop.f32.mrf.mxu0
      %2241 = vmatprep.mubr.bf16.mxu0 0
      %2242 = vmatmul.mubr.bf16.gmra.mxu0 %v517
      %v2243 = vpop.f32.mrf.mxu0
      %v2244 = vadd.f32 0.0, %v2243
      %v2245 = vpop.f32.mrf.mxu0
      %v2246 = vpop.f32.mrf.mxu0
      %v2247 = vadd.f32 0.0, %v2246
      %v2248 = vpop.f32.mrf.mxu0
      %2249 = vmatprep.mubr.bf16.mxu0 0
      %2250 = vmatmul.mubr.bf16.gmra.mxu0 %v520
      %v2251 = vpop.f32.mrf.mxu0
      %v2252 = vadd.f32 0.0, %v2251
      %v2253 = vpop.f32.mrf.mxu0
      %v2254 = vpop.f32.mrf.mxu0
      %v2255 = vadd.f32 0.0, %v2254
      %v2256 = vpop.f32.mrf.mxu0
      %2257 = vmatprep.mubr.bf16.mxu0 0
      %2258 = vmatmul.mubr.bf16.gmra.mxu0 %v523
      %v2259 = vpop.f32.mrf.mxu0
      %v2260 = vadd.f32 0.0, %v2259
      %v2261 = vpop.f32.mrf.mxu0
      %v2262 = vpop.f32.mrf.mxu0
      %v2263 = vadd.f32 0.0, %v2262
      %v2264 = vpop.f32.mrf.mxu0
      %2265 = vmatprep.mubr.bf16.mxu0 0
      %2266 = vmatmul.mubr.bf16.gmra.mxu0 %v1493
      %v2267 = vpop.f32.mrf.mxu0
      %v2268 = vadd.f32 0.0, %v2267
      %v2269 = vpop.f32.mrf.mxu0
      %v2270 = vpop.f32.mrf.mxu0
      %v2271 = vadd.f32 0.0, %v2270
      %v2272 = vpop.f32.mrf.mxu0
      %2273 = vmatprep.mubr.bf16.mxu0 0
      %2274 = vmatmul.mubr.bf16.gmra.mxu0 %v2116
      %v2275 = vpop.f32.mrf.mxu0
      %v2276 = vadd.f32 0.0, %v2275
      %v2277 = vpop.f32.mrf.mxu0
      %v2278 = vpop.f32.mrf.mxu0
      %v2279 = vadd.f32 0.0, %v2278
      %v2280 = vpop.f32.mrf.mxu0
      %2281 = vdwg.mxu0
      %v2282 = vadd.f32 %v2070, %v2156
      %v2283 = vadd.f32 %v2071, %v2159
      %v2284 = vadd.f32 %v2072, %v2164
      %v2285 = vadd.f32 %v2073, %v2167
      %v2286 = vadd.f32 %v2074, %v2172
      %v2287 = vadd.f32 %v2075, %v2175
      %v2288 = vadd.f32 %v2076, %v2180
      %v2289 = vadd.f32 %v2077, %v2183
      %v2290 = vadd.f32 %v2078, %v2188
      %v2291 = vadd.f32 %v2079, %v2191
      %v2292 = vadd.f32 %v2080, %v2196
      %v2293 = vadd.f32 %v2081, %v2199
      %v2294 = vadd.f32 %v2082, %v2204
      %v2295 = vadd.f32 %v2083, %v2207
      %v2296 = vadd.f32 %v2084, %v2212
      %v2297 = vadd.f32 %v2085, %v2215
      %v2298 = vadd.f32 %v2086, %v2220
      %v2299 = vadd.f32 %v2087, %v2223
      %v2300 = vadd.f32 %v2088, %v2228
      %v2301 = vadd.f32 %v2089, %v2231
      %v2302 = vadd.f32 %v2090, %v2236
      %v2303 = vadd.f32 %v2091, %v2239
      %v2304 = vadd.f32 %v2092, %v2244
      %v2305 = vadd.f32 %v2093, %v2247
      %v2306 = vadd.f32 %v2094, %v2252
      %v2307 = vadd.f32 %v2095, %v2255
      %v2308 = vadd.f32 %v2096, %v2260
      %v2309 = vadd.f32 %v2097, %v2263
      %v2310 = vadd.f32 %v2098, %v2268
      %v2311 = vadd.f32 %v2099, %v2271
      %v2312 = vadd.f32 %v2100, %v2276
      %v2313 = vadd.f32 %v2101, %v2279
      %v2314 = vrot.slane %v277, 2
      %v2315 = vrot.slane %v278, 2
      %v2316 = vsel %vm902, %v2314, %v2315
      %v2317 = vrot.slane %v279, 2
      %v2318 = vsel %vm902, %v2315, %v2317
      %v2321 = vpack.c.bf16 %v2318, %v2316
      %s2322 = scalar_lea.vmem %s1, 32
      %v2323 = vld [vmem:[%s2322] sm:$0xf]
      %v2325 = vsel %vm476, %v2321, 0
      %v2328 = vsel %vm525, %v2323, 0
      %2330 = vmatprep.subr.bf16.mxu0 0
      %2331 = vmatpush1.bf16.msra.mxu0 0
      %2332 = vmatprep.subr.bf16.mxu0 0
      %2333 = vmatpush1.bf16.msra.mxu0 0
      %2334 = vmatprep.subr.bf16.mxu0 0
      %2335 = vmatpush1.bf16.msra.mxu0 0
      %2336 = vmatprep.subr.bf16.mxu0 0
      %2337 = vmatpush1.bf16.msra.mxu0 0
      %2338 = vmatprep.subr.bf16.mxu0 0
      %2339 = vmatpush1.bf16.msra.mxu0 0
      %2340 = vmatprep.subr.bf16.mxu0 0
      %2341 = vmatpush1.bf16.msra.mxu0 0
      %2342 = vmatprep.subr.bf16.mxu0 0
      %2343 = vmatpush1.bf16.msra.mxu0 0
      %2344 = vmatprep.subr.bf16.mxu0 0
      %2345 = vmatpush1.bf16.msra.mxu0 %v2328
      %2346 = vmatprep.subr.bf16.mxu0 0
      %2347 = vmatpush2.bf16.msra.mxu0 0
      %2348 = vmatprep.subr.bf16.mxu0 0
      %2349 = vmatpush2.bf16.msra.mxu0 0
      %2350 = vmatprep.subr.bf16.mxu0 0
      %2351 = vmatpush2.bf16.msra.mxu0 0
      %2352 = vmatprep.subr.bf16.mxu0 0
      %2353 = vmatpush2.bf16.msra.mxu0 0
      %2354 = vmatprep.subr.bf16.mxu0 0
      %2355 = vmatpush2.bf16.msra.mxu0 0
      %2356 = vmatprep.subr.bf16.mxu0 0
      %2357 = vmatpush2.bf16.msra.mxu0 0
      %2358 = vmatprep.subr.bf16.mxu0 0
      %2359 = vmatpush2.bf16.msra.mxu0 0
      %2360 = vmatprep.subr.bf16.mxu0 0
      %2361 = vmatpush2.bf16.msra.mxu0 0
      %2362 = vmatprep.mubr.bf16.mxu0 0
      %2363 = vmatmul.mubr.bf16.gmra.mxu0 %v1040
      %v2364 = vpop.f32.mrf.mxu0
      %v2365 = vadd.f32 0.0, %v2364
      %v2366 = vpop.f32.mrf.mxu0
      %v2367 = vpop.f32.mrf.mxu0
      %v2368 = vadd.f32 0.0, %v2367
      %v2369 = vpop.f32.mrf.mxu0
      %2370 = vmatprep.mubr.bf16.mxu0 0
      %2371 = vmatmul.mubr.bf16.gmra.mxu0 %v1043
      %v2372 = vpop.f32.mrf.mxu0
      %v2373 = vadd.f32 0.0, %v2372
      %v2374 = vpop.f32.mrf.mxu0
      %v2375 = vpop.f32.mrf.mxu0
      %v2376 = vadd.f32 0.0, %v2375
      %v2377 = vpop.f32.mrf.mxu0
      %2378 = vmatprep.mubr.bf16.mxu0 0
      %2379 = vmatmul.mubr.bf16.gmra.mxu0 %v1046
      %v2380 = vpop.f32.mrf.mxu0
      %v2381 = vadd.f32 0.0, %v2380
      %v2382 = vpop.f32.mrf.mxu0
      %v2383 = vpop.f32.mrf.mxu0
      %v2384 = vadd.f32 0.0, %v2383
      %v2385 = vpop.f32.mrf.mxu0
      %2386 = vmatprep.mubr.bf16.mxu0 0
      %2387 = vmatmul.mubr.bf16.gmra.mxu0 %v1049
      %v2388 = vpop.f32.mrf.mxu0
      %v2389 = vadd.f32 0.0, %v2388
      %v2390 = vpop.f32.mrf.mxu0
      %v2391 = vpop.f32.mrf.mxu0
      %v2392 = vadd.f32 0.0, %v2391
      %v2393 = vpop.f32.mrf.mxu0
      %2394 = vmatprep.mubr.bf16.mxu0 0
      %2395 = vmatmul.mubr.bf16.gmra.mxu0 %v1052
      %v2396 = vpop.f32.mrf.mxu0
      %v2397 = vadd.f32 0.0, %v2396
      %v2398 = vpop.f32.mrf.mxu0
      %v2399 = vpop.f32.mrf.mxu0
      %v2400 = vadd.f32 0.0, %v2399
      %v2401 = vpop.f32.mrf.mxu0
      %2402 = vmatprep.mubr.bf16.mxu0 0
      %2403 = vmatmul.mubr.bf16.gmra.mxu0 %v1055
      %v2404 = vpop.f32.mrf.mxu0
      %v2405 = vadd.f32 0.0, %v2404
      %v2406 = vpop.f32.mrf.mxu0
      %v2407 = vpop.f32.mrf.mxu0
      %v2408 = vadd.f32 0.0, %v2407
      %v2409 = vpop.f32.mrf.mxu0
      %2410 = vmatprep.mubr.bf16.mxu0 0
      %2411 = vmatmul.mubr.bf16.gmra.mxu0 %v1058
      %v2412 = vpop.f32.mrf.mxu0
      %v2413 = vadd.f32 0.0, %v2412
      %v2414 = vpop.f32.mrf.mxu0
      %v2415 = vpop.f32.mrf.mxu0
      %v2416 = vadd.f32 0.0, %v2415
      %v2417 = vpop.f32.mrf.mxu0
      %2418 = vmatprep.mubr.bf16.mxu0 0
      %2419 = vmatmul.mubr.bf16.gmra.mxu0 %v1061
      %v2420 = vpop.f32.mrf.mxu0
      %v2421 = vadd.f32 0.0, %v2420
      %v2422 = vpop.f32.mrf.mxu0
      %v2423 = vpop.f32.mrf.mxu0
      %v2424 = vadd.f32 0.0, %v2423
      %v2425 = vpop.f32.mrf.mxu0
      %2426 = vmatprep.mubr.bf16.mxu0 0
      %2427 = vmatmul.mubr.bf16.gmra.mxu0 %v1064
      %v2428 = vpop.f32.mrf.mxu0
      %v2429 = vadd.f32 0.0, %v2428
      %v2430 = vpop.f32.mrf.mxu0
      %v2431 = vpop.f32.mrf.mxu0
      %v2432 = vadd.f32 0.0, %v2431
      %v2433 = vpop.f32.mrf.mxu0
      %2434 = vmatprep.mubr.bf16.mxu0 0
      %2435 = vmatmul.mubr.bf16.gmra.mxu0 %v1067
      %v2436 = vpop.f32.mrf.mxu0
      %v2437 = vadd.f32 0.0, %v2436
      %v2438 = vpop.f32.mrf.mxu0
      %v2439 = vpop.f32.mrf.mxu0
      %v2440 = vadd.f32 0.0, %v2439
      %v2441 = vpop.f32.mrf.mxu0
      %2442 = vmatprep.mubr.bf16.mxu0 0
      %2443 = vmatmul.mubr.bf16.gmra.mxu0 %v1070
      %v2444 = vpop.f32.mrf.mxu0
      %v2445 = vadd.f32 0.0, %v2444
      %v2446 = vpop.f32.mrf.mxu0
      %v2447 = vpop.f32.mrf.mxu0
      %v2448 = vadd.f32 0.0, %v2447
      %v2449 = vpop.f32.mrf.mxu0
      %2450 = vmatprep.mubr.bf16.mxu0 0
      %2451 = vmatmul.mubr.bf16.gmra.mxu0 %v1073
      %v2452 = vpop.f32.mrf.mxu0
      %v2453 = vadd.f32 0.0, %v2452
      %v2454 = vpop.f32.mrf.mxu0
      %v2455 = vpop.f32.mrf.mxu0
      %v2456 = vadd.f32 0.0, %v2455
      %v2457 = vpop.f32.mrf.mxu0
      %2458 = vmatprep.mubr.bf16.mxu0 0
      %2459 = vmatmul.mubr.bf16.gmra.mxu0 %v1076
      %v2460 = vpop.f32.mrf.mxu0
      %v2461 = vadd.f32 0.0, %v2460
      %v2462 = vpop.f32.mrf.mxu0
      %v2463 = vpop.f32.mrf.mxu0
      %v2464 = vadd.f32 0.0, %v2463
      %v2465 = vpop.f32.mrf.mxu0
      %2466 = vmatprep.mubr.bf16.mxu0 0
      %2467 = vmatmul.mubr.bf16.gmra.mxu0 %v1079
      %v2468 = vpop.f32.mrf.mxu0
      %v2469 = vadd.f32 0.0, %v2468
      %v2470 = vpop.f32.mrf.mxu0
      %v2471 = vpop.f32.mrf.mxu0
      %v2472 = vadd.f32 0.0, %v2471
      %v2473 = vpop.f32.mrf.mxu0
      %2474 = vmatprep.mubr.bf16.mxu0 0
      %2475 = vmatmul.mubr.bf16.gmra.mxu0 %v1702
      %v2476 = vpop.f32.mrf.mxu0
      %v2477 = vadd.f32 0.0, %v2476
      %v2478 = vpop.f32.mrf.mxu0
      %v2479 = vpop.f32.mrf.mxu0
      %v2480 = vadd.f32 0.0, %v2479
      %v2481 = vpop.f32.mrf.mxu0
      %2482 = vmatprep.mubr.bf16.mxu0 0
      %2483 = vmatmul.mubr.bf16.gmra.mxu0 %v2325
      %v2484 = vpop.f32.mrf.mxu0
      %v2485 = vadd.f32 0.0, %v2484
      %v2486 = vpop.f32.mrf.mxu0
      %v2487 = vpop.f32.mrf.mxu0
      %v2488 = vadd.f32 0.0, %v2487
      %v2489 = vpop.f32.mrf.mxu0
      %2490 = vdwg.mxu0
      %v2491 = vadd.f32 %v2282, %v2365
      %v2492 = vadd.f32 %v2283, %v2368
      %v2493 = vadd.f32 %v2284, %v2373
      %v2494 = vadd.f32 %v2285, %v2376
      %v2495 = vadd.f32 %v2286, %v2381
      %v2496 = vadd.f32 %v2287, %v2384
      %v2497 = vadd.f32 %v2288, %v2389
      %v2498 = vadd.f32 %v2289, %v2392
      %v2499 = vadd.f32 %v2290, %v2397
      %v2500 = vadd.f32 %v2291, %v2400
      %v2501 = vadd.f32 %v2292, %v2405
      %v2502 = vadd.f32 %v2293, %v2408
      %v2503 = vadd.f32 %v2294, %v2413
      %v2504 = vadd.f32 %v2295, %v2416
      %v2505 = vadd.f32 %v2296, %v2421
      %v2506 = vadd.f32 %v2297, %v2424
      %v2507 = vadd.f32 %v2298, %v2429
      %v2508 = vadd.f32 %v2299, %v2432
      %v2509 = vadd.f32 %v2300, %v2437
      %v2510 = vadd.f32 %v2301, %v2440
      %v2511 = vadd.f32 %v2302, %v2445
      %v2512 = vadd.f32 %v2303, %v2448
      %v2513 = vadd.f32 %v2304, %v2453
      %v2514 = vadd.f32 %v2305, %v2456
      %v2515 = vadd.f32 %v2306, %v2461
      %v2516 = vadd.f32 %v2307, %v2464
      %v2517 = vadd.f32 %v2308, %v2469
      %v2518 = vadd.f32 %v2309, %v2472
      %v2519 = vadd.f32 %v2310, %v2477
      %v2520 = vadd.f32 %v2311, %v2480
      %v2521 = vadd.f32 %v2312, %v2485
      %v2522 = vadd.f32 %v2313, %v2488
      %v2523 = vld [vmem:[%s2] sm:$0x1]
      %v2525 = vlaneseq
      %v2526 = vshrl.u32 %v2525, 7
      %v2527 = vsub.s32 0, %v2526
      %v2528 = vrot.slane %v2523, %v2527
      %v2530 = vadd.f32 %v2491, %v2528
      %v2531 = vadd.f32 %v2492, %v2528
      %v2532 = vadd.f32 %v2493, %v2528
      %v2533 = vadd.f32 %v2494, %v2528
      %v2534 = vadd.f32 %v2495, %v2528
      %v2535 = vadd.f32 %v2496, %v2528
      %v2536 = vadd.f32 %v2497, %v2528
      %v2537 = vadd.f32 %v2498, %v2528
      %v2538 = vadd.f32 %v2499, %v2528
      %v2539 = vadd.f32 %v2500, %v2528
      %v2540 = vadd.f32 %v2501, %v2528
      %v2541 = vadd.f32 %v2502, %v2528
      %v2542 = vadd.f32 %v2503, %v2528
      %v2543 = vadd.f32 %v2504, %v2528
      %v2544 = vadd.f32 %v2505, %v2528
      %v2545 = vadd.f32 %v2506, %v2528
      %v2546 = vadd.f32 %v2507, %v2528
      %v2547 = vadd.f32 %v2508, %v2528
      %v2548 = vadd.f32 %v2509, %v2528
      %v2549 = vadd.f32 %v2510, %v2528
      %v2550 = vadd.f32 %v2511, %v2528
      %v2551 = vadd.f32 %v2512, %v2528
      %v2552 = vadd.f32 %v2513, %v2528
      %v2553 = vadd.f32 %v2514, %v2528
      %v2554 = vadd.f32 %v2515, %v2528
      %v2555 = vadd.f32 %v2516, %v2528
      %v2556 = vadd.f32 %v2517, %v2528
      %v2557 = vadd.f32 %v2518, %v2528
      %v2558 = vadd.f32 %v2519, %v2528
      %v2559 = vadd.f32 %v2520, %v2528
      %v2560 = vadd.f32 %v2521, %v2528
      %v2561 = vadd.f32 %v2522, %v2528
      %v2562 = vmax.f32 %v2530, 0.0
      %v2563 = vmax.f32 %v2531, 0.0
      %v2564 = vmax.f32 %v2532, 0.0
      %v2565 = vmax.f32 %v2533, 0.0
      %v2566 = vmax.f32 %v2534, 0.0
      %v2567 = vmax.f32 %v2535, 0.0
      %v2568 = vmax.f32 %v2536, 0.0
      %v2569 = vmax.f32 %v2537, 0.0
      %v2570 = vmax.f32 %v2538, 0.0
      %v2571 = vmax.f32 %v2539, 0.0
      %v2572 = vmax.f32 %v2540, 0.0
      %v2573 = vmax.f32 %v2541, 0.0
      %v2574 = vmax.f32 %v2542, 0.0
      %v2575 = vmax.f32 %v2543, 0.0
      %v2576 = vmax.f32 %v2544, 0.0
      %v2577 = vmax.f32 %v2545, 0.0
      %v2578 = vmax.f32 %v2546, 0.0
      %v2579 = vmax.f32 %v2547, 0.0
      %v2580 = vmax.f32 %v2548, 0.0
      %v2581 = vmax.f32 %v2549, 0.0
      %v2582 = vmax.f32 %v2550, 0.0
      %v2583 = vmax.f32 %v2551, 0.0
      %v2584 = vmax.f32 %v2552, 0.0
      %v2585 = vmax.f32 %v2553, 0.0
      %v2586 = vmax.f32 %v2554, 0.0
      %v2587 = vmax.f32 %v2555, 0.0
      %v2588 = vmax.f32 %v2556, 0.0
      %v2589 = vmax.f32 %v2557, 0.0
      %v2590 = vmax.f32 %v2558, 0.0
      %v2591 = vmax.f32 %v2559, 0.0
      %v2592 = vmax.f32 %v2560, 0.0
      %v2593 = vmax.f32 %v2561, 0.0
      %2594 = vst.msk [vmem:[#allocation2] sm:$0xff] %vm476, 0.0
      %2595 = vst.msk [vmem:[#allocation2 + $0x8] sm:$0xff] %vm476, 0.0
      %2596 = vst.msk [vmem:[#allocation2 + $0x10] sm:$0xff] %vm476, 0.0
      %2597 = vst.msk [vmem:[#allocation2 + $0x18] sm:$0xff] %vm476, 0.0
      %2598 = vst.msk [vmem:[#allocation2 + $0x20] sm:$0xff] %vm476, 0.0
      %2599 = vst.msk [vmem:[#allocation2 + $0x28] sm:$0xff] %vm476, 0.0
      %2600 = vst.msk [vmem:[#allocation2 + $0x30] sm:$0xff] %vm476, 0.0
      %2601 = vst.msk [vmem:[#allocation2 + $0x38] sm:$0xff] %vm476, 0.0
      %2602 = vst.msk [vmem:[#allocation2 + $0x40] sm:$0xff] %vm476, 0.0
      %2603 = vst.msk [vmem:[#allocation2 + $0x48] sm:$0xff] %vm476, 0.0
      %2604 = vst.msk [vmem:[#allocation2 + $0x50] sm:$0xff] %vm476, 0.0
      %2605 = vst.msk [vmem:[#allocation2 + $0x58] sm:$0xff] %vm476, 0.0
      %2606 = vst.msk [vmem:[#allocation2 + $0x60] sm:$0xff] %vm476, 0.0
      %2607 = vst.msk [vmem:[#allocation2 + $0x68] sm:$0xff] %vm476, 0.0
      %2608 = vst.msk [vmem:[#allocation2 + $0x70] sm:$0xff] %vm476, 0.0
      %2609 = vst.msk [vmem:[#allocation2 + $0x78] sm:$0xff] %vm476, 0.0
      %2610 = vst.msk [vmem:[#allocation2 + $0x80] sm:$0xff] %vm476, 0.0
      %2611 = vst.msk [vmem:[#allocation2 + $0x88] sm:$0xff] %vm476, 0.0
      %2612 = vst.msk [vmem:[#allocation2 + $0x90] sm:$0xff] %vm476, 0.0
      %2613 = vst.msk [vmem:[#allocation2 + $0x98] sm:$0xff] %vm476, 0.0
      %2614 = vst.msk [vmem:[#allocation2 + $0xa0] sm:$0xff] %vm476, 0.0
      %2615 = vst.msk [vmem:[#allocation2 + $0xa8] sm:$0xff] %vm476, 0.0
      %2616 = vst.msk [vmem:[#allocation2 + $0xb0] sm:$0xff] %vm476, 0.0
      %2617 = vst.msk [vmem:[#allocation2 + $0xb8] sm:$0xff] %vm476, 0.0
      %2618 = vst.msk [vmem:[#allocation2 + $0xc0] sm:$0xff] %vm476, 0.0
      %2619 = vst.msk [vmem:[#allocation2 + $0xc8] sm:$0xff] %vm476, 0.0
      %2620 = vst.msk [vmem:[#allocation2 + $0xd0] sm:$0xff] %vm476, 0.0
      %2621 = vst.msk [vmem:[#allocation2 + $0xd8] sm:$0xff] %vm476, 0.0
      %2622 = vst.msk [vmem:[#allocation2 + $0xe0] sm:$0xff] %vm476, 0.0
      %2623 = vst.msk [vmem:[#allocation2 + $0xe8] sm:$0xff] %vm476, 0.0
      %2624 = vst.msk [vmem:[#allocation2 + $0xf0] sm:$0xff] %vm476, 0.0
      %2625 = vst.msk [vmem:[#allocation2 + $0xf8] sm:$0xff] %vm476, 0.0
      %2626 = vst.msk [vmem:[#allocation2 + $0x100] sm:$0xff] %vm476, 0.0
      %2627 = vst.msk [vmem:[#allocation2 + $0x108] sm:$0xff] %vm476, 0.0
      %2628 = vst.msk [vmem:[#allocation2 + $0x110] sm:$0xff] %vm476, 0.0
      %2629 = vst.msk [vmem:[#allocation2 + $0x118] sm:$0xff] %vm476, 0.0
      %2630 = vst.msk [vmem:[#allocation2 + $0x120] sm:$0xff] %vm476, 0.0
      %2631 = vst.msk [vmem:[#allocation2 + $0x128] sm:$0xff] %vm476, 0.0
      %2632 = vst.msk [vmem:[#allocation2 + $0x130] sm:$0xff] %vm476, 0.0
      %2633 = vst.msk [vmem:[#allocation2 + $0x138] sm:$0xff] %vm476, 0.0
      %2634 = vst.msk [vmem:[#allocation2 + $0x140] sm:$0xff] %vm476, 0.0
      %2635 = vst.msk [vmem:[#allocation2 + $0x148] sm:$0xff] %vm476, 0.0
      %2636 = vst.msk [vmem:[#allocation2 + $0x150] sm:$0xff] %vm476, 0.0
      %2637 = vst.msk [vmem:[#allocation2 + $0x158] sm:$0xff] %vm476, 0.0
      %2638 = vst.msk [vmem:[#allocation2 + $0x160] sm:$0xff] %vm476, 0.0
      %2639 = vst.msk [vmem:[#allocation2 + $0x168] sm:$0xff] %vm476, 0.0
      %2640 = vst.msk [vmem:[#allocation2 + $0x170] sm:$0xff] %vm476, 0.0
      %2641 = vst.msk [vmem:[#allocation2 + $0x178] sm:$0xff] %vm476, 0.0
      %2642 = vst.msk [vmem:[#allocation2 + $0x180] sm:$0xff] %vm476, 0.0
      %2643 = vst.msk [vmem:[#allocation2 + $0x188] sm:$0xff] %vm476, 0.0
      %2644 = vst.msk [vmem:[#allocation2 + $0x190] sm:$0xff] %vm476, 0.0
      %2645 = vst.msk [vmem:[#allocation2 + $0x198] sm:$0xff] %vm476, 0.0
      %2646 = vst.msk [vmem:[#allocation2 + $0x1a0] sm:$0xff] %vm476, 0.0
      %2647 = vst.msk [vmem:[#allocation2 + $0x1a8] sm:$0xff] %vm476, 0.0
      %2648 = vst.msk [vmem:[#allocation2 + $0x1b0] sm:$0xff] %vm476, 0.0
      %2649 = vst.msk [vmem:[#allocation2 + $0x1b8] sm:$0xff] %vm476, 0.0
      %2650 = vst.msk [vmem:[#allocation2 + $0x1c0] sm:$0xff] %vm476, 0.0
      %2651 = vst.msk [vmem:[#allocation2 + $0x1c8] sm:$0xff] %vm476, 0.0
      %2652 = vst.msk [vmem:[#allocation2 + $0x1d0] sm:$0xff] %vm476, 0.0
      %2653 = vst.msk [vmem:[#allocation2 + $0x1d8] sm:$0xff] %vm476, 0.0
      %2654 = vst.msk [vmem:[#allocation2 + $0x1e0] sm:$0xff] %vm476, 0.0
      %2655 = vst.msk [vmem:[#allocation2 + $0x1e8] sm:$0xff] %vm476, 0.0
      %2656 = vst.msk [vmem:[#allocation2 + $0x1f0] sm:$0xff] %vm476, 0.0
      %2657 = vst.msk [vmem:[#allocation2 + $0x1f8] sm:$0xff] %vm476, 0.0
      %2658 = vst.msk [vmem:[#allocation2 + $0x200] sm:$0xff] %vm476, 0.0
      %2659 = vst.msk [vmem:[#allocation2 + $0x208] sm:$0xff] %vm476, 0.0
      %2660 = vst.msk [vmem:[#allocation2 + $0x210] sm:$0xff] %vm476, 0.0
      %2661 = vst.msk [vmem:[#allocation2 + $0x218] sm:$0xff] %vm476, 0.0
      %2662 = vst.msk [vmem:[#allocation2 + $0x220] sm:$0xff] %vm476, 0.0
      %2663 = vst.msk [vmem:[#allocation2 + $0x228] sm:$0xff] %vm476, 0.0
      %2664 = vst.msk [vmem:[#allocation2 + $0x230] sm:$0xff] %vm476, 0.0
      %2665 = vst.msk [vmem:[#allocation2 + $0x238] sm:$0xff] %vm476, 0.0
      %s2666 = scalar_lea.vmem [#allocation2], 32
      %2667 = vst.msk [vmem:[%s2666 + $0x8] sm:$0xff] %vm476, %v2562
      %2668 = vst.msk [vmem:[%s2666 + $0x10] sm:$0xff] %vm476, %v2563
      %2669 = vst.msk [vmem:[%s2666 + $0x28] sm:$0xff] %vm476, %v2564
      %2670 = vst.msk [vmem:[%s2666 + $0x30] sm:$0xff] %vm476, %v2565
      %2671 = vst.msk [vmem:[%s2666 + $0x48] sm:$0xff] %vm476, %v2566
      %2672 = vst.msk [vmem:[%s2666 + $0x50] sm:$0xff] %vm476, %v2567
      %2673 = vst.msk [vmem:[%s2666 + $0x68] sm:$0xff] %vm476, %v2568
      %2674 = vst.msk [vmem:[%s2666 + $0x70] sm:$0xff] %vm476, %v2569
      %2675 = vst.msk [vmem:[%s2666 + $0x88] sm:$0xff] %vm476, %v2570
      %2676 = vst.msk [vmem:[%s2666 + $0x90] sm:$0xff] %vm476, %v2571
      %2677 = vst.msk [vmem:[%s2666 + $0xa8] sm:$0xff] %vm476, %v2572
      %2678 = vst.msk [vmem:[%s2666 + $0xb0] sm:$0xff] %vm476, %v2573
      %2679 = vst.msk [vmem:[%s2666 + $0xc8] sm:$0xff] %vm476, %v2574
      %2680 = vst.msk [vmem:[%s2666 + $0xd0] sm:$0xff] %vm476, %v2575
      %2681 = vst.msk [vmem:[%s2666 + $0xe8] sm:$0xff] %vm476, %v2576
      %2682 = vst.msk [vmem:[%s2666 + $0xf0] sm:$0xff] %vm476, %v2577
      %2683 = vst.msk [vmem:[%s2666 + $0x108] sm:$0xff] %vm476, %v2578
      %2684 = vst.msk [vmem:[%s2666 + $0x110] sm:$0xff] %vm476, %v2579
      %2685 = vst.msk [vmem:[%s2666 + $0x128] sm:$0xff] %vm476, %v2580
      %2686 = vst.msk [vmem:[%s2666 + $0x130] sm:$0xff] %vm476, %v2581
      %2687 = vst.msk [vmem:[%s2666 + $0x148] sm:$0xff] %vm476, %v2582
      %2688 = vst.msk [vmem:[%s2666 + $0x150] sm:$0xff] %vm476, %v2583
      %2689 = vst.msk [vmem:[%s2666 + $0x168] sm:$0xff] %vm476, %v2584
      %2690 = vst.msk [vmem:[%s2666 + $0x170] sm:$0xff] %vm476, %v2585
      %2691 = vst.msk [vmem:[%s2666 + $0x188] sm:$0xff] %vm476, %v2586
      %2692 = vst.msk [vmem:[%s2666 + $0x190] sm:$0xff] %vm476, %v2587
      %2693 = vst.msk [vmem:[%s2666 + $0x1a8] sm:$0xff] %vm476, %v2588
      %2694 = vst.msk [vmem:[%s2666 + $0x1b0] sm:$0xff] %vm476, %v2589
      %2695 = vst.msk [vmem:[%s2666 + $0x1c8] sm:$0xff] %vm476, %v2590
      %2696 = vst.msk [vmem:[%s2666 + $0x1d0] sm:$0xff] %vm476, %v2591
      %2697 = vst.msk [vmem:[%s2666 + $0x1e8] sm:$0xff] %vm476, %v2592
      %2698 = vst.msk [vmem:[%s2666 + $0x1f0] sm:$0xff] %vm476, %v2593
      %v2699 = vld [vmem:[#allocation2] sm:$0xff]
      %v2700 = vld [vmem:[#allocation2 + $0x8] sm:$0xff]
      %v2701 = vld [vmem:[#allocation2 + $0x10] sm:$0xff]
      %v2702 = vld [vmem:[#allocation2 + $0x18] sm:$0xff]
      %v2703 = vld [vmem:[#allocation2 + $0x20] sm:$0xff]
      %v2704 = vld [vmem:[#allocation2 + $0x28] sm:$0xff]
      %v2705 = vld [vmem:[#allocation2 + $0x30] sm:$0xff]
      %v2706 = vld [vmem:[#allocation2 + $0x38] sm:$0xff]
      %v2707 = vld [vmem:[#allocation2 + $0x40] sm:$0xff]
      %v2708 = vld [vmem:[#allocation2 + $0x48] sm:$0xff]
      %v2709 = vld [vmem:[#allocation2 + $0x50] sm:$0xff]
      %v2710 = vld [vmem:[#allocation2 + $0x58] sm:$0xff]
      %v2711 = vld [vmem:[#allocation2 + $0x60] sm:$0xff]
      %v2712 = vld [vmem:[#allocation2 + $0x68] sm:$0xff]
      %v2713 = vld [vmem:[#allocation2 + $0x70] sm:$0xff]
      %v2714 = vld [vmem:[#allocation2 + $0x78] sm:$0xff]
      %v2715 = vld [vmem:[#allocation2 + $0x80] sm:$0xff]
      %v2716 = vld [vmem:[#allocation2 + $0x88] sm:$0xff]
      %v2717 = vld [vmem:[#allocation2 + $0x90] sm:$0xff]
      %v2718 = vld [vmem:[#allocation2 + $0x98] sm:$0xff]
      %v2719 = vld [vmem:[#allocation2 + $0xa0] sm:$0xff]
      %v2720 = vld [vmem:[#allocation2 + $0xa8] sm:$0xff]
      %v2721 = vld [vmem:[#allocation2 + $0xb0] sm:$0xff]
      %v2722 = vld [vmem:[#allocation2 + $0xb8] sm:$0xff]
      %v2723 = vld [vmem:[#allocation2 + $0xc0] sm:$0xff]
      %v2724 = vld [vmem:[#allocation2 + $0xc8] sm:$0xff]
      %v2725 = vld [vmem:[#allocation2 + $0xd0] sm:$0xff]
      %v2726 = vld [vmem:[#allocation2 + $0xd8] sm:$0xff]
      %v2727 = vld [vmem:[#allocation2 + $0xe0] sm:$0xff]
      %v2728 = vld [vmem:[#allocation2 + $0xe8] sm:$0xff]
      %v2729 = vld [vmem:[#allocation2 + $0xf0] sm:$0xff]
      %v2730 = vld [vmem:[#allocation2 + $0xf8] sm:$0xff]
      %v2731 = vld [vmem:[#allocation2 + $0x100] sm:$0xff]
      %v2732 = vld [vmem:[#allocation2 + $0x108] sm:$0xff]
      %v2733 = vld [vmem:[#allocation2 + $0x110] sm:$0xff]
      %v2734 = vld [vmem:[#allocation2 + $0x118] sm:$0xff]
      %v2735 = vld [vmem:[#allocation2 + $0x120] sm:$0xff]
      %v2736 = vld [vmem:[#allocation2 + $0x128] sm:$0xff]
      %v2737 = vld [vmem:[#allocation2 + $0x130] sm:$0xff]
      %v2738 = vld [vmem:[#allocation2 + $0x138] sm:$0xff]
      %v2739 = vld [vmem:[#allocation2 + $0x140] sm:$0xff]
      %v2740 = vld [vmem:[#allocation2 + $0x148] sm:$0xff]
      %v2741 = vld [vmem:[#allocation2 + $0x150] sm:$0xff]
      %v2742 = vld [vmem:[#allocation2 + $0x158] sm:$0xff]
      %v2743 = vld [vmem:[#allocation2 + $0x160] sm:$0xff]
      %v2744 = vld [vmem:[#allocation2 + $0x168] sm:$0xff]
      %v2745 = vld [vmem:[#allocation2 + $0x170] sm:$0xff]
      %v2746 = vld [vmem:[#allocation2 + $0x178] sm:$0xff]
      %v2747 = vld [vmem:[#allocation2 + $0x180] sm:$0xff]
      %v2748 = vld [vmem:[#allocation2 + $0x188] sm:$0xff]
      %v2749 = vld [vmem:[#allocation2 + $0x190] sm:$0xff]
      %v2750 = vld [vmem:[#allocation2 + $0x198] sm:$0xff]
      %v2751 = vld [vmem:[#allocation2 + $0x1a0] sm:$0xff]
      %v2752 = vld [vmem:[#allocation2 + $0x1a8] sm:$0xff]
      %v2753 = vld [vmem:[#allocation2 + $0x1b0] sm:$0xff]
      %v2754 = vld [vmem:[#allocation2 + $0x1b8] sm:$0xff]
      %v2755 = vld [vmem:[#allocation2 + $0x1c0] sm:$0xff]
      %v2756 = vld [vmem:[#allocation2 + $0x1c8] sm:$0xff]
      %v2757 = vld [vmem:[#allocation2 + $0x1d0] sm:$0xff]
      %v2758 = vld [vmem:[#allocation2 + $0x1d8] sm:$0xff]
      %v2759 = vld [vmem:[#allocation2 + $0x1e0] sm:$0xff]
      %v2760 = vld [vmem:[#allocation2 + $0x1e8] sm:$0xff]
      %v2761 = vld [vmem:[#allocation2 + $0x1f0] sm:$0xff]
      %v2762 = vld [vmem:[#allocation2 + $0x1f8] sm:$0xff]
      %v2763 = vld [vmem:[#allocation2 + $0x200] sm:$0xff]
      %v2764 = vld [vmem:[#allocation2 + $0x208] sm:$0xff]
      %v2765 = vld [vmem:[#allocation2 + $0x210] sm:$0xff]
      %v2766 = vld [vmem:[#allocation2 + $0x218] sm:$0xff]
      %v2767 = vld [vmem:[#allocation2 + $0x220] sm:$0xff]
      %v2768 = vld [vmem:[#allocation2 + $0x228] sm:$0xff]
      %v2769 = vld [vmem:[#allocation2 + $0x230] sm:$0xff]
      %v2770 = vld [vmem:[#allocation2 + $0x238] sm:$0xff]
      %vm2819 = vcmask 1040384
      %v2820 = vrot.slane %v2699, 7
      %v2821 = vrot.slane %v2700, 7
      %v2822 = vsel %vm2819, %v2820, %v2821
      %v2823 = vrot.slane %v2701, 7
      %v2824 = vsel %vm2819, %v2821, %v2823
      %v2825 = vrot.slane %v2703, 7
      %v2826 = vrot.slane %v2704, 7
      %v2827 = vsel %vm2819, %v2825, %v2826
      %v2828 = vrot.slane %v2705, 7
      %v2829 = vsel %vm2819, %v2826, %v2828
      %v2830 = vrot.slane %v2707, 7
      %v2831 = vrot.slane %v2708, 7
      %v2832 = vsel %vm2819, %v2830, %v2831
      %v2833 = vrot.slane %v2709, 7
      %v2834 = vsel %vm2819, %v2831, %v2833
      %v2835 = vrot.slane %v2711, 7
      %v2836 = vrot.slane %v2712, 7
      %v2837 = vsel %vm2819, %v2835, %v2836
      %v2838 = vrot.slane %v2713, 7
      %v2839 = vsel %vm2819, %v2836, %v2838
      %v2840 = vrot.slane %v2715, 7
      %v2841 = vrot.slane %v2716, 7
      %v2842 = vsel %vm2819, %v2840, %v2841
      %v2843 = vrot.slane %v2717, 7
      %v2844 = vsel %vm2819, %v2841, %v2843
      %v2845 = vrot.slane %v2719, 7
      %v2846 = vrot.slane %v2720, 7
      %v2847 = vsel %vm2819, %v2845, %v2846
      %v2848 = vrot.slane %v2721, 7
      %v2849 = vsel %vm2819, %v2846, %v2848
      %v2850 = vrot.slane %v2723, 7
      %v2851 = vrot.slane %v2724, 7
      %v2852 = vsel %vm2819, %v2850, %v2851
      %v2853 = vrot.slane %v2725, 7
      %v2854 = vsel %vm2819, %v2851, %v2853
      %v2855 = vrot.slane %v2727, 7
      %v2856 = vrot.slane %v2728, 7
      %v2857 = vsel %vm2819, %v2855, %v2856
      %v2858 = vrot.slane %v2729, 7
      %v2859 = vsel %vm2819, %v2856, %v2858
      %v2860 = vrot.slane %v2731, 7
      %v2861 = vrot.slane %v2732, 7
      %v2862 = vsel %vm2819, %v2860, %v2861
      %v2863 = vrot.slane %v2733, 7
      %v2864 = vsel %vm2819, %v2861, %v2863
      %v2865 = vrot.slane %v2735, 7
      %v2866 = vrot.slane %v2736, 7
      %v2867 = vsel %vm2819, %v2865, %v2866
      %v2868 = vrot.slane %v2737, 7
      %v2869 = vsel %vm2819, %v2866, %v2868
      %v2870 = vrot.slane %v2739, 7
      %v2871 = vrot.slane %v2740, 7
      %v2872 = vsel %vm2819, %v2870, %v2871
      %v2873 = vrot.slane %v2741, 7
      %v2874 = vsel %vm2819, %v2871, %v2873
      %v2875 = vrot.slane %v2743, 7
      %v2876 = vrot.slane %v2744, 7
      %v2877 = vsel %vm2819, %v2875, %v2876
      %v2878 = vrot.slane %v2745, 7
      %v2879 = vsel %vm2819, %v2876, %v2878
      %v2880 = vrot.slane %v2747, 7
      %v2881 = vrot.slane %v2748, 7
      %v2882 = vsel %vm2819, %v2880, %v2881
      %v2883 = vrot.slane %v2749, 7
      %v2884 = vsel %vm2819, %v2881, %v2883
      %v2885 = vrot.slane %v2751, 7
      %v2886 = vrot.slane %v2752, 7
      %v2887 = vsel %vm2819, %v2885, %v2886
      %v2888 = vrot.slane %v2753, 7
      %v2889 = vsel %vm2819, %v2886, %v2888
      %v2890 = vrot.slane %v2755, 7
      %v2891 = vrot.slane %v2756, 7
      %v2892 = vsel %vm2819, %v2890, %v2891
      %v2893 = vrot.slane %v2757, 7
      %v2894 = vsel %vm2819, %v2891, %v2893
      %v2895 = vrot.slane %v2759, 7
      %v2896 = vrot.slane %v2760, 7
      %v2897 = vsel %vm2819, %v2895, %v2896
      %v2898 = vrot.slane %v2761, 7
      %v2899 = vsel %vm2819, %v2896, %v2898
      %v2932 = vpack.c.bf16 %v2824, %v2822
      %v2933 = vpack.c.bf16 %v2829, %v2827
      %v2934 = vpack.c.bf16 %v2834, %v2832
      %v2935 = vpack.c.bf16 %v2839, %v2837
      %v2936 = vpack.c.bf16 %v2844, %v2842
      %v2937 = vpack.c.bf16 %v2849, %v2847
      %v2938 = vpack.c.bf16 %v2854, %v2852
      %v2939 = vpack.c.bf16 %v2859, %v2857
      %v2940 = vpack.c.bf16 %v2864, %v2862
      %v2941 = vpack.c.bf16 %v2869, %v2867
      %v2942 = vpack.c.bf16 %v2874, %v2872
      %v2943 = vpack.c.bf16 %v2879, %v2877
      %v2944 = vpack.c.bf16 %v2884, %v2882
      %v2945 = vpack.c.bf16 %v2889, %v2887
      %v2946 = vpack.c.bf16 %v2894, %v2892
      %v2947 = vpack.c.bf16 %v2899, %v2897
      %v2948 = vld [vmem:[%s3] sm:$0xf]
      %v2949 = vpack.c.bf16 %v2701, %v2700
      %v2950 = vpack.c.bf16 %v2705, %v2704
      %v2951 = vpack.c.bf16 %v2709, %v2708
      %v2952 = vpack.c.bf16 %v2713, %v2712
      %v2953 = vpack.c.bf16 %v2717, %v2716
      %v2954 = vpack.c.bf16 %v2721, %v2720
      %v2955 = vpack.c.bf16 %v2725, %v2724
      %v2956 = vpack.c.bf16 %v2729, %v2728
      %v2957 = vpack.c.bf16 %v2733, %v2732
      %v2958 = vpack.c.bf16 %v2737, %v2736
      %v2959 = vpack.c.bf16 %v2741, %v2740
      %v2960 = vpack.c.bf16 %v2745, %v2744
      %v2961 = vpack.c.bf16 %v2749, %v2748
      %v2962 = vpack.c.bf16 %v2753, %v2752
      %v2963 = vpack.c.bf16 %v2757, %v2756
      %v2964 = vpack.c.bf16 %v2761, %v2760
      %s2965 = scalar_lea.vmem %s3, 4
      %v2966 = vld [vmem:[%s2965] sm:$0xf]
      %v2968 = vsel %vm476, %v2949, 0
      %v2971 = vsel %vm476, %v2950, 0
      %v2974 = vsel %vm476, %v2951, 0
      %v2977 = vsel %vm476, %v2952, 0
      %v2980 = vsel %vm476, %v2953, 0
      %v2983 = vsel %vm476, %v2954, 0
      %v2986 = vsel %vm476, %v2955, 0
      %v2989 = vsel %vm476, %v2956, 0
      %v2992 = vsel %vm476, %v2957, 0
      %v2995 = vsel %vm476, %v2958, 0
      %v2998 = vsel %vm476, %v2959, 0
      %v3001 = vsel %vm476, %v2960, 0
      %v3004 = vsel %vm476, %v2961, 0
      %v3007 = vsel %vm476, %v2962, 0
      %v3010 = vsel %vm476, %v2963, 0
      %v3013 = vsel %vm476, %v2964, 0
      %v3016 = vsel %vm525, %v2966, 0
      %3018 = vmatprep.subr.bf16.mxu0 0
      %3019 = vmatpush1.bf16.msra.mxu0 0
      %3020 = vmatprep.subr.bf16.mxu0 0
      %3021 = vmatpush1.bf16.msra.mxu0 0
      %3022 = vmatprep.subr.bf16.mxu0 0
      %3023 = vmatpush1.bf16.msra.mxu0 0
      %3024 = vmatprep.subr.bf16.mxu0 0
      %3025 = vmatpush1.bf16.msra.mxu0 0
      %3026 = vmatprep.subr.bf16.mxu0 0
      %3027 = vmatpush1.bf16.msra.mxu0 0
      %3028 = vmatprep.subr.bf16.mxu0 0
      %3029 = vmatpush1.bf16.msra.mxu0 0
      %3030 = vmatprep.subr.bf16.mxu0 0
      %3031 = vmatpush1.bf16.msra.mxu0 0
      %3032 = vmatprep.subr.bf16.mxu0 0
      %3033 = vmatpush1.bf16.msra.mxu0 %v3016
      %3034 = vmatprep.subr.bf16.mxu0 0
      %3035 = vmatpush2.bf16.msra.mxu0 0
      %3036 = vmatprep.subr.bf16.mxu0 0
      %3037 = vmatpush2.bf16.msra.mxu0 0
      %3038 = vmatprep.subr.bf16.mxu0 0
      %3039 = vmatpush2.bf16.msra.mxu0 0
      %3040 = vmatprep.subr.bf16.mxu0 0
      %3041 = vmatpush2.bf16.msra.mxu0 0
      %3042 = vmatprep.subr.bf16.mxu0 0
      %3043 = vmatpush2.bf16.msra.mxu0 0
      %3044 = vmatprep.subr.bf16.mxu0 0
      %3045 = vmatpush2.bf16.msra.mxu0 0
      %3046 = vmatprep.subr.bf16.mxu0 0
      %3047 = vmatpush2.bf16.msra.mxu0 0
      %3048 = vmatprep.subr.bf16.mxu0 0
      %3049 = vmatpush2.bf16.msra.mxu0 0
      %3050 = vmatprep.mubr.bf16.mxu0 0
      %3051 = vmatmul.mubr.bf16.gmra.mxu0 %v2968
      %v3052 = vpop.f32.mrf.mxu0
      %v3053 = vadd.f32 0.0, %v3052
      %v3054 = vpop.f32.mrf.mxu0
      %v3055 = vpop.f32.mrf.mxu0
      %v3056 = vadd.f32 0.0, %v3055
      %v3057 = vpop.f32.mrf.mxu0
      %3058 = vmatprep.mubr.bf16.mxu0 0
      %3059 = vmatmul.mubr.bf16.gmra.mxu0 %v2971
      %v3060 = vpop.f32.mrf.mxu0
      %v3061 = vadd.f32 0.0, %v3060
      %v3062 = vpop.f32.mrf.mxu0
      %v3063 = vpop.f32.mrf.mxu0
      %v3064 = vadd.f32 0.0, %v3063
      %v3065 = vpop.f32.mrf.mxu0
      %3066 = vmatprep.mubr.bf16.mxu0 0
      %3067 = vmatmul.mubr.bf16.gmra.mxu0 %v2974
      %v3068 = vpop.f32.mrf.mxu0
      %v3069 = vadd.f32 0.0, %v3068
      %v3070 = vpop.f32.mrf.mxu0
      %v3071 = vpop.f32.mrf.mxu0
      %v3072 = vadd.f32 0.0, %v3071
      %v3073 = vpop.f32.mrf.mxu0
      %3074 = vmatprep.mubr.bf16.mxu0 0
      %3075 = vmatmul.mubr.bf16.gmra.mxu0 %v2977
      %v3076 = vpop.f32.mrf.mxu0
      %v3077 = vadd.f32 0.0, %v3076
      %v3078 = vpop.f32.mrf.mxu0
      %v3079 = vpop.f32.mrf.mxu0
      %v3080 = vadd.f32 0.0, %v3079
      %v3081 = vpop.f32.mrf.mxu0
      %3082 = vmatprep.mubr.bf16.mxu0 0
      %3083 = vmatmul.mubr.bf16.gmra.mxu0 %v2980
      %v3084 = vpop.f32.mrf.mxu0
      %v3085 = vadd.f32 0.0, %v3084
      %v3086 = vpop.f32.mrf.mxu0
      %v3087 = vpop.f32.mrf.mxu0
      %v3088 = vadd.f32 0.0, %v3087
      %v3089 = vpop.f32.mrf.mxu0
      %3090 = vmatprep.mubr.bf16.mxu0 0
      %3091 = vmatmul.mubr.bf16.gmra.mxu0 %v2983
      %v3092 = vpop.f32.mrf.mxu0
      %v3093 = vadd.f32 0.0, %v3092
      %v3094 = vpop.f32.mrf.mxu0
      %v3095 = vpop.f32.mrf.mxu0
      %v3096 = vadd.f32 0.0, %v3095
      %v3097 = vpop.f32.mrf.mxu0
      %3098 = vmatprep.mubr.bf16.mxu0 0
      %3099 = vmatmul.mubr.bf16.gmra.mxu0 %v2986
      %v3100 = vpop.f32.mrf.mxu0
      %v3101 = vadd.f32 0.0, %v3100
      %v3102 = vpop.f32.mrf.mxu0
      %v3103 = vpop.f32.mrf.mxu0
      %v3104 = vadd.f32 0.0, %v3103
      %v3105 = vpop.f32.mrf.mxu0
      %3106 = vmatprep.mubr.bf16.mxu0 0
      %3107 = vmatmul.mubr.bf16.gmra.mxu0 %v2989
      %v3108 = vpop.f32.mrf.mxu0
      %v3109 = vadd.f32 0.0, %v3108
      %v3110 = vpop.f32.mrf.mxu0
      %v3111 = vpop.f32.mrf.mxu0
      %v3112 = vadd.f32 0.0, %v3111
      %v3113 = vpop.f32.mrf.mxu0
      %3114 = vmatprep.mubr.bf16.mxu0 0
      %3115 = vmatmul.mubr.bf16.gmra.mxu0 %v2992
      %v3116 = vpop.f32.mrf.mxu0
      %v3117 = vadd.f32 0.0, %v3116
      %v3118 = vpop.f32.mrf.mxu0
      %v3119 = vpop.f32.mrf.mxu0
      %v3120 = vadd.f32 0.0, %v3119
      %v3121 = vpop.f32.mrf.mxu0
      %3122 = vmatprep.mubr.bf16.mxu0 0
      %3123 = vmatmul.mubr.bf16.gmra.mxu0 %v2995
      %v3124 = vpop.f32.mrf.mxu0
      %v3125 = vadd.f32 0.0, %v3124
      %v3126 = vpop.f32.mrf.mxu0
      %v3127 = vpop.f32.mrf.mxu0
      %v3128 = vadd.f32 0.0, %v3127
      %v3129 = vpop.f32.mrf.mxu0
      %3130 = vmatprep.mubr.bf16.mxu0 0
      %3131 = vmatmul.mubr.bf16.gmra.mxu0 %v2998
      %v3132 = vpop.f32.mrf.mxu0
      %v3133 = vadd.f32 0.0, %v3132
      %v3134 = vpop.f32.mrf.mxu0
      %v3135 = vpop.f32.mrf.mxu0
      %v3136 = vadd.f32 0.0, %v3135
      %v3137 = vpop.f32.mrf.mxu0
      %3138 = vmatprep.mubr.bf16.mxu0 0
      %3139 = vmatmul.mubr.bf16.gmra.mxu0 %v3001
      %v3140 = vpop.f32.mrf.mxu0
      %v3141 = vadd.f32 0.0, %v3140
      %v3142 = vpop.f32.mrf.mxu0
      %v3143 = vpop.f32.mrf.mxu0
      %v3144 = vadd.f32 0.0, %v3143
      %v3145 = vpop.f32.mrf.mxu0
      %3146 = vmatprep.mubr.bf16.mxu0 0
      %3147 = vmatmul.mubr.bf16.gmra.mxu0 %v3004
      %v3148 = vpop.f32.mrf.mxu0
      %v3149 = vadd.f32 0.0, %v3148
      %v3150 = vpop.f32.mrf.mxu0
      %v3151 = vpop.f32.mrf.mxu0
      %v3152 = vadd.f32 0.0, %v3151
      %v3153 = vpop.f32.mrf.mxu0
      %3154 = vmatprep.mubr.bf16.mxu0 0
      %3155 = vmatmul.mubr.bf16.gmra.mxu0 %v3007
      %v3156 = vpop.f32.mrf.mxu0
      %v3157 = vadd.f32 0.0, %v3156
      %v3158 = vpop.f32.mrf.mxu0
      %v3159 = vpop.f32.mrf.mxu0
      %v3160 = vadd.f32 0.0, %v3159
      %v3161 = vpop.f32.mrf.mxu0
      %3162 = vmatprep.mubr.bf16.mxu0 0
      %3163 = vmatmul.mubr.bf16.gmra.mxu0 %v3010
      %v3164 = vpop.f32.mrf.mxu0
      %v3165 = vadd.f32 0.0, %v3164
      %v3166 = vpop.f32.mrf.mxu0
      %v3167 = vpop.f32.mrf.mxu0
      %v3168 = vadd.f32 0.0, %v3167
      %v3169 = vpop.f32.mrf.mxu0
      %3170 = vmatprep.mubr.bf16.mxu0 0
      %3171 = vmatmul.mubr.bf16.gmra.mxu0 %v3013
      %v3172 = vpop.f32.mrf.mxu0
      %v3173 = vadd.f32 0.0, %v3172
      %v3174 = vpop.f32.mrf.mxu0
      %v3175 = vpop.f32.mrf.mxu0
      %v3176 = vadd.f32 0.0, %v3175
      %v3177 = vpop.f32.mrf.mxu0
      %3178 = vdwg.mxu0
      %v3180 = vsel %vm476, %v2932, 0
      %v3183 = vsel %vm476, %v2933, 0
      %v3186 = vsel %vm476, %v2934, 0
      %v3189 = vsel %vm476, %v2935, 0
      %v3192 = vsel %vm476, %v2936, 0
      %v3195 = vsel %vm476, %v2937, 0
      %v3198 = vsel %vm476, %v2938, 0
      %v3201 = vsel %vm476, %v2939, 0
      %v3204 = vsel %vm476, %v2940, 0
      %v3207 = vsel %vm476, %v2941, 0
      %v3210 = vsel %vm476, %v2942, 0
      %v3213 = vsel %vm476, %v2943, 0
      %v3216 = vsel %vm476, %v2944, 0
      %v3219 = vsel %vm476, %v2945, 0
      %v3222 = vsel %vm476, %v2946, 0
      %v3225 = vsel %vm476, %v2947, 0
      %v3228 = vsel %vm525, %v2948, 0
      %3230 = vmatprep.subr.bf16.mxu0 0
      %3231 = vmatpush1.bf16.msra.mxu0 0
      %3232 = vmatprep.subr.bf16.mxu0 0
      %3233 = vmatpush1.bf16.msra.mxu0 0
      %3234 = vmatprep.subr.bf16.mxu0 0
      %3235 = vmatpush1.bf16.msra.mxu0 0
      %3236 = vmatprep.subr.bf16.mxu0 0
      %3237 = vmatpush1.bf16.msra.mxu0 0
      %3238 = vmatprep.subr.bf16.mxu0 0
      %3239 = vmatpush1.bf16.msra.mxu0 0
      %3240 = vmatprep.subr.bf16.mxu0 0
      %3241 = vmatpush1.bf16.msra.mxu0 0
      %3242 = vmatprep.subr.bf16.mxu0 0
      %3243 = vmatpush1.bf16.msra.mxu0 0
      %3244 = vmatprep.subr.bf16.mxu0 0
      %3245 = vmatpush1.bf16.msra.mxu0 %v3228
      %3246 = vmatprep.subr.bf16.mxu0 0
      %3247 = vmatpush2.bf16.msra.mxu0 0
      %3248 = vmatprep.subr.bf16.mxu0 0
      %3249 = vmatpush2.bf16.msra.mxu0 0
      %3250 = vmatprep.subr.bf16.mxu0 0
      %3251 = vmatpush2.bf16.msra.mxu0 0
      %3252 = vmatprep.subr.bf16.mxu0 0
      %3253 = vmatpush2.bf16.msra.mxu0 0
      %3254 = vmatprep.subr.bf16.mxu0 0
      %3255 = vmatpush2.bf16.msra.mxu0 0
      %3256 = vmatprep.subr.bf16.mxu0 0
      %3257 = vmatpush2.bf16.msra.mxu0 0
      %3258 = vmatprep.subr.bf16.mxu0 0
      %3259 = vmatpush2.bf16.msra.mxu0 0
      %3260 = vmatprep.subr.bf16.mxu0 0
      %3261 = vmatpush2.bf16.msra.mxu0 0
      %3262 = vmatprep.mubr.bf16.mxu0 0
      %3263 = vmatmul.mubr.bf16.gmra.mxu0 %v3180
      %v3264 = vpop.f32.mrf.mxu0
      %v3265 = vadd.f32 %v3053, %v3264
      %v3266 = vpop.f32.mrf.mxu0
      %v3267 = vpop.f32.mrf.mxu0
      %v3268 = vadd.f32 %v3056, %v3267
      %v3269 = vpop.f32.mrf.mxu0
      %3270 = vmatprep.mubr.bf16.mxu0 0
      %3271 = vmatmul.mubr.bf16.gmra.mxu0 %v3183
      %v3272 = vpop.f32.mrf.mxu0
      %v3273 = vadd.f32 %v3061, %v3272
      %v3274 = vpop.f32.mrf.mxu0
      %v3275 = vpop.f32.mrf.mxu0
      %v3276 = vadd.f32 %v3064, %v3275
      %v3277 = vpop.f32.mrf.mxu0
      %3278 = vmatprep.mubr.bf16.mxu0 0
      %3279 = vmatmul.mubr.bf16.gmra.mxu0 %v3186
      %v3280 = vpop.f32.mrf.mxu0
      %v3281 = vadd.f32 %v3069, %v3280
      %v3282 = vpop.f32.mrf.mxu0
      %v3283 = vpop.f32.mrf.mxu0
      %v3284 = vadd.f32 %v3072, %v3283
      %v3285 = vpop.f32.mrf.mxu0
      %3286 = vmatprep.mubr.bf16.mxu0 0
      %3287 = vmatmul.mubr.bf16.gmra.mxu0 %v3189
      %v3288 = vpop.f32.mrf.mxu0
      %v3289 = vadd.f32 %v3077, %v3288
      %v3290 = vpop.f32.mrf.mxu0
      %v3291 = vpop.f32.mrf.mxu0
      %v3292 = vadd.f32 %v3080, %v3291
      %v3293 = vpop.f32.mrf.mxu0
      %3294 = vmatprep.mubr.bf16.mxu0 0
      %3295 = vmatmul.mubr.bf16.gmra.mxu0 %v3192
      %v3296 = vpop.f32.mrf.mxu0
      %v3297 = vadd.f32 %v3085, %v3296
      %v3298 = vpop.f32.mrf.mxu0
      %v3299 = vpop.f32.mrf.mxu0
      %v3300 = vadd.f32 %v3088, %v3299
      %v3301 = vpop.f32.mrf.mxu0
      %3302 = vmatprep.mubr.bf16.mxu0 0
      %3303 = vmatmul.mubr.bf16.gmra.mxu0 %v3195
      %v3304 = vpop.f32.mrf.mxu0
      %v3305 = vadd.f32 %v3093, %v3304
      %v3306 = vpop.f32.mrf.mxu0
      %v3307 = vpop.f32.mrf.mxu0
      %v3308 = vadd.f32 %v3096, %v3307
      %v3309 = vpop.f32.mrf.mxu0
      %3310 = vmatprep.mubr.bf16.mxu0 0
      %3311 = vmatmul.mubr.bf16.gmra.mxu0 %v3198
      %v3312 = vpop.f32.mrf.mxu0
      %v3313 = vadd.f32 %v3101, %v3312
      %v3314 = vpop.f32.mrf.mxu0
      %v3315 = vpop.f32.mrf.mxu0
      %v3316 = vadd.f32 %v3104, %v3315
      %v3317 = vpop.f32.mrf.mxu0
      %3318 = vmatprep.mubr.bf16.mxu0 0
      %3319 = vmatmul.mubr.bf16.gmra.mxu0 %v3201
      %v3320 = vpop.f32.mrf.mxu0
      %v3321 = vadd.f32 %v3109, %v3320
      %v3322 = vpop.f32.mrf.mxu0
      %v3323 = vpop.f32.mrf.mxu0
      %v3324 = vadd.f32 %v3112, %v3323
      %v3325 = vpop.f32.mrf.mxu0
      %3326 = vmatprep.mubr.bf16.mxu0 0
      %3327 = vmatmul.mubr.bf16.gmra.mxu0 %v3204
      %v3328 = vpop.f32.mrf.mxu0
      %v3329 = vadd.f32 %v3117, %v3328
      %v3330 = vpop.f32.mrf.mxu0
      %v3331 = vpop.f32.mrf.mxu0
      %v3332 = vadd.f32 %v3120, %v3331
      %v3333 = vpop.f32.mrf.mxu0
      %3334 = vmatprep.mubr.bf16.mxu0 0
      %3335 = vmatmul.mubr.bf16.gmra.mxu0 %v3207
      %v3336 = vpop.f32.mrf.mxu0
      %v3337 = vadd.f32 %v3125, %v3336
      %v3338 = vpop.f32.mrf.mxu0
      %v3339 = vpop.f32.mrf.mxu0
      %v3340 = vadd.f32 %v3128, %v3339
      %v3341 = vpop.f32.mrf.mxu0
      %3342 = vmatprep.mubr.bf16.mxu0 0
      %3343 = vmatmul.mubr.bf16.gmra.mxu0 %v3210
      %v3344 = vpop.f32.mrf.mxu0
      %v3345 = vadd.f32 %v3133, %v3344
      %v3346 = vpop.f32.mrf.mxu0
      %v3347 = vpop.f32.mrf.mxu0
      %v3348 = vadd.f32 %v3136, %v3347
      %v3349 = vpop.f32.mrf.mxu0
      %3350 = vmatprep.mubr.bf16.mxu0 0
      %3351 = vmatmul.mubr.bf16.gmra.mxu0 %v3213
      %v3352 = vpop.f32.mrf.mxu0
      %v3353 = vadd.f32 %v3141, %v3352
      %v3354 = vpop.f32.mrf.mxu0
      %v3355 = vpop.f32.mrf.mxu0
      %v3356 = vadd.f32 %v3144, %v3355
      %v3357 = vpop.f32.mrf.mxu0
      %3358 = vmatprep.mubr.bf16.mxu0 0
      %3359 = vmatmul.mubr.bf16.gmra.mxu0 %v3216
      %v3360 = vpop.f32.mrf.mxu0
      %v3361 = vadd.f32 %v3149, %v3360
      %v3362 = vpop.f32.mrf.mxu0
      %v3363 = vpop.f32.mrf.mxu0
      %v3364 = vadd.f32 %v3152, %v3363
      %v3365 = vpop.f32.mrf.mxu0
      %3366 = vmatprep.mubr.bf16.mxu0 0
      %3367 = vmatmul.mubr.bf16.gmra.mxu0 %v3219
      %v3368 = vpop.f32.mrf.mxu0
      %v3369 = vadd.f32 %v3157, %v3368
      %v3370 = vpop.f32.mrf.mxu0
      %v3371 = vpop.f32.mrf.mxu0
      %v3372 = vadd.f32 %v3160, %v3371
      %v3373 = vpop.f32.mrf.mxu0
      %3374 = vmatprep.mubr.bf16.mxu0 0
      %3375 = vmatmul.mubr.bf16.gmra.mxu0 %v3222
      %v3376 = vpop.f32.mrf.mxu0
      %v3377 = vadd.f32 %v3165, %v3376
      %v3378 = vpop.f32.mrf.mxu0
      %v3379 = vpop.f32.mrf.mxu0
      %v3380 = vadd.f32 %v3168, %v3379
      %v3381 = vpop.f32.mrf.mxu0
      %3382 = vmatprep.mubr.bf16.mxu0 0
      %3383 = vmatmul.mubr.bf16.gmra.mxu0 %v3225
      %v3384 = vpop.f32.mrf.mxu0
      %v3385 = vadd.f32 %v3173, %v3384
      %v3386 = vpop.f32.mrf.mxu0
      %v3387 = vpop.f32.mrf.mxu0
      %v3388 = vadd.f32 %v3176, %v3387
      %v3389 = vpop.f32.mrf.mxu0
      %3390 = vdwg.mxu0
      %v3407 = vrot.slane %v2700, 1
      %v3408 = vrot.slane %v2701, 1
      %v3409 = vsel %vm345, %v3407, %v3408
      %v3410 = vrot.slane %v2702, 1
      %v3411 = vsel %vm345, %v3408, %v3410
      %v3412 = vrot.slane %v2704, 1
      %v3413 = vrot.slane %v2705, 1
      %v3414 = vsel %vm345, %v3412, %v3413
      %v3415 = vrot.slane %v2706, 1
      %v3416 = vsel %vm345, %v3413, %v3415
      %v3417 = vrot.slane %v2708, 1
      %v3418 = vrot.slane %v2709, 1
      %v3419 = vsel %vm345, %v3417, %v3418
      %v3420 = vrot.slane %v2710, 1
      %v3421 = vsel %vm345, %v3418, %v3420
      %v3422 = vrot.slane %v2712, 1
      %v3423 = vrot.slane %v2713, 1
      %v3424 = vsel %vm345, %v3422, %v3423
      %v3425 = vrot.slane %v2714, 1
      %v3426 = vsel %vm345, %v3423, %v3425
      %v3427 = vrot.slane %v2716, 1
      %v3428 = vrot.slane %v2717, 1
      %v3429 = vsel %vm345, %v3427, %v3428
      %v3430 = vrot.slane %v2718, 1
      %v3431 = vsel %vm345, %v3428, %v3430
      %v3432 = vrot.slane %v2720, 1
      %v3433 = vrot.slane %v2721, 1
      %v3434 = vsel %vm345, %v3432, %v3433
      %v3435 = vrot.slane %v2722, 1
      %v3436 = vsel %vm345, %v3433, %v3435
      %v3437 = vrot.slane %v2724, 1
      %v3438 = vrot.slane %v2725, 1
      %v3439 = vsel %vm345, %v3437, %v3438
      %v3440 = vrot.slane %v2726, 1
      %v3441 = vsel %vm345, %v3438, %v3440
      %v3442 = vrot.slane %v2728, 1
      %v3443 = vrot.slane %v2729, 1
      %v3444 = vsel %vm345, %v3442, %v3443
      %v3445 = vrot.slane %v2730, 1
      %v3446 = vsel %vm345, %v3443, %v3445
      %v3447 = vrot.slane %v2732, 1
      %v3448 = vrot.slane %v2733, 1
      %v3449 = vsel %vm345, %v3447, %v3448
      %v3450 = vrot.slane %v2734, 1
      %v3451 = vsel %vm345, %v3448, %v3450
      %v3452 = vrot.slane %v2736, 1
      %v3453 = vrot.slane %v2737, 1
      %v3454 = vsel %vm345, %v3452, %v3453
      %v3455 = vrot.slane %v2738, 1
      %v3456 = vsel %vm345, %v3453, %v3455
      %v3457 = vrot.slane %v2740, 1
      %v3458 = vrot.slane %v2741, 1
      %v3459 = vsel %vm345, %v3457, %v3458
      %v3460 = vrot.slane %v2742, 1
      %v3461 = vsel %vm345, %v3458, %v3460
      %v3462 = vrot.slane %v2744, 1
      %v3463 = vrot.slane %v2745, 1
      %v3464 = vsel %vm345, %v3462, %v3463
      %v3465 = vrot.slane %v2746, 1
      %v3466 = vsel %vm345, %v3463, %v3465
      %v3467 = vrot.slane %v2748, 1
      %v3468 = vrot.slane %v2749, 1
      %v3469 = vsel %vm345, %v3467, %v3468
      %v3470 = vrot.slane %v2750, 1
      %v3471 = vsel %vm345, %v3468, %v3470
      %v3472 = vrot.slane %v2752, 1
      %v3473 = vrot.slane %v2753, 1
      %v3474 = vsel %vm345, %v3472, %v3473
      %v3475 = vrot.slane %v2754, 1
      %v3476 = vsel %vm345, %v3473, %v3475
      %v3477 = vrot.slane %v2756, 1
      %v3478 = vrot.slane %v2757, 1
      %v3479 = vsel %vm345, %v3477, %v3478
      %v3480 = vrot.slane %v2758, 1
      %v3481 = vsel %vm345, %v3478, %v3480
      %v3482 = vrot.slane %v2760, 1
      %v3483 = vrot.slane %v2761, 1
      %v3484 = vsel %vm345, %v3482, %v3483
      %v3485 = vrot.slane %v2762, 1
      %v3486 = vsel %vm345, %v3483, %v3485
      %v3519 = vpack.c.bf16 %v3411, %v3409
      %v3520 = vpack.c.bf16 %v3416, %v3414
      %v3521 = vpack.c.bf16 %v3421, %v3419
      %v3522 = vpack.c.bf16 %v3426, %v3424
      %v3523 = vpack.c.bf16 %v3431, %v3429
      %v3524 = vpack.c.bf16 %v3436, %v3434
      %v3525 = vpack.c.bf16 %v3441, %v3439
      %v3526 = vpack.c.bf16 %v3446, %v3444
      %v3527 = vpack.c.bf16 %v3451, %v3449
      %v3528 = vpack.c.bf16 %v3456, %v3454
      %v3529 = vpack.c.bf16 %v3461, %v3459
      %v3530 = vpack.c.bf16 %v3466, %v3464
      %v3531 = vpack.c.bf16 %v3471, %v3469
      %v3532 = vpack.c.bf16 %v3476, %v3474
      %v3533 = vpack.c.bf16 %v3481, %v3479
      %v3534 = vpack.c.bf16 %v3486, %v3484
      %s3535 = scalar_lea.vmem %s3, 8
      %v3536 = vld [vmem:[%s3535] sm:$0xf]
      %v3538 = vsel %vm476, %v3519, 0
      %v3541 = vsel %vm476, %v3520, 0
      %v3544 = vsel %vm476, %v3521, 0
      %v3547 = vsel %vm476, %v3522, 0
      %v3550 = vsel %vm476, %v3523, 0
      %v3553 = vsel %vm476, %v3524, 0
      %v3556 = vsel %vm476, %v3525, 0
      %v3559 = vsel %vm476, %v3526, 0
      %v3562 = vsel %vm476, %v3527, 0
      %v3565 = vsel %vm476, %v3528, 0
      %v3568 = vsel %vm476, %v3529, 0
      %v3571 = vsel %vm476, %v3530, 0
      %v3574 = vsel %vm476, %v3531, 0
      %v3577 = vsel %vm476, %v3532, 0
      %v3580 = vsel %vm476, %v3533, 0
      %v3583 = vsel %vm476, %v3534, 0
      %v3586 = vsel %vm525, %v3536, 0
      %3588 = vmatprep.subr.bf16.mxu0 0
      %3589 = vmatpush1.bf16.msra.mxu0 0
      %3590 = vmatprep.subr.bf16.mxu0 0
      %3591 = vmatpush1.bf16.msra.mxu0 0
      %3592 = vmatprep.subr.bf16.mxu0 0
      %3593 = vmatpush1.bf16.msra.mxu0 0
      %3594 = vmatprep.subr.bf16.mxu0 0
      %3595 = vmatpush1.bf16.msra.mxu0 0
      %3596 = vmatprep.subr.bf16.mxu0 0
      %3597 = vmatpush1.bf16.msra.mxu0 0
      %3598 = vmatprep.subr.bf16.mxu0 0
      %3599 = vmatpush1.bf16.msra.mxu0 0
      %3600 = vmatprep.subr.bf16.mxu0 0
      %3601 = vmatpush1.bf16.msra.mxu0 0
      %3602 = vmatprep.subr.bf16.mxu0 0
      %3603 = vmatpush1.bf16.msra.mxu0 %v3586
      %3604 = vmatprep.subr.bf16.mxu0 0
      %3605 = vmatpush2.bf16.msra.mxu0 0
      %3606 = vmatprep.subr.bf16.mxu0 0
      %3607 = vmatpush2.bf16.msra.mxu0 0
      %3608 = vmatprep.subr.bf16.mxu0 0
      %3609 = vmatpush2.bf16.msra.mxu0 0
      %3610 = vmatprep.subr.bf16.mxu0 0
      %3611 = vmatpush2.bf16.msra.mxu0 0
      %3612 = vmatprep.subr.bf16.mxu0 0
      %3613 = vmatpush2.bf16.msra.mxu0 0
      %3614 = vmatprep.subr.bf16.mxu0 0
      %3615 = vmatpush2.bf16.msra.mxu0 0
      %3616 = vmatprep.subr.bf16.mxu0 0
      %3617 = vmatpush2.bf16.msra.mxu0 0
      %3618 = vmatprep.subr.bf16.mxu0 0
      %3619 = vmatpush2.bf16.msra.mxu0 0
      %3620 = vmatprep.mubr.bf16.mxu0 0
      %3621 = vmatmul.mubr.bf16.gmra.mxu0 %v3538
      %v3622 = vpop.f32.mrf.mxu0
      %v3623 = vadd.f32 0.0, %v3622
      %v3624 = vpop.f32.mrf.mxu0
      %v3625 = vpop.f32.mrf.mxu0
      %v3626 = vadd.f32 0.0, %v3625
      %v3627 = vpop.f32.mrf.mxu0
      %3628 = vmatprep.mubr.bf16.mxu0 0
      %3629 = vmatmul.mubr.bf16.gmra.mxu0 %v3541
      %v3630 = vpop.f32.mrf.mxu0
      %v3631 = vadd.f32 0.0, %v3630
      %v3632 = vpop.f32.mrf.mxu0
      %v3633 = vpop.f32.mrf.mxu0
      %v3634 = vadd.f32 0.0, %v3633
      %v3635 = vpop.f32.mrf.mxu0
      %3636 = vmatprep.mubr.bf16.mxu0 0
      %3637 = vmatmul.mubr.bf16.gmra.mxu0 %v3544
      %v3638 = vpop.f32.mrf.mxu0
      %v3639 = vadd.f32 0.0, %v3638
      %v3640 = vpop.f32.mrf.mxu0
      %v3641 = vpop.f32.mrf.mxu0
      %v3642 = vadd.f32 0.0, %v3641
      %v3643 = vpop.f32.mrf.mxu0
      %3644 = vmatprep.mubr.bf16.mxu0 0
      %3645 = vmatmul.mubr.bf16.gmra.mxu0 %v3547
      %v3646 = vpop.f32.mrf.mxu0
      %v3647 = vadd.f32 0.0, %v3646
      %v3648 = vpop.f32.mrf.mxu0
      %v3649 = vpop.f32.mrf.mxu0
      %v3650 = vadd.f32 0.0, %v3649
      %v3651 = vpop.f32.mrf.mxu0
      %3652 = vmatprep.mubr.bf16.mxu0 0
      %3653 = vmatmul.mubr.bf16.gmra.mxu0 %v3550
      %v3654 = vpop.f32.mrf.mxu0
      %v3655 = vadd.f32 0.0, %v3654
      %v3656 = vpop.f32.mrf.mxu0
      %v3657 = vpop.f32.mrf.mxu0
      %v3658 = vadd.f32 0.0, %v3657
      %v3659 = vpop.f32.mrf.mxu0
      %3660 = vmatprep.mubr.bf16.mxu0 0
      %3661 = vmatmul.mubr.bf16.gmra.mxu0 %v3553
      %v3662 = vpop.f32.mrf.mxu0
      %v3663 = vadd.f32 0.0, %v3662
      %v3664 = vpop.f32.mrf.mxu0
      %v3665 = vpop.f32.mrf.mxu0
      %v3666 = vadd.f32 0.0, %v3665
      %v3667 = vpop.f32.mrf.mxu0
      %3668 = vmatprep.mubr.bf16.mxu0 0
      %3669 = vmatmul.mubr.bf16.gmra.mxu0 %v3556
      %v3670 = vpop.f32.mrf.mxu0
      %v3671 = vadd.f32 0.0, %v3670
      %v3672 = vpop.f32.mrf.mxu0
      %v3673 = vpop.f32.mrf.mxu0
      %v3674 = vadd.f32 0.0, %v3673
      %v3675 = vpop.f32.mrf.mxu0
      %3676 = vmatprep.mubr.bf16.mxu0 0
      %3677 = vmatmul.mubr.bf16.gmra.mxu0 %v3559
      %v3678 = vpop.f32.mrf.mxu0
      %v3679 = vadd.f32 0.0, %v3678
      %v3680 = vpop.f32.mrf.mxu0
      %v3681 = vpop.f32.mrf.mxu0
      %v3682 = vadd.f32 0.0, %v3681
      %v3683 = vpop.f32.mrf.mxu0
      %3684 = vmatprep.mubr.bf16.mxu0 0
      %3685 = vmatmul.mubr.bf16.gmra.mxu0 %v3562
      %v3686 = vpop.f32.mrf.mxu0
      %v3687 = vadd.f32 0.0, %v3686
      %v3688 = vpop.f32.mrf.mxu0
      %v3689 = vpop.f32.mrf.mxu0
      %v3690 = vadd.f32 0.0, %v3689
      %v3691 = vpop.f32.mrf.mxu0
      %3692 = vmatprep.mubr.bf16.mxu0 0
      %3693 = vmatmul.mubr.bf16.gmra.mxu0 %v3565
      %v3694 = vpop.f32.mrf.mxu0
      %v3695 = vadd.f32 0.0, %v3694
      %v3696 = vpop.f32.mrf.mxu0
      %v3697 = vpop.f32.mrf.mxu0
      %v3698 = vadd.f32 0.0, %v3697
      %v3699 = vpop.f32.mrf.mxu0
      %3700 = vmatprep.mubr.bf16.mxu0 0
      %3701 = vmatmul.mubr.bf16.gmra.mxu0 %v3568
      %v3702 = vpop.f32.mrf.mxu0
      %v3703 = vadd.f32 0.0, %v3702
      %v3704 = vpop.f32.mrf.mxu0
      %v3705 = vpop.f32.mrf.mxu0
      %v3706 = vadd.f32 0.0, %v3705
      %v3707 = vpop.f32.mrf.mxu0
      %3708 = vmatprep.mubr.bf16.mxu0 0
      %3709 = vmatmul.mubr.bf16.gmra.mxu0 %v3571
      %v3710 = vpop.f32.mrf.mxu0
      %v3711 = vadd.f32 0.0, %v3710
      %v3712 = vpop.f32.mrf.mxu0
      %v3713 = vpop.f32.mrf.mxu0
      %v3714 = vadd.f32 0.0, %v3713
      %v3715 = vpop.f32.mrf.mxu0
      %3716 = vmatprep.mubr.bf16.mxu0 0
      %3717 = vmatmul.mubr.bf16.gmra.mxu0 %v3574
      %v3718 = vpop.f32.mrf.mxu0
      %v3719 = vadd.f32 0.0, %v3718
      %v3720 = vpop.f32.mrf.mxu0
      %v3721 = vpop.f32.mrf.mxu0
      %v3722 = vadd.f32 0.0, %v3721
      %v3723 = vpop.f32.mrf.mxu0
      %3724 = vmatprep.mubr.bf16.mxu0 0
      %3725 = vmatmul.mubr.bf16.gmra.mxu0 %v3577
      %v3726 = vpop.f32.mrf.mxu0
      %v3727 = vadd.f32 0.0, %v3726
      %v3728 = vpop.f32.mrf.mxu0
      %v3729 = vpop.f32.mrf.mxu0
      %v3730 = vadd.f32 0.0, %v3729
      %v3731 = vpop.f32.mrf.mxu0
      %3732 = vmatprep.mubr.bf16.mxu0 0
      %3733 = vmatmul.mubr.bf16.gmra.mxu0 %v3580
      %v3734 = vpop.f32.mrf.mxu0
      %v3735 = vadd.f32 0.0, %v3734
      %v3736 = vpop.f32.mrf.mxu0
      %v3737 = vpop.f32.mrf.mxu0
      %v3738 = vadd.f32 0.0, %v3737
      %v3739 = vpop.f32.mrf.mxu0
      %3740 = vmatprep.mubr.bf16.mxu0 0
      %3741 = vmatmul.mubr.bf16.gmra.mxu0 %v3583
      %v3742 = vpop.f32.mrf.mxu0
      %v3743 = vadd.f32 0.0, %v3742
      %v3744 = vpop.f32.mrf.mxu0
      %v3745 = vpop.f32.mrf.mxu0
      %v3746 = vadd.f32 0.0, %v3745
      %v3747 = vpop.f32.mrf.mxu0
      %3748 = vdwg.mxu0
      %v3749 = vadd.f32 %v3265, %v3623
      %v3750 = vadd.f32 %v3268, %v3626
      %v3751 = vadd.f32 %v3273, %v3631
      %v3752 = vadd.f32 %v3276, %v3634
      %v3753 = vadd.f32 %v3281, %v3639
      %v3754 = vadd.f32 %v3284, %v3642
      %v3755 = vadd.f32 %v3289, %v3647
      %v3756 = vadd.f32 %v3292, %v3650
      %v3757 = vadd.f32 %v3297, %v3655
      %v3758 = vadd.f32 %v3300, %v3658
      %v3759 = vadd.f32 %v3305, %v3663
      %v3760 = vadd.f32 %v3308, %v3666
      %v3761 = vadd.f32 %v3313, %v3671
      %v3762 = vadd.f32 %v3316, %v3674
      %v3763 = vadd.f32 %v3321, %v3679
      %v3764 = vadd.f32 %v3324, %v3682
      %v3765 = vadd.f32 %v3329, %v3687
      %v3766 = vadd.f32 %v3332, %v3690
      %v3767 = vadd.f32 %v3337, %v3695
      %v3768 = vadd.f32 %v3340, %v3698
      %v3769 = vadd.f32 %v3345, %v3703
      %v3770 = vadd.f32 %v3348, %v3706
      %v3771 = vadd.f32 %v3353, %v3711
      %v3772 = vadd.f32 %v3356, %v3714
      %v3773 = vadd.f32 %v3361, %v3719
      %v3774 = vadd.f32 %v3364, %v3722
      %v3775 = vadd.f32 %v3369, %v3727
      %v3776 = vadd.f32 %v3372, %v3730
      %v3777 = vadd.f32 %v3377, %v3735
      %v3778 = vadd.f32 %v3380, %v3738
      %v3779 = vadd.f32 %v3385, %v3743
      %v3780 = vadd.f32 %v3388, %v3746
      %v3784 = vrot.slane %v2763, 7
      %v3785 = vrot.slane %v2764, 7
      %v3786 = vsel %vm2819, %v3784, %v3785
      %v3787 = vrot.slane %v2765, 7
      %v3788 = vsel %vm2819, %v3785, %v3787
      %v3791 = vpack.c.bf16 %v3788, %v3786
      %s3792 = scalar_lea.vmem %s3, 12
      %v3793 = vld [vmem:[%s3792] sm:$0xf]
      %v3795 = vsel %vm476, %v3791, 0
      %v3798 = vsel %vm525, %v3793, 0
      %3800 = vmatprep.subr.bf16.mxu0 0
      %3801 = vmatpush1.bf16.msra.mxu0 0
      %3802 = vmatprep.subr.bf16.mxu0 0
      %3803 = vmatpush1.bf16.msra.mxu0 0
      %3804 = vmatprep.subr.bf16.mxu0 0
      %3805 = vmatpush1.bf16.msra.mxu0 0
      %3806 = vmatprep.subr.bf16.mxu0 0
      %3807 = vmatpush1.bf16.msra.mxu0 0
      %3808 = vmatprep.subr.bf16.mxu0 0
      %3809 = vmatpush1.bf16.msra.mxu0 0
      %3810 = vmatprep.subr.bf16.mxu0 0
      %3811 = vmatpush1.bf16.msra.mxu0 0
      %3812 = vmatprep.subr.bf16.mxu0 0
      %3813 = vmatpush1.bf16.msra.mxu0 0
      %3814 = vmatprep.subr.bf16.mxu0 0
      %3815 = vmatpush1.bf16.msra.mxu0 %v3798
      %3816 = vmatprep.subr.bf16.mxu0 0
      %3817 = vmatpush2.bf16.msra.mxu0 0
      %3818 = vmatprep.subr.bf16.mxu0 0
      %3819 = vmatpush2.bf16.msra.mxu0 0
      %3820 = vmatprep.subr.bf16.mxu0 0
      %3821 = vmatpush2.bf16.msra.mxu0 0
      %3822 = vmatprep.subr.bf16.mxu0 0
      %3823 = vmatpush2.bf16.msra.mxu0 0
      %3824 = vmatprep.subr.bf16.mxu0 0
      %3825 = vmatpush2.bf16.msra.mxu0 0
      %3826 = vmatprep.subr.bf16.mxu0 0
      %3827 = vmatpush2.bf16.msra.mxu0 0
      %3828 = vmatprep.subr.bf16.mxu0 0
      %3829 = vmatpush2.bf16.msra.mxu0 0
      %3830 = vmatprep.subr.bf16.mxu0 0
      %3831 = vmatpush2.bf16.msra.mxu0 0
      %3832 = vmatprep.mubr.bf16.mxu0 0
      %3833 = vmatmul.mubr.bf16.gmra.mxu0 %v3183
      %v3834 = vpop.f32.mrf.mxu0
      %v3835 = vadd.f32 0.0, %v3834
      %v3836 = vpop.f32.mrf.mxu0
      %v3837 = vpop.f32.mrf.mxu0
      %v3838 = vadd.f32 0.0, %v3837
      %v3839 = vpop.f32.mrf.mxu0
      %3840 = vmatprep.mubr.bf16.mxu0 0
      %3841 = vmatmul.mubr.bf16.gmra.mxu0 %v3186
      %v3842 = vpop.f32.mrf.mxu0
      %v3843 = vadd.f32 0.0, %v3842
      %v3844 = vpop.f32.mrf.mxu0
      %v3845 = vpop.f32.mrf.mxu0
      %v3846 = vadd.f32 0.0, %v3845
      %v3847 = vpop.f32.mrf.mxu0
      %3848 = vmatprep.mubr.bf16.mxu0 0
      %3849 = vmatmul.mubr.bf16.gmra.mxu0 %v3189
      %v3850 = vpop.f32.mrf.mxu0
      %v3851 = vadd.f32 0.0, %v3850
      %v3852 = vpop.f32.mrf.mxu0
      %v3853 = vpop.f32.mrf.mxu0
      %v3854 = vadd.f32 0.0, %v3853
      %v3855 = vpop.f32.mrf.mxu0
      %3856 = vmatprep.mubr.bf16.mxu0 0
      %3857 = vmatmul.mubr.bf16.gmra.mxu0 %v3192
      %v3858 = vpop.f32.mrf.mxu0
      %v3859 = vadd.f32 0.0, %v3858
      %v3860 = vpop.f32.mrf.mxu0
      %v3861 = vpop.f32.mrf.mxu0
      %v3862 = vadd.f32 0.0, %v3861
      %v3863 = vpop.f32.mrf.mxu0
      %3864 = vmatprep.mubr.bf16.mxu0 0
      %3865 = vmatmul.mubr.bf16.gmra.mxu0 %v3195
      %v3866 = vpop.f32.mrf.mxu0
      %v3867 = vadd.f32 0.0, %v3866
      %v3868 = vpop.f32.mrf.mxu0
      %v3869 = vpop.f32.mrf.mxu0
      %v3870 = vadd.f32 0.0, %v3869
      %v3871 = vpop.f32.mrf.mxu0
      %3872 = vmatprep.mubr.bf16.mxu0 0
      %3873 = vmatmul.mubr.bf16.gmra.mxu0 %v3198
      %v3874 = vpop.f32.mrf.mxu0
      %v3875 = vadd.f32 0.0, %v3874
      %v3876 = vpop.f32.mrf.mxu0
      %v3877 = vpop.f32.mrf.mxu0
      %v3878 = vadd.f32 0.0, %v3877
      %v3879 = vpop.f32.mrf.mxu0
      %3880 = vmatprep.mubr.bf16.mxu0 0
      %3881 = vmatmul.mubr.bf16.gmra.mxu0 %v3201
      %v3882 = vpop.f32.mrf.mxu0
      %v3883 = vadd.f32 0.0, %v3882
      %v3884 = vpop.f32.mrf.mxu0
      %v3885 = vpop.f32.mrf.mxu0
      %v3886 = vadd.f32 0.0, %v3885
      %v3887 = vpop.f32.mrf.mxu0
      %3888 = vmatprep.mubr.bf16.mxu0 0
      %3889 = vmatmul.mubr.bf16.gmra.mxu0 %v3204
      %v3890 = vpop.f32.mrf.mxu0
      %v3891 = vadd.f32 0.0, %v3890
      %v3892 = vpop.f32.mrf.mxu0
      %v3893 = vpop.f32.mrf.mxu0
      %v3894 = vadd.f32 0.0, %v3893
      %v3895 = vpop.f32.mrf.mxu0
      %3896 = vmatprep.mubr.bf16.mxu0 0
      %3897 = vmatmul.mubr.bf16.gmra.mxu0 %v3207
      %v3898 = vpop.f32.mrf.mxu0
      %v3899 = vadd.f32 0.0, %v3898
      %v3900 = vpop.f32.mrf.mxu0
      %v3901 = vpop.f32.mrf.mxu0
      %v3902 = vadd.f32 0.0, %v3901
      %v3903 = vpop.f32.mrf.mxu0
      %3904 = vmatprep.mubr.bf16.mxu0 0
      %3905 = vmatmul.mubr.bf16.gmra.mxu0 %v3210
      %v3906 = vpop.f32.mrf.mxu0
      %v3907 = vadd.f32 0.0, %v3906
      %v3908 = vpop.f32.mrf.mxu0
      %v3909 = vpop.f32.mrf.mxu0
      %v3910 = vadd.f32 0.0, %v3909
      %v3911 = vpop.f32.mrf.mxu0
      %3912 = vmatprep.mubr.bf16.mxu0 0
      %3913 = vmatmul.mubr.bf16.gmra.mxu0 %v3213
      %v3914 = vpop.f32.mrf.mxu0
      %v3915 = vadd.f32 0.0, %v3914
      %v3916 = vpop.f32.mrf.mxu0
      %v3917 = vpop.f32.mrf.mxu0
      %v3918 = vadd.f32 0.0, %v3917
      %v3919 = vpop.f32.mrf.mxu0
      %3920 = vmatprep.mubr.bf16.mxu0 0
      %3921 = vmatmul.mubr.bf16.gmra.mxu0 %v3216
      %v3922 = vpop.f32.mrf.mxu0
      %v3923 = vadd.f32 0.0, %v3922
      %v3924 = vpop.f32.mrf.mxu0
      %v3925 = vpop.f32.mrf.mxu0
      %v3926 = vadd.f32 0.0, %v3925
      %v3927 = vpop.f32.mrf.mxu0
      %3928 = vmatprep.mubr.bf16.mxu0 0
      %3929 = vmatmul.mubr.bf16.gmra.mxu0 %v3219
      %v3930 = vpop.f32.mrf.mxu0
      %v3931 = vadd.f32 0.0, %v3930
      %v3932 = vpop.f32.mrf.mxu0
      %v3933 = vpop.f32.mrf.mxu0
      %v3934 = vadd.f32 0.0, %v3933
      %v3935 = vpop.f32.mrf.mxu0
      %3936 = vmatprep.mubr.bf16.mxu0 0
      %3937 = vmatmul.mubr.bf16.gmra.mxu0 %v3222
      %v3938 = vpop.f32.mrf.mxu0
      %v3939 = vadd.f32 0.0, %v3938
      %v3940 = vpop.f32.mrf.mxu0
      %v3941 = vpop.f32.mrf.mxu0
      %v3942 = vadd.f32 0.0, %v3941
      %v3943 = vpop.f32.mrf.mxu0
      %3944 = vmatprep.mubr.bf16.mxu0 0
      %3945 = vmatmul.mubr.bf16.gmra.mxu0 %v3225
      %v3946 = vpop.f32.mrf.mxu0
      %v3947 = vadd.f32 0.0, %v3946
      %v3948 = vpop.f32.mrf.mxu0
      %v3949 = vpop.f32.mrf.mxu0
      %v3950 = vadd.f32 0.0, %v3949
      %v3951 = vpop.f32.mrf.mxu0
      %3952 = vmatprep.mubr.bf16.mxu0 0
      %3953 = vmatmul.mubr.bf16.gmra.mxu0 %v3795
      %v3954 = vpop.f32.mrf.mxu0
      %v3955 = vadd.f32 0.0, %v3954
      %v3956 = vpop.f32.mrf.mxu0
      %v3957 = vpop.f32.mrf.mxu0
      %v3958 = vadd.f32 0.0, %v3957
      %v3959 = vpop.f32.mrf.mxu0
      %3960 = vdwg.mxu0
      %v3961 = vadd.f32 %v3749, %v3835
      %v3962 = vadd.f32 %v3750, %v3838
      %v3963 = vadd.f32 %v3751, %v3843
      %v3964 = vadd.f32 %v3752, %v3846
      %v3965 = vadd.f32 %v3753, %v3851
      %v3966 = vadd.f32 %v3754, %v3854
      %v3967 = vadd.f32 %v3755, %v3859
      %v3968 = vadd.f32 %v3756, %v3862
      %v3969 = vadd.f32 %v3757, %v3867
      %v3970 = vadd.f32 %v3758, %v3870
      %v3971 = vadd.f32 %v3759, %v3875
      %v3972 = vadd.f32 %v3760, %v3878
      %v3973 = vadd.f32 %v3761, %v3883
      %v3974 = vadd.f32 %v3762, %v3886
      %v3975 = vadd.f32 %v3763, %v3891
      %v3976 = vadd.f32 %v3764, %v3894
      %v3977 = vadd.f32 %v3765, %v3899
      %v3978 = vadd.f32 %v3766, %v3902
      %v3979 = vadd.f32 %v3767, %v3907
      %v3980 = vadd.f32 %v3768, %v3910
      %v3981 = vadd.f32 %v3769, %v3915
      %v3982 = vadd.f32 %v3770, %v3918
      %v3983 = vadd.f32 %v3771, %v3923
      %v3984 = vadd.f32 %v3772, %v3926
      %v3985 = vadd.f32 %v3773, %v3931
      %v3986 = vadd.f32 %v3774, %v3934
      %v3987 = vadd.f32 %v3775, %v3939
      %v3988 = vadd.f32 %v3776, %v3942
      %v3989 = vadd.f32 %v3777, %v3947
      %v3990 = vadd.f32 %v3778, %v3950
      %v3991 = vadd.f32 %v3779, %v3955
      %v3992 = vadd.f32 %v3780, %v3958
      %v3993 = vpack.c.bf16 %v2765, %v2764
      %s3994 = scalar_lea.vmem %s3, 16
      %v3995 = vld [vmem:[%s3994] sm:$0xf]
      %v3997 = vsel %vm476, %v3993, 0
      %v4000 = vsel %vm525, %v3995, 0
      %4002 = vmatprep.subr.bf16.mxu0 0
      %4003 = vmatpush1.bf16.msra.mxu0 0
      %4004 = vmatprep.subr.bf16.mxu0 0
      %4005 = vmatpush1.bf16.msra.mxu0 0
      %4006 = vmatprep.subr.bf16.mxu0 0
      %4007 = vmatpush1.bf16.msra.mxu0 0
      %4008 = vmatprep.subr.bf16.mxu0 0
      %4009 = vmatpush1.bf16.msra.mxu0 0
      %4010 = vmatprep.subr.bf16.mxu0 0
      %4011 = vmatpush1.bf16.msra.mxu0 0
      %4012 = vmatprep.subr.bf16.mxu0 0
      %4013 = vmatpush1.bf16.msra.mxu0 0
      %4014 = vmatprep.subr.bf16.mxu0 0
      %4015 = vmatpush1.bf16.msra.mxu0 0
      %4016 = vmatprep.subr.bf16.mxu0 0
      %4017 = vmatpush1.bf16.msra.mxu0 %v4000
      %4018 = vmatprep.subr.bf16.mxu0 0
      %4019 = vmatpush2.bf16.msra.mxu0 0
      %4020 = vmatprep.subr.bf16.mxu0 0
      %4021 = vmatpush2.bf16.msra.mxu0 0
      %4022 = vmatprep.subr.bf16.mxu0 0
      %4023 = vmatpush2.bf16.msra.mxu0 0
      %4024 = vmatprep.subr.bf16.mxu0 0
      %4025 = vmatpush2.bf16.msra.mxu0 0
      %4026 = vmatprep.subr.bf16.mxu0 0
      %4027 = vmatpush2.bf16.msra.mxu0 0
      %4028 = vmatprep.subr.bf16.mxu0 0
      %4029 = vmatpush2.bf16.msra.mxu0 0
      %4030 = vmatprep.subr.bf16.mxu0 0
      %4031 = vmatpush2.bf16.msra.mxu0 0
      %4032 = vmatprep.subr.bf16.mxu0 0
      %4033 = vmatpush2.bf16.msra.mxu0 0
      %4034 = vmatprep.mubr.bf16.mxu0 0
      %4035 = vmatmul.mubr.bf16.gmra.mxu0 %v2971
      %v4036 = vpop.f32.mrf.mxu0
      %v4037 = vadd.f32 0.0, %v4036
      %v4038 = vpop.f32.mrf.mxu0
      %v4039 = vpop.f32.mrf.mxu0
      %v4040 = vadd.f32 0.0, %v4039
      %v4041 = vpop.f32.mrf.mxu0
      %4042 = vmatprep.mubr.bf16.mxu0 0
      %4043 = vmatmul.mubr.bf16.gmra.mxu0 %v2974
      %v4044 = vpop.f32.mrf.mxu0
      %v4045 = vadd.f32 0.0, %v4044
      %v4046 = vpop.f32.mrf.mxu0
      %v4047 = vpop.f32.mrf.mxu0
      %v4048 = vadd.f32 0.0, %v4047
      %v4049 = vpop.f32.mrf.mxu0
      %4050 = vmatprep.mubr.bf16.mxu0 0
      %4051 = vmatmul.mubr.bf16.gmra.mxu0 %v2977
      %v4052 = vpop.f32.mrf.mxu0
      %v4053 = vadd.f32 0.0, %v4052
      %v4054 = vpop.f32.mrf.mxu0
      %v4055 = vpop.f32.mrf.mxu0
      %v4056 = vadd.f32 0.0, %v4055
      %v4057 = vpop.f32.mrf.mxu0
      %4058 = vmatprep.mubr.bf16.mxu0 0
      %4059 = vmatmul.mubr.bf16.gmra.mxu0 %v2980
      %v4060 = vpop.f32.mrf.mxu0
      %v4061 = vadd.f32 0.0, %v4060
      %v4062 = vpop.f32.mrf.mxu0
      %v4063 = vpop.f32.mrf.mxu0
      %v4064 = vadd.f32 0.0, %v4063
      %v4065 = vpop.f32.mrf.mxu0
      %4066 = vmatprep.mubr.bf16.mxu0 0
      %4067 = vmatmul.mubr.bf16.gmra.mxu0 %v2983
      %v4068 = vpop.f32.mrf.mxu0
      %v4069 = vadd.f32 0.0, %v4068
      %v4070 = vpop.f32.mrf.mxu0
      %v4071 = vpop.f32.mrf.mxu0
      %v4072 = vadd.f32 0.0, %v4071
      %v4073 = vpop.f32.mrf.mxu0
      %4074 = vmatprep.mubr.bf16.mxu0 0
      %4075 = vmatmul.mubr.bf16.gmra.mxu0 %v2986
      %v4076 = vpop.f32.mrf.mxu0
      %v4077 = vadd.f32 0.0, %v4076
      %v4078 = vpop.f32.mrf.mxu0
      %v4079 = vpop.f32.mrf.mxu0
      %v4080 = vadd.f32 0.0, %v4079
      %v4081 = vpop.f32.mrf.mxu0
      %4082 = vmatprep.mubr.bf16.mxu0 0
      %4083 = vmatmul.mubr.bf16.gmra.mxu0 %v2989
      %v4084 = vpop.f32.mrf.mxu0
      %v4085 = vadd.f32 0.0, %v4084
      %v4086 = vpop.f32.mrf.mxu0
      %v4087 = vpop.f32.mrf.mxu0
      %v4088 = vadd.f32 0.0, %v4087
      %v4089 = vpop.f32.mrf.mxu0
      %4090 = vmatprep.mubr.bf16.mxu0 0
      %4091 = vmatmul.mubr.bf16.gmra.mxu0 %v2992
      %v4092 = vpop.f32.mrf.mxu0
      %v4093 = vadd.f32 0.0, %v4092
      %v4094 = vpop.f32.mrf.mxu0
      %v4095 = vpop.f32.mrf.mxu0
      %v4096 = vadd.f32 0.0, %v4095
      %v4097 = vpop.f32.mrf.mxu0
      %4098 = vmatprep.mubr.bf16.mxu0 0
      %4099 = vmatmul.mubr.bf16.gmra.mxu0 %v2995
      %v4100 = vpop.f32.mrf.mxu0
      %v4101 = vadd.f32 0.0, %v4100
      %v4102 = vpop.f32.mrf.mxu0
      %v4103 = vpop.f32.mrf.mxu0
      %v4104 = vadd.f32 0.0, %v4103
      %v4105 = vpop.f32.mrf.mxu0
      %4106 = vmatprep.mubr.bf16.mxu0 0
      %4107 = vmatmul.mubr.bf16.gmra.mxu0 %v2998
      %v4108 = vpop.f32.mrf.mxu0
      %v4109 = vadd.f32 0.0, %v4108
      %v4110 = vpop.f32.mrf.mxu0
      %v4111 = vpop.f32.mrf.mxu0
      %v4112 = vadd.f32 0.0, %v4111
      %v4113 = vpop.f32.mrf.mxu0
      %4114 = vmatprep.mubr.bf16.mxu0 0
      %4115 = vmatmul.mubr.bf16.gmra.mxu0 %v3001
      %v4116 = vpop.f32.mrf.mxu0
      %v4117 = vadd.f32 0.0, %v4116
      %v4118 = vpop.f32.mrf.mxu0
      %v4119 = vpop.f32.mrf.mxu0
      %v4120 = vadd.f32 0.0, %v4119
      %v4121 = vpop.f32.mrf.mxu0
      %4122 = vmatprep.mubr.bf16.mxu0 0
      %4123 = vmatmul.mubr.bf16.gmra.mxu0 %v3004
      %v4124 = vpop.f32.mrf.mxu0
      %v4125 = vadd.f32 0.0, %v4124
      %v4126 = vpop.f32.mrf.mxu0
      %v4127 = vpop.f32.mrf.mxu0
      %v4128 = vadd.f32 0.0, %v4127
      %v4129 = vpop.f32.mrf.mxu0
      %4130 = vmatprep.mubr.bf16.mxu0 0
      %4131 = vmatmul.mubr.bf16.gmra.mxu0 %v3007
      %v4132 = vpop.f32.mrf.mxu0
      %v4133 = vadd.f32 0.0, %v4132
      %v4134 = vpop.f32.mrf.mxu0
      %v4135 = vpop.f32.mrf.mxu0
      %v4136 = vadd.f32 0.0, %v4135
      %v4137 = vpop.f32.mrf.mxu0
      %4138 = vmatprep.mubr.bf16.mxu0 0
      %4139 = vmatmul.mubr.bf16.gmra.mxu0 %v3010
      %v4140 = vpop.f32.mrf.mxu0
      %v4141 = vadd.f32 0.0, %v4140
      %v4142 = vpop.f32.mrf.mxu0
      %v4143 = vpop.f32.mrf.mxu0
      %v4144 = vadd.f32 0.0, %v4143
      %v4145 = vpop.f32.mrf.mxu0
      %4146 = vmatprep.mubr.bf16.mxu0 0
      %4147 = vmatmul.mubr.bf16.gmra.mxu0 %v3013
      %v4148 = vpop.f32.mrf.mxu0
      %v4149 = vadd.f32 0.0, %v4148
      %v4150 = vpop.f32.mrf.mxu0
      %v4151 = vpop.f32.mrf.mxu0
      %v4152 = vadd.f32 0.0, %v4151
      %v4153 = vpop.f32.mrf.mxu0
      %4154 = vmatprep.mubr.bf16.mxu0 0
      %4155 = vmatmul.mubr.bf16.gmra.mxu0 %v3997
      %v4156 = vpop.f32.mrf.mxu0
      %v4157 = vadd.f32 0.0, %v4156
      %v4158 = vpop.f32.mrf.mxu0
      %v4159 = vpop.f32.mrf.mxu0
      %v4160 = vadd.f32 0.0, %v4159
      %v4161 = vpop.f32.mrf.mxu0
      %4162 = vdwg.mxu0
      %v4163 = vadd.f32 %v3961, %v4037
      %v4164 = vadd.f32 %v3962, %v4040
      %v4165 = vadd.f32 %v3963, %v4045
      %v4166 = vadd.f32 %v3964, %v4048
      %v4167 = vadd.f32 %v3965, %v4053
      %v4168 = vadd.f32 %v3966, %v4056
      %v4169 = vadd.f32 %v3967, %v4061
      %v4170 = vadd.f32 %v3968, %v4064
      %v4171 = vadd.f32 %v3969, %v4069
      %v4172 = vadd.f32 %v3970, %v4072
      %v4173 = vadd.f32 %v3971, %v4077
      %v4174 = vadd.f32 %v3972, %v4080
      %v4175 = vadd.f32 %v3973, %v4085
      %v4176 = vadd.f32 %v3974, %v4088
      %v4177 = vadd.f32 %v3975, %v4093
      %v4178 = vadd.f32 %v3976, %v4096
      %v4179 = vadd.f32 %v3977, %v4101
      %v4180 = vadd.f32 %v3978, %v4104
      %v4181 = vadd.f32 %v3979, %v4109
      %v4182 = vadd.f32 %v3980, %v4112
      %v4183 = vadd.f32 %v3981, %v4117
      %v4184 = vadd.f32 %v3982, %v4120
      %v4185 = vadd.f32 %v3983, %v4125
      %v4186 = vadd.f32 %v3984, %v4128
      %v4187 = vadd.f32 %v3985, %v4133
      %v4188 = vadd.f32 %v3986, %v4136
      %v4189 = vadd.f32 %v3987, %v4141
      %v4190 = vadd.f32 %v3988, %v4144
      %v4191 = vadd.f32 %v3989, %v4149
      %v4192 = vadd.f32 %v3990, %v4152
      %v4193 = vadd.f32 %v3991, %v4157
      %v4194 = vadd.f32 %v3992, %v4160
      %v4196 = vrot.slane %v2764, 1
      %v4197 = vrot.slane %v2765, 1
      %v4198 = vsel %vm345, %v4196, %v4197
      %v4199 = vrot.slane %v2766, 1
      %v4200 = vsel %vm345, %v4197, %v4199
      %v4203 = vpack.c.bf16 %v4200, %v4198
      %s4204 = scalar_lea.vmem %s3, 20
      %v4205 = vld [vmem:[%s4204] sm:$0xf]
      %v4207 = vsel %vm476, %v4203, 0
      %v4210 = vsel %vm525, %v4205, 0
      %4212 = vmatprep.subr.bf16.mxu0 0
      %4213 = vmatpush1.bf16.msra.mxu0 0
      %4214 = vmatprep.subr.bf16.mxu0 0
      %4215 = vmatpush1.bf16.msra.mxu0 0
      %4216 = vmatprep.subr.bf16.mxu0 0
      %4217 = vmatpush1.bf16.msra.mxu0 0
      %4218 = vmatprep.subr.bf16.mxu0 0
      %4219 = vmatpush1.bf16.msra.mxu0 0
      %4220 = vmatprep.subr.bf16.mxu0 0
      %4221 = vmatpush1.bf16.msra.mxu0 0
      %4222 = vmatprep.subr.bf16.mxu0 0
      %4223 = vmatpush1.bf16.msra.mxu0 0
      %4224 = vmatprep.subr.bf16.mxu0 0
      %4225 = vmatpush1.bf16.msra.mxu0 0
      %4226 = vmatprep.subr.bf16.mxu0 0
      %4227 = vmatpush1.bf16.msra.mxu0 %v4210
      %4228 = vmatprep.subr.bf16.mxu0 0
      %4229 = vmatpush2.bf16.msra.mxu0 0
      %4230 = vmatprep.subr.bf16.mxu0 0
      %4231 = vmatpush2.bf16.msra.mxu0 0
      %4232 = vmatprep.subr.bf16.mxu0 0
      %4233 = vmatpush2.bf16.msra.mxu0 0
      %4234 = vmatprep.subr.bf16.mxu0 0
      %4235 = vmatpush2.bf16.msra.mxu0 0
      %4236 = vmatprep.subr.bf16.mxu0 0
      %4237 = vmatpush2.bf16.msra.mxu0 0
      %4238 = vmatprep.subr.bf16.mxu0 0
      %4239 = vmatpush2.bf16.msra.mxu0 0
      %4240 = vmatprep.subr.bf16.mxu0 0
      %4241 = vmatpush2.bf16.msra.mxu0 0
      %4242 = vmatprep.subr.bf16.mxu0 0
      %4243 = vmatpush2.bf16.msra.mxu0 0
      %4244 = vmatprep.mubr.bf16.mxu0 0
      %4245 = vmatmul.mubr.bf16.gmra.mxu0 %v3541
      %v4246 = vpop.f32.mrf.mxu0
      %v4247 = vadd.f32 0.0, %v4246
      %v4248 = vpop.f32.mrf.mxu0
      %v4249 = vpop.f32.mrf.mxu0
      %v4250 = vadd.f32 0.0, %v4249
      %v4251 = vpop.f32.mrf.mxu0
      %4252 = vmatprep.mubr.bf16.mxu0 0
      %4253 = vmatmul.mubr.bf16.gmra.mxu0 %v3544
      %v4254 = vpop.f32.mrf.mxu0
      %v4255 = vadd.f32 0.0, %v4254
      %v4256 = vpop.f32.mrf.mxu0
      %v4257 = vpop.f32.mrf.mxu0
      %v4258 = vadd.f32 0.0, %v4257
      %v4259 = vpop.f32.mrf.mxu0
      %4260 = vmatprep.mubr.bf16.mxu0 0
      %4261 = vmatmul.mubr.bf16.gmra.mxu0 %v3547
      %v4262 = vpop.f32.mrf.mxu0
      %v4263 = vadd.f32 0.0, %v4262
      %v4264 = vpop.f32.mrf.mxu0
      %v4265 = vpop.f32.mrf.mxu0
      %v4266 = vadd.f32 0.0, %v4265
      %v4267 = vpop.f32.mrf.mxu0
      %4268 = vmatprep.mubr.bf16.mxu0 0
      %4269 = vmatmul.mubr.bf16.gmra.mxu0 %v3550
      %v4270 = vpop.f32.mrf.mxu0
      %v4271 = vadd.f32 0.0, %v4270
      %v4272 = vpop.f32.mrf.mxu0
      %v4273 = vpop.f32.mrf.mxu0
      %v4274 = vadd.f32 0.0, %v4273
      %v4275 = vpop.f32.mrf.mxu0
      %4276 = vmatprep.mubr.bf16.mxu0 0
      %4277 = vmatmul.mubr.bf16.gmra.mxu0 %v3553
      %v4278 = vpop.f32.mrf.mxu0
      %v4279 = vadd.f32 0.0, %v4278
      %v4280 = vpop.f32.mrf.mxu0
      %v4281 = vpop.f32.mrf.mxu0
      %v4282 = vadd.f32 0.0, %v4281
      %v4283 = vpop.f32.mrf.mxu0
      %4284 = vmatprep.mubr.bf16.mxu0 0
      %4285 = vmatmul.mubr.bf16.gmra.mxu0 %v3556
      %v4286 = vpop.f32.mrf.mxu0
      %v4287 = vadd.f32 0.0, %v4286
      %v4288 = vpop.f32.mrf.mxu0
      %v4289 = vpop.f32.mrf.mxu0
      %v4290 = vadd.f32 0.0, %v4289
      %v4291 = vpop.f32.mrf.mxu0
      %4292 = vmatprep.mubr.bf16.mxu0 0
      %4293 = vmatmul.mubr.bf16.gmra.mxu0 %v3559
      %v4294 = vpop.f32.mrf.mxu0
      %v4295 = vadd.f32 0.0, %v4294
      %v4296 = vpop.f32.mrf.mxu0
      %v4297 = vpop.f32.mrf.mxu0
      %v4298 = vadd.f32 0.0, %v4297
      %v4299 = vpop.f32.mrf.mxu0
      %4300 = vmatprep.mubr.bf16.mxu0 0
      %4301 = vmatmul.mubr.bf16.gmra.mxu0 %v3562
      %v4302 = vpop.f32.mrf.mxu0
      %v4303 = vadd.f32 0.0, %v4302
      %v4304 = vpop.f32.mrf.mxu0
      %v4305 = vpop.f32.mrf.mxu0
      %v4306 = vadd.f32 0.0, %v4305
      %v4307 = vpop.f32.mrf.mxu0
      %4308 = vmatprep.mubr.bf16.mxu0 0
      %4309 = vmatmul.mubr.bf16.gmra.mxu0 %v3565
      %v4310 = vpop.f32.mrf.mxu0
      %v4311 = vadd.f32 0.0, %v4310
      %v4312 = vpop.f32.mrf.mxu0
      %v4313 = vpop.f32.mrf.mxu0
      %v4314 = vadd.f32 0.0, %v4313
      %v4315 = vpop.f32.mrf.mxu0
      %4316 = vmatprep.mubr.bf16.mxu0 0
      %4317 = vmatmul.mubr.bf16.gmra.mxu0 %v3568
      %v4318 = vpop.f32.mrf.mxu0
      %v4319 = vadd.f32 0.0, %v4318
      %v4320 = vpop.f32.mrf.mxu0
      %v4321 = vpop.f32.mrf.mxu0
      %v4322 = vadd.f32 0.0, %v4321
      %v4323 = vpop.f32.mrf.mxu0
      %4324 = vmatprep.mubr.bf16.mxu0 0
      %4325 = vmatmul.mubr.bf16.gmra.mxu0 %v3571
      %v4326 = vpop.f32.mrf.mxu0
      %v4327 = vadd.f32 0.0, %v4326
      %v4328 = vpop.f32.mrf.mxu0
      %v4329 = vpop.f32.mrf.mxu0
      %v4330 = vadd.f32 0.0, %v4329
      %v4331 = vpop.f32.mrf.mxu0
      %4332 = vmatprep.mubr.bf16.mxu0 0
      %4333 = vmatmul.mubr.bf16.gmra.mxu0 %v3574
      %v4334 = vpop.f32.mrf.mxu0
      %v4335 = vadd.f32 0.0, %v4334
      %v4336 = vpop.f32.mrf.mxu0
      %v4337 = vpop.f32.mrf.mxu0
      %v4338 = vadd.f32 0.0, %v4337
      %v4339 = vpop.f32.mrf.mxu0
      %4340 = vmatprep.mubr.bf16.mxu0 0
      %4341 = vmatmul.mubr.bf16.gmra.mxu0 %v3577
      %v4342 = vpop.f32.mrf.mxu0
      %v4343 = vadd.f32 0.0, %v4342
      %v4344 = vpop.f32.mrf.mxu0
      %v4345 = vpop.f32.mrf.mxu0
      %v4346 = vadd.f32 0.0, %v4345
      %v4347 = vpop.f32.mrf.mxu0
      %4348 = vmatprep.mubr.bf16.mxu0 0
      %4349 = vmatmul.mubr.bf16.gmra.mxu0 %v3580
      %v4350 = vpop.f32.mrf.mxu0
      %v4351 = vadd.f32 0.0, %v4350
      %v4352 = vpop.f32.mrf.mxu0
      %v4353 = vpop.f32.mrf.mxu0
      %v4354 = vadd.f32 0.0, %v4353
      %v4355 = vpop.f32.mrf.mxu0
      %4356 = vmatprep.mubr.bf16.mxu0 0
      %4357 = vmatmul.mubr.bf16.gmra.mxu0 %v3583
      %v4358 = vpop.f32.mrf.mxu0
      %v4359 = vadd.f32 0.0, %v4358
      %v4360 = vpop.f32.mrf.mxu0
      %v4361 = vpop.f32.mrf.mxu0
      %v4362 = vadd.f32 0.0, %v4361
      %v4363 = vpop.f32.mrf.mxu0
      %4364 = vmatprep.mubr.bf16.mxu0 0
      %4365 = vmatmul.mubr.bf16.gmra.mxu0 %v4207
      %v4366 = vpop.f32.mrf.mxu0
      %v4367 = vadd.f32 0.0, %v4366
      %v4368 = vpop.f32.mrf.mxu0
      %v4369 = vpop.f32.mrf.mxu0
      %v4370 = vadd.f32 0.0, %v4369
      %v4371 = vpop.f32.mrf.mxu0
      %4372 = vdwg.mxu0
      %v4373 = vadd.f32 %v4163, %v4247
      %v4374 = vadd.f32 %v4164, %v4250
      %v4375 = vadd.f32 %v4165, %v4255
      %v4376 = vadd.f32 %v4166, %v4258
      %v4377 = vadd.f32 %v4167, %v4263
      %v4378 = vadd.f32 %v4168, %v4266
      %v4379 = vadd.f32 %v4169, %v4271
      %v4380 = vadd.f32 %v4170, %v4274
      %v4381 = vadd.f32 %v4171, %v4279
      %v4382 = vadd.f32 %v4172, %v4282
      %v4383 = vadd.f32 %v4173, %v4287
      %v4384 = vadd.f32 %v4174, %v4290
      %v4385 = vadd.f32 %v4175, %v4295
      %v4386 = vadd.f32 %v4176, %v4298
      %v4387 = vadd.f32 %v4177, %v4303
      %v4388 = vadd.f32 %v4178, %v4306
      %v4389 = vadd.f32 %v4179, %v4311
      %v4390 = vadd.f32 %v4180, %v4314
      %v4391 = vadd.f32 %v4181, %v4319
      %v4392 = vadd.f32 %v4182, %v4322
      %v4393 = vadd.f32 %v4183, %v4327
      %v4394 = vadd.f32 %v4184, %v4330
      %v4395 = vadd.f32 %v4185, %v4335
      %v4396 = vadd.f32 %v4186, %v4338
      %v4397 = vadd.f32 %v4187, %v4343
      %v4398 = vadd.f32 %v4188, %v4346
      %v4399 = vadd.f32 %v4189, %v4351
      %v4400 = vadd.f32 %v4190, %v4354
      %v4401 = vadd.f32 %v4191, %v4359
      %v4402 = vadd.f32 %v4192, %v4362
      %v4403 = vadd.f32 %v4193, %v4367
      %v4404 = vadd.f32 %v4194, %v4370
      %v4408 = vrot.slane %v2767, 7
      %v4409 = vrot.slane %v2768, 7
      %v4410 = vsel %vm2819, %v4408, %v4409
      %v4411 = vrot.slane %v2769, 7
      %v4412 = vsel %vm2819, %v4409, %v4411
      %v4415 = vpack.c.bf16 %v4412, %v4410
      %s4416 = scalar_lea.vmem %s3, 24
      %v4417 = vld [vmem:[%s4416] sm:$0xf]
      %v4419 = vsel %vm476, %v4415, 0
      %v4422 = vsel %vm525, %v4417, 0
      %4424 = vmatprep.subr.bf16.mxu0 0
      %4425 = vmatpush1.bf16.msra.mxu0 0
      %4426 = vmatprep.subr.bf16.mxu0 0
      %4427 = vmatpush1.bf16.msra.mxu0 0
      %4428 = vmatprep.subr.bf16.mxu0 0
      %4429 = vmatpush1.bf16.msra.mxu0 0
      %4430 = vmatprep.subr.bf16.mxu0 0
      %4431 = vmatpush1.bf16.msra.mxu0 0
      %4432 = vmatprep.subr.bf16.mxu0 0
      %4433 = vmatpush1.bf16.msra.mxu0 0
      %4434 = vmatprep.subr.bf16.mxu0 0
      %4435 = vmatpush1.bf16.msra.mxu0 0
      %4436 = vmatprep.subr.bf16.mxu0 0
      %4437 = vmatpush1.bf16.msra.mxu0 0
      %4438 = vmatprep.subr.bf16.mxu0 0
      %4439 = vmatpush1.bf16.msra.mxu0 %v4422
      %4440 = vmatprep.subr.bf16.mxu0 0
      %4441 = vmatpush2.bf16.msra.mxu0 0
      %4442 = vmatprep.subr.bf16.mxu0 0
      %4443 = vmatpush2.bf16.msra.mxu0 0
      %4444 = vmatprep.subr.bf16.mxu0 0
      %4445 = vmatpush2.bf16.msra.mxu0 0
      %4446 = vmatprep.subr.bf16.mxu0 0
      %4447 = vmatpush2.bf16.msra.mxu0 0
      %4448 = vmatprep.subr.bf16.mxu0 0
      %4449 = vmatpush2.bf16.msra.mxu0 0
      %4450 = vmatprep.subr.bf16.mxu0 0
      %4451 = vmatpush2.bf16.msra.mxu0 0
      %4452 = vmatprep.subr.bf16.mxu0 0
      %4453 = vmatpush2.bf16.msra.mxu0 0
      %4454 = vmatprep.subr.bf16.mxu0 0
      %4455 = vmatpush2.bf16.msra.mxu0 0
      %4456 = vmatprep.mubr.bf16.mxu0 0
      %4457 = vmatmul.mubr.bf16.gmra.mxu0 %v3186
      %v4458 = vpop.f32.mrf.mxu0
      %v4459 = vadd.f32 0.0, %v4458
      %v4460 = vpop.f32.mrf.mxu0
      %v4461 = vpop.f32.mrf.mxu0
      %v4462 = vadd.f32 0.0, %v4461
      %v4463 = vpop.f32.mrf.mxu0
      %4464 = vmatprep.mubr.bf16.mxu0 0
      %4465 = vmatmul.mubr.bf16.gmra.mxu0 %v3189
      %v4466 = vpop.f32.mrf.mxu0
      %v4467 = vadd.f32 0.0, %v4466
      %v4468 = vpop.f32.mrf.mxu0
      %v4469 = vpop.f32.mrf.mxu0
      %v4470 = vadd.f32 0.0, %v4469
      %v4471 = vpop.f32.mrf.mxu0
      %4472 = vmatprep.mubr.bf16.mxu0 0
      %4473 = vmatmul.mubr.bf16.gmra.mxu0 %v3192
      %v4474 = vpop.f32.mrf.mxu0
      %v4475 = vadd.f32 0.0, %v4474
      %v4476 = vpop.f32.mrf.mxu0
      %v4477 = vpop.f32.mrf.mxu0
      %v4478 = vadd.f32 0.0, %v4477
      %v4479 = vpop.f32.mrf.mxu0
      %4480 = vmatprep.mubr.bf16.mxu0 0
      %4481 = vmatmul.mubr.bf16.gmra.mxu0 %v3195
      %v4482 = vpop.f32.mrf.mxu0
      %v4483 = vadd.f32 0.0, %v4482
      %v4484 = vpop.f32.mrf.mxu0
      %v4485 = vpop.f32.mrf.mxu0
      %v4486 = vadd.f32 0.0, %v4485
      %v4487 = vpop.f32.mrf.mxu0
      %4488 = vmatprep.mubr.bf16.mxu0 0
      %4489 = vmatmul.mubr.bf16.gmra.mxu0 %v3198
      %v4490 = vpop.f32.mrf.mxu0
      %v4491 = vadd.f32 0.0, %v4490
      %v4492 = vpop.f32.mrf.mxu0
      %v4493 = vpop.f32.mrf.mxu0
      %v4494 = vadd.f32 0.0, %v4493
      %v4495 = vpop.f32.mrf.mxu0
      %4496 = vmatprep.mubr.bf16.mxu0 0
      %4497 = vmatmul.mubr.bf16.gmra.mxu0 %v3201
      %v4498 = vpop.f32.mrf.mxu0
      %v4499 = vadd.f32 0.0, %v4498
      %v4500 = vpop.f32.mrf.mxu0
      %v4501 = vpop.f32.mrf.mxu0
      %v4502 = vadd.f32 0.0, %v4501
      %v4503 = vpop.f32.mrf.mxu0
      %4504 = vmatprep.mubr.bf16.mxu0 0
      %4505 = vmatmul.mubr.bf16.gmra.mxu0 %v3204
      %v4506 = vpop.f32.mrf.mxu0
      %v4507 = vadd.f32 0.0, %v4506
      %v4508 = vpop.f32.mrf.mxu0
      %v4509 = vpop.f32.mrf.mxu0
      %v4510 = vadd.f32 0.0, %v4509
      %v4511 = vpop.f32.mrf.mxu0
      %4512 = vmatprep.mubr.bf16.mxu0 0
      %4513 = vmatmul.mubr.bf16.gmra.mxu0 %v3207
      %v4514 = vpop.f32.mrf.mxu0
      %v4515 = vadd.f32 0.0, %v4514
      %v4516 = vpop.f32.mrf.mxu0
      %v4517 = vpop.f32.mrf.mxu0
      %v4518 = vadd.f32 0.0, %v4517
      %v4519 = vpop.f32.mrf.mxu0
      %4520 = vmatprep.mubr.bf16.mxu0 0
      %4521 = vmatmul.mubr.bf16.gmra.mxu0 %v3210
      %v4522 = vpop.f32.mrf.mxu0
      %v4523 = vadd.f32 0.0, %v4522
      %v4524 = vpop.f32.mrf.mxu0
      %v4525 = vpop.f32.mrf.mxu0
      %v4526 = vadd.f32 0.0, %v4525
      %v4527 = vpop.f32.mrf.mxu0
      %4528 = vmatprep.mubr.bf16.mxu0 0
      %4529 = vmatmul.mubr.bf16.gmra.mxu0 %v3213
      %v4530 = vpop.f32.mrf.mxu0
      %v4531 = vadd.f32 0.0, %v4530
      %v4532 = vpop.f32.mrf.mxu0
      %v4533 = vpop.f32.mrf.mxu0
      %v4534 = vadd.f32 0.0, %v4533
      %v4535 = vpop.f32.mrf.mxu0
      %4536 = vmatprep.mubr.bf16.mxu0 0
      %4537 = vmatmul.mubr.bf16.gmra.mxu0 %v3216
      %v4538 = vpop.f32.mrf.mxu0
      %v4539 = vadd.f32 0.0, %v4538
      %v4540 = vpop.f32.mrf.mxu0
      %v4541 = vpop.f32.mrf.mxu0
      %v4542 = vadd.f32 0.0, %v4541
      %v4543 = vpop.f32.mrf.mxu0
      %4544 = vmatprep.mubr.bf16.mxu0 0
      %4545 = vmatmul.mubr.bf16.gmra.mxu0 %v3219
      %v4546 = vpop.f32.mrf.mxu0
      %v4547 = vadd.f32 0.0, %v4546
      %v4548 = vpop.f32.mrf.mxu0
      %v4549 = vpop.f32.mrf.mxu0
      %v4550 = vadd.f32 0.0, %v4549
      %v4551 = vpop.f32.mrf.mxu0
      %4552 = vmatprep.mubr.bf16.mxu0 0
      %4553 = vmatmul.mubr.bf16.gmra.mxu0 %v3222
      %v4554 = vpop.f32.mrf.mxu0
      %v4555 = vadd.f32 0.0, %v4554
      %v4556 = vpop.f32.mrf.mxu0
      %v4557 = vpop.f32.mrf.mxu0
      %v4558 = vadd.f32 0.0, %v4557
      %v4559 = vpop.f32.mrf.mxu0
      %4560 = vmatprep.mubr.bf16.mxu0 0
      %4561 = vmatmul.mubr.bf16.gmra.mxu0 %v3225
      %v4562 = vpop.f32.mrf.mxu0
      %v4563 = vadd.f32 0.0, %v4562
      %v4564 = vpop.f32.mrf.mxu0
      %v4565 = vpop.f32.mrf.mxu0
      %v4566 = vadd.f32 0.0, %v4565
      %v4567 = vpop.f32.mrf.mxu0
      %4568 = vmatprep.mubr.bf16.mxu0 0
      %4569 = vmatmul.mubr.bf16.gmra.mxu0 %v3795
      %v4570 = vpop.f32.mrf.mxu0
      %v4571 = vadd.f32 0.0, %v4570
      %v4572 = vpop.f32.mrf.mxu0
      %v4573 = vpop.f32.mrf.mxu0
      %v4574 = vadd.f32 0.0, %v4573
      %v4575 = vpop.f32.mrf.mxu0
      %4576 = vmatprep.mubr.bf16.mxu0 0
      %4577 = vmatmul.mubr.bf16.gmra.mxu0 %v4419
      %v4578 = vpop.f32.mrf.mxu0
      %v4579 = vadd.f32 0.0, %v4578
      %v4580 = vpop.f32.mrf.mxu0
      %v4581 = vpop.f32.mrf.mxu0
      %v4582 = vadd.f32 0.0, %v4581
      %v4583 = vpop.f32.mrf.mxu0
      %4584 = vdwg.mxu0
      %v4585 = vadd.f32 %v4373, %v4459
      %v4586 = vadd.f32 %v4374, %v4462
      %v4587 = vadd.f32 %v4375, %v4467
      %v4588 = vadd.f32 %v4376, %v4470
      %v4589 = vadd.f32 %v4377, %v4475
      %v4590 = vadd.f32 %v4378, %v4478
      %v4591 = vadd.f32 %v4379, %v4483
      %v4592 = vadd.f32 %v4380, %v4486
      %v4593 = vadd.f32 %v4381, %v4491
      %v4594 = vadd.f32 %v4382, %v4494
      %v4595 = vadd.f32 %v4383, %v4499
      %v4596 = vadd.f32 %v4384, %v4502
      %v4597 = vadd.f32 %v4385, %v4507
      %v4598 = vadd.f32 %v4386, %v4510
      %v4599 = vadd.f32 %v4387, %v4515
      %v4600 = vadd.f32 %v4388, %v4518
      %v4601 = vadd.f32 %v4389, %v4523
      %v4602 = vadd.f32 %v4390, %v4526
      %v4603 = vadd.f32 %v4391, %v4531
      %v4604 = vadd.f32 %v4392, %v4534
      %v4605 = vadd.f32 %v4393, %v4539
      %v4606 = vadd.f32 %v4394, %v4542
      %v4607 = vadd.f32 %v4395, %v4547
      %v4608 = vadd.f32 %v4396, %v4550
      %v4609 = vadd.f32 %v4397, %v4555
      %v4610 = vadd.f32 %v4398, %v4558
      %v4611 = vadd.f32 %v4399, %v4563
      %v4612 = vadd.f32 %v4400, %v4566
      %v4613 = vadd.f32 %v4401, %v4571
      %v4614 = vadd.f32 %v4402, %v4574
      %v4615 = vadd.f32 %v4403, %v4579
      %v4616 = vadd.f32 %v4404, %v4582
      %v4617 = vpack.c.bf16 %v2769, %v2768
      %s4618 = scalar_lea.vmem %s3, 28
      %v4619 = vld [vmem:[%s4618] sm:$0xf]
      %v4621 = vsel %vm476, %v4617, 0
      %v4624 = vsel %vm525, %v4619, 0
      %4626 = vmatprep.subr.bf16.mxu0 0
      %4627 = vmatpush1.bf16.msra.mxu0 0
      %4628 = vmatprep.subr.bf16.mxu0 0
      %4629 = vmatpush1.bf16.msra.mxu0 0
      %4630 = vmatprep.subr.bf16.mxu0 0
      %4631 = vmatpush1.bf16.msra.mxu0 0
      %4632 = vmatprep.subr.bf16.mxu0 0
      %4633 = vmatpush1.bf16.msra.mxu0 0
      %4634 = vmatprep.subr.bf16.mxu0 0
      %4635 = vmatpush1.bf16.msra.mxu0 0
      %4636 = vmatprep.subr.bf16.mxu0 0
      %4637 = vmatpush1.bf16.msra.mxu0 0
      %4638 = vmatprep.subr.bf16.mxu0 0
      %4639 = vmatpush1.bf16.msra.mxu0 0
      %4640 = vmatprep.subr.bf16.mxu0 0
      %4641 = vmatpush1.bf16.msra.mxu0 %v4624
      %4642 = vmatprep.subr.bf16.mxu0 0
      %4643 = vmatpush2.bf16.msra.mxu0 0
      %4644 = vmatprep.subr.bf16.mxu0 0
      %4645 = vmatpush2.bf16.msra.mxu0 0
      %4646 = vmatprep.subr.bf16.mxu0 0
      %4647 = vmatpush2.bf16.msra.mxu0 0
      %4648 = vmatprep.subr.bf16.mxu0 0
      %4649 = vmatpush2.bf16.msra.mxu0 0
      %4650 = vmatprep.subr.bf16.mxu0 0
      %4651 = vmatpush2.bf16.msra.mxu0 0
      %4652 = vmatprep.subr.bf16.mxu0 0
      %4653 = vmatpush2.bf16.msra.mxu0 0
      %4654 = vmatprep.subr.bf16.mxu0 0
      %4655 = vmatpush2.bf16.msra.mxu0 0
      %4656 = vmatprep.subr.bf16.mxu0 0
      %4657 = vmatpush2.bf16.msra.mxu0 0
      %4658 = vmatprep.mubr.bf16.mxu0 0
      %4659 = vmatmul.mubr.bf16.gmra.mxu0 %v2974
      %v4660 = vpop.f32.mrf.mxu0
      %v4661 = vadd.f32 0.0, %v4660
      %v4662 = vpop.f32.mrf.mxu0
      %v4663 = vpop.f32.mrf.mxu0
      %v4664 = vadd.f32 0.0, %v4663
      %v4665 = vpop.f32.mrf.mxu0
      %4666 = vmatprep.mubr.bf16.mxu0 0
      %4667 = vmatmul.mubr.bf16.gmra.mxu0 %v2977
      %v4668 = vpop.f32.mrf.mxu0
      %v4669 = vadd.f32 0.0, %v4668
      %v4670 = vpop.f32.mrf.mxu0
      %v4671 = vpop.f32.mrf.mxu0
      %v4672 = vadd.f32 0.0, %v4671
      %v4673 = vpop.f32.mrf.mxu0
      %4674 = vmatprep.mubr.bf16.mxu0 0
      %4675 = vmatmul.mubr.bf16.gmra.mxu0 %v2980
      %v4676 = vpop.f32.mrf.mxu0
      %v4677 = vadd.f32 0.0, %v4676
      %v4678 = vpop.f32.mrf.mxu0
      %v4679 = vpop.f32.mrf.mxu0
      %v4680 = vadd.f32 0.0, %v4679
      %v4681 = vpop.f32.mrf.mxu0
      %4682 = vmatprep.mubr.bf16.mxu0 0
      %4683 = vmatmul.mubr.bf16.gmra.mxu0 %v2983
      %v4684 = vpop.f32.mrf.mxu0
      %v4685 = vadd.f32 0.0, %v4684
      %v4686 = vpop.f32.mrf.mxu0
      %v4687 = vpop.f32.mrf.mxu0
      %v4688 = vadd.f32 0.0, %v4687
      %v4689 = vpop.f32.mrf.mxu0
      %4690 = vmatprep.mubr.bf16.mxu0 0
      %4691 = vmatmul.mubr.bf16.gmra.mxu0 %v2986
      %v4692 = vpop.f32.mrf.mxu0
      %v4693 = vadd.f32 0.0, %v4692
      %v4694 = vpop.f32.mrf.mxu0
      %v4695 = vpop.f32.mrf.mxu0
      %v4696 = vadd.f32 0.0, %v4695
      %v4697 = vpop.f32.mrf.mxu0
      %4698 = vmatprep.mubr.bf16.mxu0 0
      %4699 = vmatmul.mubr.bf16.gmra.mxu0 %v2989
      %v4700 = vpop.f32.mrf.mxu0
      %v4701 = vadd.f32 0.0, %v4700
      %v4702 = vpop.f32.mrf.mxu0
      %v4703 = vpop.f32.mrf.mxu0
      %v4704 = vadd.f32 0.0, %v4703
      %v4705 = vpop.f32.mrf.mxu0
      %4706 = vmatprep.mubr.bf16.mxu0 0
      %4707 = vmatmul.mubr.bf16.gmra.mxu0 %v2992
      %v4708 = vpop.f32.mrf.mxu0
      %v4709 = vadd.f32 0.0, %v4708
      %v4710 = vpop.f32.mrf.mxu0
      %v4711 = vpop.f32.mrf.mxu0
      %v4712 = vadd.f32 0.0, %v4711
      %v4713 = vpop.f32.mrf.mxu0
      %4714 = vmatprep.mubr.bf16.mxu0 0
      %4715 = vmatmul.mubr.bf16.gmra.mxu0 %v2995
      %v4716 = vpop.f32.mrf.mxu0
      %v4717 = vadd.f32 0.0, %v4716
      %v4718 = vpop.f32.mrf.mxu0
      %v4719 = vpop.f32.mrf.mxu0
      %v4720 = vadd.f32 0.0, %v4719
      %v4721 = vpop.f32.mrf.mxu0
      %4722 = vmatprep.mubr.bf16.mxu0 0
      %4723 = vmatmul.mubr.bf16.gmra.mxu0 %v2998
      %v4724 = vpop.f32.mrf.mxu0
      %v4725 = vadd.f32 0.0, %v4724
      %v4726 = vpop.f32.mrf.mxu0
      %v4727 = vpop.f32.mrf.mxu0
      %v4728 = vadd.f32 0.0, %v4727
      %v4729 = vpop.f32.mrf.mxu0
      %4730 = vmatprep.mubr.bf16.mxu0 0
      %4731 = vmatmul.mubr.bf16.gmra.mxu0 %v3001
      %v4732 = vpop.f32.mrf.mxu0
      %v4733 = vadd.f32 0.0, %v4732
      %v4734 = vpop.f32.mrf.mxu0
      %v4735 = vpop.f32.mrf.mxu0
      %v4736 = vadd.f32 0.0, %v4735
      %v4737 = vpop.f32.mrf.mxu0
      %4738 = vmatprep.mubr.bf16.mxu0 0
      %4739 = vmatmul.mubr.bf16.gmra.mxu0 %v3004
      %v4740 = vpop.f32.mrf.mxu0
      %v4741 = vadd.f32 0.0, %v4740
      %v4742 = vpop.f32.mrf.mxu0
      %v4743 = vpop.f32.mrf.mxu0
      %v4744 = vadd.f32 0.0, %v4743
      %v4745 = vpop.f32.mrf.mxu0
      %4746 = vmatprep.mubr.bf16.mxu0 0
      %4747 = vmatmul.mubr.bf16.gmra.mxu0 %v3007
      %v4748 = vpop.f32.mrf.mxu0
      %v4749 = vadd.f32 0.0, %v4748
      %v4750 = vpop.f32.mrf.mxu0
      %v4751 = vpop.f32.mrf.mxu0
      %v4752 = vadd.f32 0.0, %v4751
      %v4753 = vpop.f32.mrf.mxu0
      %4754 = vmatprep.mubr.bf16.mxu0 0
      %4755 = vmatmul.mubr.bf16.gmra.mxu0 %v3010
      %v4756 = vpop.f32.mrf.mxu0
      %v4757 = vadd.f32 0.0, %v4756
      %v4758 = vpop.f32.mrf.mxu0
      %v4759 = vpop.f32.mrf.mxu0
      %v4760 = vadd.f32 0.0, %v4759
      %v4761 = vpop.f32.mrf.mxu0
      %4762 = vmatprep.mubr.bf16.mxu0 0
      %4763 = vmatmul.mubr.bf16.gmra.mxu0 %v3013
      %v4764 = vpop.f32.mrf.mxu0
      %v4765 = vadd.f32 0.0, %v4764
      %v4766 = vpop.f32.mrf.mxu0
      %v4767 = vpop.f32.mrf.mxu0
      %v4768 = vadd.f32 0.0, %v4767
      %v4769 = vpop.f32.mrf.mxu0
      %4770 = vmatprep.mubr.bf16.mxu0 0
      %4771 = vmatmul.mubr.bf16.gmra.mxu0 %v3997
      %v4772 = vpop.f32.mrf.mxu0
      %v4773 = vadd.f32 0.0, %v4772
      %v4774 = vpop.f32.mrf.mxu0
      %v4775 = vpop.f32.mrf.mxu0
      %v4776 = vadd.f32 0.0, %v4775
      %v4777 = vpop.f32.mrf.mxu0
      %4778 = vmatprep.mubr.bf16.mxu0 0
      %4779 = vmatmul.mubr.bf16.gmra.mxu0 %v4621
      %v4780 = vpop.f32.mrf.mxu0
      %v4781 = vadd.f32 0.0, %v4780
      %v4782 = vpop.f32.mrf.mxu0
      %v4783 = vpop.f32.mrf.mxu0
      %v4784 = vadd.f32 0.0, %v4783
      %v4785 = vpop.f32.mrf.mxu0
      %4786 = vdwg.mxu0
      %v4787 = vadd.f32 %v4585, %v4661
      %v4788 = vadd.f32 %v4586, %v4664
      %v4789 = vadd.f32 %v4587, %v4669
      %v4790 = vadd.f32 %v4588, %v4672
      %v4791 = vadd.f32 %v4589, %v4677
      %v4792 = vadd.f32 %v4590, %v4680
      %v4793 = vadd.f32 %v4591, %v4685
      %v4794 = vadd.f32 %v4592, %v4688
      %v4795 = vadd.f32 %v4593, %v4693
      %v4796 = vadd.f32 %v4594, %v4696
      %v4797 = vadd.f32 %v4595, %v4701
      %v4798 = vadd.f32 %v4596, %v4704
      %v4799 = vadd.f32 %v4597, %v4709
      %v4800 = vadd.f32 %v4598, %v4712
      %v4801 = vadd.f32 %v4599, %v4717
      %v4802 = vadd.f32 %v4600, %v4720
      %v4803 = vadd.f32 %v4601, %v4725
      %v4804 = vadd.f32 %v4602, %v4728
      %v4805 = vadd.f32 %v4603, %v4733
      %v4806 = vadd.f32 %v4604, %v4736
      %v4807 = vadd.f32 %v4605, %v4741
      %v4808 = vadd.f32 %v4606, %v4744
      %v4809 = vadd.f32 %v4607, %v4749
      %v4810 = vadd.f32 %v4608, %v4752
      %v4811 = vadd.f32 %v4609, %v4757
      %v4812 = vadd.f32 %v4610, %v4760
      %v4813 = vadd.f32 %v4611, %v4765
      %v4814 = vadd.f32 %v4612, %v4768
      %v4815 = vadd.f32 %v4613, %v4773
      %v4816 = vadd.f32 %v4614, %v4776
      %v4817 = vadd.f32 %v4615, %v4781
      %v4818 = vadd.f32 %v4616, %v4784
      %v4820 = vrot.slane %v2768, 1
      %v4821 = vrot.slane %v2769, 1
      %v4822 = vsel %vm345, %v4820, %v4821
      %v4823 = vrot.slane %v2770, 1
      %v4824 = vsel %vm345, %v4821, %v4823
      %v4827 = vpack.c.bf16 %v4824, %v4822
      %s4828 = scalar_lea.vmem %s3, 32
      %v4829 = vld [vmem:[%s4828] sm:$0xf]
      %v4831 = vsel %vm476, %v4827, 0
      %v4834 = vsel %vm525, %v4829, 0
      %4836 = vmatprep.subr.bf16.mxu0 0
      %4837 = vmatpush1.bf16.msra.mxu0 0
      %4838 = vmatprep.subr.bf16.mxu0 0
      %4839 = vmatpush1.bf16.msra.mxu0 0
      %4840 = vmatprep.subr.bf16.mxu0 0
      %4841 = vmatpush1.bf16.msra.mxu0 0
      %4842 = vmatprep.subr.bf16.mxu0 0
      %4843 = vmatpush1.bf16.msra.mxu0 0
      %4844 = vmatprep.subr.bf16.mxu0 0
      %4845 = vmatpush1.bf16.msra.mxu0 0
      %4846 = vmatprep.subr.bf16.mxu0 0
      %4847 = vmatpush1.bf16.msra.mxu0 0
      %4848 = vmatprep.subr.bf16.mxu0 0
      %4849 = vmatpush1.bf16.msra.mxu0 0
      %4850 = vmatprep.subr.bf16.mxu0 0
      %4851 = vmatpush1.bf16.msra.mxu0 %v4834
      %4852 = vmatprep.subr.bf16.mxu0 0
      %4853 = vmatpush2.bf16.msra.mxu0 0
      %4854 = vmatprep.subr.bf16.mxu0 0
      %4855 = vmatpush2.bf16.msra.mxu0 0
      %4856 = vmatprep.subr.bf16.mxu0 0
      %4857 = vmatpush2.bf16.msra.mxu0 0
      %4858 = vmatprep.subr.bf16.mxu0 0
      %4859 = vmatpush2.bf16.msra.mxu0 0
      %4860 = vmatprep.subr.bf16.mxu0 0
      %4861 = vmatpush2.bf16.msra.mxu0 0
      %4862 = vmatprep.subr.bf16.mxu0 0
      %4863 = vmatpush2.bf16.msra.mxu0 0
      %4864 = vmatprep.subr.bf16.mxu0 0
      %4865 = vmatpush2.bf16.msra.mxu0 0
      %4866 = vmatprep.subr.bf16.mxu0 0
      %4867 = vmatpush2.bf16.msra.mxu0 0
      %4868 = vmatprep.mubr.bf16.mxu0 0
      %4869 = vmatmul.mubr.bf16.gmra.mxu0 %v3544
      %v4870 = vpop.f32.mrf.mxu0
      %v4871 = vadd.f32 0.0, %v4870
      %v4872 = vpop.f32.mrf.mxu0
      %v4873 = vpop.f32.mrf.mxu0
      %v4874 = vadd.f32 0.0, %v4873
      %v4875 = vpop.f32.mrf.mxu0
      %4876 = vmatprep.mubr.bf16.mxu0 0
      %4877 = vmatmul.mubr.bf16.gmra.mxu0 %v3547
      %v4878 = vpop.f32.mrf.mxu0
      %v4879 = vadd.f32 0.0, %v4878
      %v4880 = vpop.f32.mrf.mxu0
      %v4881 = vpop.f32.mrf.mxu0
      %v4882 = vadd.f32 0.0, %v4881
      %v4883 = vpop.f32.mrf.mxu0
      %4884 = vmatprep.mubr.bf16.mxu0 0
      %4885 = vmatmul.mubr.bf16.gmra.mxu0 %v3550
      %v4886 = vpop.f32.mrf.mxu0
      %v4887 = vadd.f32 0.0, %v4886
      %v4888 = vpop.f32.mrf.mxu0
      %v4889 = vpop.f32.mrf.mxu0
      %v4890 = vadd.f32 0.0, %v4889
      %v4891 = vpop.f32.mrf.mxu0
      %4892 = vmatprep.mubr.bf16.mxu0 0
      %4893 = vmatmul.mubr.bf16.gmra.mxu0 %v3553
      %v4894 = vpop.f32.mrf.mxu0
      %v4895 = vadd.f32 0.0, %v4894
      %v4896 = vpop.f32.mrf.mxu0
      %v4897 = vpop.f32.mrf.mxu0
      %v4898 = vadd.f32 0.0, %v4897
      %v4899 = vpop.f32.mrf.mxu0
      %4900 = vmatprep.mubr.bf16.mxu0 0
      %4901 = vmatmul.mubr.bf16.gmra.mxu0 %v3556
      %v4902 = vpop.f32.mrf.mxu0
      %v4903 = vadd.f32 0.0, %v4902
      %v4904 = vpop.f32.mrf.mxu0
      %v4905 = vpop.f32.mrf.mxu0
      %v4906 = vadd.f32 0.0, %v4905
      %v4907 = vpop.f32.mrf.mxu0
      %4908 = vmatprep.mubr.bf16.mxu0 0
      %4909 = vmatmul.mubr.bf16.gmra.mxu0 %v3559
      %v4910 = vpop.f32.mrf.mxu0
      %v4911 = vadd.f32 0.0, %v4910
      %v4912 = vpop.f32.mrf.mxu0
      %v4913 = vpop.f32.mrf.mxu0
      %v4914 = vadd.f32 0.0, %v4913
      %v4915 = vpop.f32.mrf.mxu0
      %4916 = vmatprep.mubr.bf16.mxu0 0
      %4917 = vmatmul.mubr.bf16.gmra.mxu0 %v3562
      %v4918 = vpop.f32.mrf.mxu0
      %v4919 = vadd.f32 0.0, %v4918
      %v4920 = vpop.f32.mrf.mxu0
      %v4921 = vpop.f32.mrf.mxu0
      %v4922 = vadd.f32 0.0, %v4921
      %v4923 = vpop.f32.mrf.mxu0
      %4924 = vmatprep.mubr.bf16.mxu0 0
      %4925 = vmatmul.mubr.bf16.gmra.mxu0 %v3565
      %v4926 = vpop.f32.mrf.mxu0
      %v4927 = vadd.f32 0.0, %v4926
      %v4928 = vpop.f32.mrf.mxu0
      %v4929 = vpop.f32.mrf.mxu0
      %v4930 = vadd.f32 0.0, %v4929
      %v4931 = vpop.f32.mrf.mxu0
      %4932 = vmatprep.mubr.bf16.mxu0 0
      %4933 = vmatmul.mubr.bf16.gmra.mxu0 %v3568
      %v4934 = vpop.f32.mrf.mxu0
      %v4935 = vadd.f32 0.0, %v4934
      %v4936 = vpop.f32.mrf.mxu0
      %v4937 = vpop.f32.mrf.mxu0
      %v4938 = vadd.f32 0.0, %v4937
      %v4939 = vpop.f32.mrf.mxu0
      %4940 = vmatprep.mubr.bf16.mxu0 0
      %4941 = vmatmul.mubr.bf16.gmra.mxu0 %v3571
      %v4942 = vpop.f32.mrf.mxu0
      %v4943 = vadd.f32 0.0, %v4942
      %v4944 = vpop.f32.mrf.mxu0
      %v4945 = vpop.f32.mrf.mxu0
      %v4946 = vadd.f32 0.0, %v4945
      %v4947 = vpop.f32.mrf.mxu0
      %4948 = vmatprep.mubr.bf16.mxu0 0
      %4949 = vmatmul.mubr.bf16.gmra.mxu0 %v3574
      %v4950 = vpop.f32.mrf.mxu0
      %v4951 = vadd.f32 0.0, %v4950
      %v4952 = vpop.f32.mrf.mxu0
      %v4953 = vpop.f32.mrf.mxu0
      %v4954 = vadd.f32 0.0, %v4953
      %v4955 = vpop.f32.mrf.mxu0
      %4956 = vmatprep.mubr.bf16.mxu0 0
      %4957 = vmatmul.mubr.bf16.gmra.mxu0 %v3577
      %v4958 = vpop.f32.mrf.mxu0
      %v4959 = vadd.f32 0.0, %v4958
      %v4960 = vpop.f32.mrf.mxu0
      %v4961 = vpop.f32.mrf.mxu0
      %v4962 = vadd.f32 0.0, %v4961
      %v4963 = vpop.f32.mrf.mxu0
      %4964 = vmatprep.mubr.bf16.mxu0 0
      %4965 = vmatmul.mubr.bf16.gmra.mxu0 %v3580
      %v4966 = vpop.f32.mrf.mxu0
      %v4967 = vadd.f32 0.0, %v4966
      %v4968 = vpop.f32.mrf.mxu0
      %v4969 = vpop.f32.mrf.mxu0
      %v4970 = vadd.f32 0.0, %v4969
      %v4971 = vpop.f32.mrf.mxu0
      %4972 = vmatprep.mubr.bf16.mxu0 0
      %4973 = vmatmul.mubr.bf16.gmra.mxu0 %v3583
      %v4974 = vpop.f32.mrf.mxu0
      %v4975 = vadd.f32 0.0, %v4974
      %v4976 = vpop.f32.mrf.mxu0
      %v4977 = vpop.f32.mrf.mxu0
      %v4978 = vadd.f32 0.0, %v4977
      %v4979 = vpop.f32.mrf.mxu0
      %4980 = vmatprep.mubr.bf16.mxu0 0
      %4981 = vmatmul.mubr.bf16.gmra.mxu0 %v4207
      %v4982 = vpop.f32.mrf.mxu0
      %v4983 = vadd.f32 0.0, %v4982
      %v4984 = vpop.f32.mrf.mxu0
      %v4985 = vpop.f32.mrf.mxu0
      %v4986 = vadd.f32 0.0, %v4985
      %v4987 = vpop.f32.mrf.mxu0
      %4988 = vmatprep.mubr.bf16.mxu0 0
      %4989 = vmatmul.mubr.bf16.gmra.mxu0 %v4831
      %v4990 = vpop.f32.mrf.mxu0
      %v4991 = vadd.f32 0.0, %v4990
      %v4992 = vpop.f32.mrf.mxu0
      %v4993 = vpop.f32.mrf.mxu0
      %v4994 = vadd.f32 0.0, %v4993
      %v4995 = vpop.f32.mrf.mxu0
      %4996 = vdwg.mxu0
      %v4997 = vadd.f32 %v4787, %v4871
      %v4998 = vadd.f32 %v4788, %v4874
      %v4999 = vadd.f32 %v4789, %v4879
      %v5000 = vadd.f32 %v4790, %v4882
      %v5001 = vadd.f32 %v4791, %v4887
      %v5002 = vadd.f32 %v4792, %v4890
      %v5003 = vadd.f32 %v4793, %v4895
      %v5004 = vadd.f32 %v4794, %v4898
      %v5005 = vadd.f32 %v4795, %v4903
      %v5006 = vadd.f32 %v4796, %v4906
      %v5007 = vadd.f32 %v4797, %v4911
      %v5008 = vadd.f32 %v4798, %v4914
      %v5009 = vadd.f32 %v4799, %v4919
      %v5010 = vadd.f32 %v4800, %v4922
      %v5011 = vadd.f32 %v4801, %v4927
      %v5012 = vadd.f32 %v4802, %v4930
      %v5013 = vadd.f32 %v4803, %v4935
      %v5014 = vadd.f32 %v4804, %v4938
      %v5015 = vadd.f32 %v4805, %v4943
      %v5016 = vadd.f32 %v4806, %v4946
      %v5017 = vadd.f32 %v4807, %v4951
      %v5018 = vadd.f32 %v4808, %v4954
      %v5019 = vadd.f32 %v4809, %v4959
      %v5020 = vadd.f32 %v4810, %v4962
      %v5021 = vadd.f32 %v4811, %v4967
      %v5022 = vadd.f32 %v4812, %v4970
      %v5023 = vadd.f32 %v4813, %v4975
      %v5024 = vadd.f32 %v4814, %v4978
      %v5025 = vadd.f32 %v4815, %v4983
      %v5026 = vadd.f32 %v4816, %v4986
      %v5027 = vadd.f32 %v4817, %v4991
      %v5028 = vadd.f32 %v4818, %v4994
      %v5029 = vld [vmem:[%s4] sm:$0x1]
      %v5031 = vlaneseq
      %v5032 = vshrl.u32 %v5031, 7
      %v5033 = vsub.s32 0, %v5032
      %v5034 = vrot.slane %v5029, %v5033
      %v5036 = vadd.f32 %v4997, %v5034
      %v5037 = vadd.f32 %v4998, %v5034
      %v5038 = vadd.f32 %v4999, %v5034
      %v5039 = vadd.f32 %v5000, %v5034
      %v5040 = vadd.f32 %v5001, %v5034
      %v5041 = vadd.f32 %v5002, %v5034
      %v5042 = vadd.f32 %v5003, %v5034
      %v5043 = vadd.f32 %v5004, %v5034
      %v5044 = vadd.f32 %v5005, %v5034
      %v5045 = vadd.f32 %v5006, %v5034
      %v5046 = vadd.f32 %v5007, %v5034
      %v5047 = vadd.f32 %v5008, %v5034
      %v5048 = vadd.f32 %v5009, %v5034
      %v5049 = vadd.f32 %v5010, %v5034
      %v5050 = vadd.f32 %v5011, %v5034
      %v5051 = vadd.f32 %v5012, %v5034
      %v5052 = vadd.f32 %v5013, %v5034
      %v5053 = vadd.f32 %v5014, %v5034
      %v5054 = vadd.f32 %v5015, %v5034
      %v5055 = vadd.f32 %v5016, %v5034
      %v5056 = vadd.f32 %v5017, %v5034
      %v5057 = vadd.f32 %v5018, %v5034
      %v5058 = vadd.f32 %v5019, %v5034
      %v5059 = vadd.f32 %v5020, %v5034
      %v5060 = vadd.f32 %v5021, %v5034
      %v5061 = vadd.f32 %v5022, %v5034
      %v5062 = vadd.f32 %v5023, %v5034
      %v5063 = vadd.f32 %v5024, %v5034
      %v5064 = vadd.f32 %v5025, %v5034
      %v5065 = vadd.f32 %v5026, %v5034
      %v5066 = vadd.f32 %v5027, %v5034
      %v5067 = vadd.f32 %v5028, %v5034
      %v5068 = vadd.f32 %v5036, %v353
      %v5069 = vadd.f32 %v5037, %v355
      %v5070 = vadd.f32 %v5038, %v358
      %v5071 = vadd.f32 %v5039, %v360
      %v5072 = vadd.f32 %v5040, %v363
      %v5073 = vadd.f32 %v5041, %v365
      %v5074 = vadd.f32 %v5042, %v368
      %v5075 = vadd.f32 %v5043, %v370
      %v5076 = vadd.f32 %v5044, %v373
      %v5077 = vadd.f32 %v5045, %v375
      %v5078 = vadd.f32 %v5046, %v378
      %v5079 = vadd.f32 %v5047, %v380
      %v5080 = vadd.f32 %v5048, %v383
      %v5081 = vadd.f32 %v5049, %v385
      %v5082 = vadd.f32 %v5050, %v388
      %v5083 = vadd.f32 %v5051, %v390
      %v5084 = vadd.f32 %v5052, %v393
      %v5085 = vadd.f32 %v5053, %v395
      %v5086 = vadd.f32 %v5054, %v398
      %v5087 = vadd.f32 %v5055, %v400
      %v5088 = vadd.f32 %v5056, %v403
      %v5089 = vadd.f32 %v5057, %v405
      %v5090 = vadd.f32 %v5058, %v408
      %v5091 = vadd.f32 %v5059, %v410
      %v5092 = vadd.f32 %v5060, %v413
      %v5093 = vadd.f32 %v5061, %v415
      %v5094 = vadd.f32 %v5062, %v418
      %v5095 = vadd.f32 %v5063, %v420
      %v5096 = vadd.f32 %v5064, %v423
      %v5097 = vadd.f32 %v5065, %v425
      %v5098 = vadd.f32 %v5066, %v1484
      %v5099 = vadd.f32 %v5067, %v1486
      %v5100 = vmax.f32 %v5068, 0.0
      %v5101 = vmax.f32 %v5069, 0.0
      %v5102 = vmax.f32 %v5070, 0.0
      %v5103 = vmax.f32 %v5071, 0.0
      %v5104 = vmax.f32 %v5072, 0.0
      %v5105 = vmax.f32 %v5073, 0.0
      %v5106 = vmax.f32 %v5074, 0.0
      %v5107 = vmax.f32 %v5075, 0.0
      %v5108 = vmax.f32 %v5076, 0.0
      %v5109 = vmax.f32 %v5077, 0.0
      %v5110 = vmax.f32 %v5078, 0.0
      %v5111 = vmax.f32 %v5079, 0.0
      %v5112 = vmax.f32 %v5080, 0.0
      %v5113 = vmax.f32 %v5081, 0.0
      %v5114 = vmax.f32 %v5082, 0.0
      %v5115 = vmax.f32 %v5083, 0.0
      %v5116 = vmax.f32 %v5084, 0.0
      %v5117 = vmax.f32 %v5085, 0.0
      %v5118 = vmax.f32 %v5086, 0.0
      %v5119 = vmax.f32 %v5087, 0.0
      %v5120 = vmax.f32 %v5088, 0.0
      %v5121 = vmax.f32 %v5089, 0.0
      %v5122 = vmax.f32 %v5090, 0.0
      %v5123 = vmax.f32 %v5091, 0.0
      %v5124 = vmax.f32 %v5092, 0.0
      %v5125 = vmax.f32 %v5093, 0.0
      %v5126 = vmax.f32 %v5094, 0.0
      %v5127 = vmax.f32 %v5095, 0.0
      %v5128 = vmax.f32 %v5096, 0.0
      %v5129 = vmax.f32 %v5097, 0.0
      %v5130 = vmax.f32 %v5098, 0.0
      %v5131 = vmax.f32 %v5099, 0.0
      %5132 = vst.msk [vmem:[%s224] sm:$0xff] %vm476, %v5100
      %5133 = vst.msk [vmem:[%s224 + $0x8] sm:$0xff] %vm476, %v5101
      %5134 = vst.msk [vmem:[%s224 + $0x10] sm:$0xff] %vm476, %v5102
      %5135 = vst.msk [vmem:[%s224 + $0x18] sm:$0xff] %vm476, %v5103
      %5136 = vst.msk [vmem:[%s224 + $0x20] sm:$0xff] %vm476, %v5104
      %5137 = vst.msk [vmem:[%s224 + $0x28] sm:$0xff] %vm476, %v5105
      %5138 = vst.msk [vmem:[%s224 + $0x30] sm:$0xff] %vm476, %v5106
      %5139 = vst.msk [vmem:[%s224 + $0x38] sm:$0xff] %vm476, %v5107
      %5140 = vst.msk [vmem:[%s224 + $0x40] sm:$0xff] %vm476, %v5108
      %5141 = vst.msk [vmem:[%s224 + $0x48] sm:$0xff] %vm476, %v5109
      %5142 = vst.msk [vmem:[%s224 + $0x50] sm:$0xff] %vm476, %v5110
      %5143 = vst.msk [vmem:[%s224 + $0x58] sm:$0xff] %vm476, %v5111
      %5144 = vst.msk [vmem:[%s224 + $0x60] sm:$0xff] %vm476, %v5112
      %5145 = vst.msk [vmem:[%s224 + $0x68] sm:$0xff] %vm476, %v5113
      %5146 = vst.msk [vmem:[%s224 + $0x70] sm:$0xff] %vm476, %v5114
      %5147 = vst.msk [vmem:[%s224 + $0x78] sm:$0xff] %vm476, %v5115
      %5148 = vst.msk [vmem:[%s224 + $0x80] sm:$0xff] %vm476, %v5116
      %5149 = vst.msk [vmem:[%s224 + $0x88] sm:$0xff] %vm476, %v5117
      %5150 = vst.msk [vmem:[%s224 + $0x90] sm:$0xff] %vm476, %v5118
      %5151 = vst.msk [vmem:[%s224 + $0x98] sm:$0xff] %vm476, %v5119
      %5152 = vst.msk [vmem:[%s224 + $0xa0] sm:$0xff] %vm476, %v5120
      %5153 = vst.msk [vmem:[%s224 + $0xa8] sm:$0xff] %vm476, %v5121
      %5154 = vst.msk [vmem:[%s224 + $0xb0] sm:$0xff] %vm476, %v5122
      %5155 = vst.msk [vmem:[%s224 + $0xb8] sm:$0xff] %vm476, %v5123
      %5156 = vst.msk [vmem:[%s224 + $0xc0] sm:$0xff] %vm476, %v5124
      %5157 = vst.msk [vmem:[%s224 + $0xc8] sm:$0xff] %vm476, %v5125
      %5158 = vst.msk [vmem:[%s224 + $0xd0] sm:$0xff] %vm476, %v5126
      %5159 = vst.msk [vmem:[%s224 + $0xd8] sm:$0xff] %vm476, %v5127
      %5160 = vst.msk [vmem:[%s224 + $0xe0] sm:$0xff] %vm476, %v5128
      %5161 = vst.msk [vmem:[%s224 + $0xe8] sm:$0xff] %vm476, %v5129
      %5162 = vst.msk [vmem:[%s224 + $0xf0] sm:$0xff] %vm476, %v5130
      %5163 = vst.msk [vmem:[%s224 + $0xf8] sm:$0xff] %vm476, %v5131
      %p5164 = scmp.lt.s32.totalorder %s16, 1
      %s5165 = scalar_select %p5164, %s16, 1
      %s5166 = smul.addr %s5165, 32
      %s5167 = smul.addr %s5166, 8
      %s5168 = scalar_lea.vmem %s5, %s5167
      // Predicated region
      $region41: #{basic_block_forward.1} parent=39 // pred_check
        %p5169 = pneg %p144
      $region42: #{basic_block_forward.1} parent=39 // pred_check_branch
        %5171 = sbr.rel (%p5169) target = $region44
      $region43: #{basic_block_forward.1} parent=39 // pred_region
        _
      $region44: #{basic_block_forward.1} parent=39 // pred_fallthru
        _
    $region40: #{basic_block_forward.1} parent=5 // pred_fallthru
      _
    %p5172 = scmp.le.s32.totalorder 2, %s11
    // Predicated region
    $region45: #{basic_block_forward.1} parent=5 // pred_check
      %p5173 = pneg %p5172
    $region46: #{basic_block_forward.1} parent=5 // pred_check_branch
      %5175 = sbr.rel (%p5173) target = $region48
    $region47: #{basic_block_forward.1} parent=5 // pred_region
      %s5176 = ssub.s32 %s11, 2
      // Predicated region
      $region49: #{basic_block_forward.1} parent=47 // pred_check
        %p5177 = pneg %p150
      $region50: #{basic_block_forward.1} parent=47 // pred_check_branch
        %5179 = sbr.rel (%p5177) target = $region52
      $region51: #{basic_block_forward.1} parent=47 // pred_region
        %p5180 = scmp.lt.s32.totalorder %s17, 1
        %s5181 = scalar_select %p5180, %s17, 1
        %s5182 = smul.addr %s5181, 32
        %s5183 = smul.addr %s5182, 8
        %s5184 = scalar_lea.vmem %s5, %s5183
      $region52: #{basic_block_forward.1} parent=47 // pred_fallthru
        _
    $region48: #{basic_block_forward.1} parent=5 // pred_fallthru
      _
  $region6: #{basic_block_forward.1} parent=0 // loop_footer
    %s15 = sadd.s32 1, %s11
  $region7: #{basic_block_forward.1} parent=0 // loop_footer_branch
    %10 = sbr.rel target = $region3
  $region8: #{basic_block_forward.1} parent=0 // loop_exit
    _

</llo_original>
